<compile_context>
chip_gen: v7x
topology: tpu7x:2x2x1
jax: 0.10.0
libtpu: 0.0.40
codegen_flags: <defaults>
</compile_context>

<pallas_src>
import functools

import numpy as np
import jax
import jax.numpy as jnp
from jax.experimental import pallas as pl
from jax.experimental.pallas import tpu as pltpu

_TAP_START = {2: 3, 3: 2, 5: 1, 7: 0}    # first of the 7 shared taps used by K
_VMEM_LIMIT = 32 * 1024 * 1024           # safe on v5e/v6e (128MiB) and v7x (64MiB)


def _cparams():
    return pltpu.CompilerParams(dimension_semantics=("parallel",),
                                vmem_limit_bytes=_VMEM_LIMIT)


@functools.lru_cache(maxsize=None)
def _tap_selector(N, T, d):
    """0/1 matrix [N*T, 7*M] gathering, for every (node, output step), the 7
    dilated taps at time offsets (k-3)*d (zero where the reference would read
    conv zero-padding).  Tap 4 (offset +d) is exactly the residual/skip tail."""
    Tn = T - d
    M = N * Tn
    sel = np.zeros((N * T, 7 * M), np.float32)
    for k in range(7):
        off = (k - 3) * d
        for n in range(N):
            for t in range(max(0, -off), min(Tn, T - off)):
                sel[n * T + t + off, k * M + n * Tn + t] = 1.0
    return sel


# ----------------------------------------------------------------------------
# Kernel 1: enter 1x1 conv (channels-first matmul).
# ----------------------------------------------------------------------------
def _enter_kernel(x_ref, w_ref, b_ref, o_ref):
    o_ref[0] = jnp.dot(w_ref[...], x_ref[0].astype(jnp.bfloat16),
                       preferred_element_type=jnp.float32) + b_ref[...]


def enter_conv(x, w, b):
    B, F, NT = x.shape
    C = w.shape[0]
    return pl.pallas_call(
        _enter_kernel,
        out_shape=jax.ShapeDtypeStruct((B, C, NT), jnp.float32),
        grid_spec=pltpu.PrefetchScalarGridSpec(
            num_scalar_prefetch=0,
            grid=(B,),
            in_specs=[pl.BlockSpec((1, F, NT), lambda b_: (b_, 0, 0)),
                      pl.BlockSpec((C, F), lambda b_: (0, 0)),
                      pl.BlockSpec((C, 1), lambda b_: (0, 0))],
            out_specs=pl.BlockSpec((1, C, NT), lambda b_: (b_, 0, 0))),
        compiler_params=_cparams(),
        cost_estimate=pl.CostEstimate(
            flops=int(2 * B * C * F * NT), transcendentals=0,
            bytes_accessed=int(4 * B * (F + C) * NT + 2 * C * F)),
    )(x, w, b)


# ----------------------------------------------------------------------------
# Kernel 2: one fused ST layer.
# ----------------------------------------------------------------------------
def _st_layer_kernel(x_ref, skip_ref, sel_ref, ga_ref, wbig_ref, bbig_ref,
                     wsk_ref, bsk_ref, wgc_ref, scale_ref, shift_ref,
                     xo_ref, so_ref, *, C, S, D, E, M):
    # Gather the 7 dilated taps (+ residual & skip tails) with one exact f32
    # 0/1-selector matmul: rows (c | s), columns (tap k, node n, step t).
    xs = jnp.concatenate([x_ref[0], skip_ref[0]], axis=0)          # [C+S, N*T]
    taps = jnp.dot(xs, sel_ref[...],
                   preferred_element_type=jnp.float32)             # [C+S, 7*M]
    cols = jnp.concatenate([taps[:C, k * M:(k + 1) * M] for k in range(7)],
                           axis=0)                                 # [7C, M]
    resid = taps[:C, 4 * M:5 * M]                                  # x[..., d:]
    skip_tail = taps[C:, 4 * M:5 * M]                              # skip[..., d:]

    # All 4 gated branches in a single MXU push, one tanh + one sigmoid.
    y = jnp.dot(wbig_ref[...], cols.astype(jnp.bfloat16),
                preferred_element_type=jnp.float32) + bbig_ref[...]  # [8D, M]
    gated = jnp.tanh(y[:4 * D]) * jax.nn.sigmoid(y[4 * D:])          # [4D, M]
    # rows of `gated`: [x2 | x3 | x5 | x7], each D rows.

    # Skip path: 1x1 conv on the K=2 branch (as in the reference) + accumulate.
    s = jnp.dot(wsk_ref[...], gated[:D].astype(jnp.bfloat16),
                preferred_element_type=jnp.float32) + bsk_ref[...]
    so_ref[0] = s + skip_tail

    # Graph conv: node mixing via the kron'd supports (right-multiplication,
    # no layout change), then one matmul with the mix-folded [W0 | W_e] weight,
    # bias/BN folded into scale/shift, residual added before BN.
    z = jnp.dot(gated, ga_ref[...],
                preferred_element_type=jnp.float32)                # [4D, E*M]
    gin = jnp.concatenate(
        [gated] + [z[:, e * M:(e + 1) * M] for e in range(E)], axis=0)
    g = jnp.dot(wgc_ref[...], gin.astype(jnp.bfloat16),
                preferred_element_type=jnp.float32)                # [C, M]
    xo_ref[0] = (g + resid) * scale_ref[...] + shift_ref[...]
    # dropout: inference-mode identity


def st_layer(x, skip, supports, lw, *, N, T, d):
    """x: [B, C, N*T], skip: [B, S, N*T] -> ([B, C, N*(T-d)], [B, S, N*(T-d)])."""
    B, C, NT = x.shape
    S = skip.shape[1]
    D = lw["wbig"].shape[0] // 8
    E = supports.shape[0]
    Tn = T - d
    M = N * Tn

    sel = jnp.asarray(_tap_selector(N, T, d))                      # [N*T, 7*M]
    eye = jnp.eye(Tn, dtype=jnp.float32)
    ga = jnp.concatenate([jnp.kron(supports[e].T, eye) for e in range(E)],
                         axis=1)                                   # [M, E*M]

    flops = 2 * B * ((C + S) * NT * 7 * M + 8 * D * 7 * C * M + S * D * M
                     + 4 * D * M * E * M + C * (1 + E) * 4 * D * M)
    cost = pl.CostEstimate(
        flops=int(flops),
        transcendentals=int(8 * B * D * M),
        bytes_accessed=int(4 * B * (C + S) * (NT + M)
                           + 4 * (NT * 7 * M + M * E * M)
                           + 2 * (8 * D * 7 * C + S * D + C * (1 + E) * 4 * D)))

    return pl.pallas_call(
        functools.partial(_st_layer_kernel, C=C, S=S, D=D, E=E, M=M),
        out_shape=(jax.ShapeDtypeStruct((B, C, M), jnp.float32),
                   jax.ShapeDtypeStruct((B, S, M), jnp.float32)),
        grid_spec=pltpu.PrefetchScalarGridSpec(
            num_scalar_prefetch=0,
            grid=(B,),
            in_specs=[
                pl.BlockSpec((1, C, NT), lambda b_: (b_, 0, 0)),
                pl.BlockSpec((1, S, NT), lambda b_: (b_, 0, 0)),
                pl.BlockSpec((NT, 7 * M), lambda b_: (0, 0)),
                pl.BlockSpec((M, E * M), lambda b_: (0, 0)),
                pl.BlockSpec((8 * D, 7 * C), lambda b_: (0, 0)),
                pl.BlockSpec((8 * D, 1), lambda b_: (0, 0)),
                pl.BlockSpec((S, D), lambda b_: (0, 0)),
                pl.BlockSpec((S, 1), lambda b_: (0, 0)),
                pl.BlockSpec((C, (1 + E) * 4 * D), lambda b_: (0, 0)),
                pl.BlockSpec((C, 1), lambda b_: (0, 0)),
                pl.BlockSpec((C, 1), lambda b_: (0, 0)),
            ],
            out_specs=[pl.BlockSpec((1, C, M), lambda b_: (b_, 0, 0)),
                       pl.BlockSpec((1, S, M), lambda b_: (b_, 0, 0))]),
        compiler_params=_cparams(),
        cost_estimate=cost,
    )(x, skip, sel, ga, lw["wbig"], lw["bbig"], lw["skip_w"], lw["skip_b"],
      lw["wgc"], lw["bn_scale"], lw["bn_shift"])


# ----------------------------------------------------------------------------
# Kernel 3: fused output head (ReLU -> 1x1 conv -> ReLU -> 1x1 conv).
# ----------------------------------------------------------------------------
def _head_kernel(x_ref, w1_ref, b1_ref, w2_ref, b2_ref, o_ref):
    h = jnp.maximum(x_ref[0], 0.0)
    h = jnp.dot(w1_ref[...], h.astype(jnp.bfloat16),
                preferred_element_type=jnp.float32) + b1_ref[...]
    h = jnp.maximum(h, 0.0)
    o_ref[0] = jnp.dot(w2_ref[...], h.astype(jnp.bfloat16),
                       preferred_element_type=jnp.float32) + b2_ref[...]


def out_head(skip, w1, b1, w2, b2):
    B, S, Mf = skip.shape
    E1, O = w1.shape[0], w2.shape[0]
    return pl.pallas_call(
        _head_kernel,
        out_shape=jax.ShapeDtypeStruct((B, O, Mf), jnp.float32),
        grid_spec=pltpu.PrefetchScalarGridSpec(
            num_scalar_prefetch=0,
            grid=(B,),
            in_specs=[pl.BlockSpec((1, S, Mf), lambda b_: (b_, 0, 0)),
                      pl.BlockSpec((E1, S), lambda b_: (0, 0)),
                      pl.BlockSpec((E1, 1), lambda b_: (0, 0)),
                      pl.BlockSpec((O, E1), lambda b_: (0, 0)),
                      pl.BlockSpec((O, 1), lambda b_: (0, 0))],
            out_specs=pl.BlockSpec((1, O, Mf), lambda b_: (b_, 0, 0))),
        compiler_params=_cparams(),
        cost_estimate=pl.CostEstimate(
            flops=int(2 * B * Mf * (E1 * S + O * E1)), transcendentals=0,
            bytes_accessed=int(4 * B * Mf * (S + O) + 2 * (E1 * S + O * E1))),
    )(skip, w1, b1, w2, b2)


# ----------------------------------------------------------------------------
# One-time parameter preprocessing (weight packing, bf16 cast, BN/mix folding).
# ----------------------------------------------------------------------------
def _prep_layer(p, eps=1e-5):
    D, C, _ = p["wf2"].shape
    S = p["skip_w"].shape[0]
    E = p["gc_w"].shape[1] // D - 1

    # Fused gated-conv weight [8D, 7C]: rows = [filt2|filt3|filt5|filt7|gate2..7],
    # each K's taps placed at its offsets inside the shared 7-tap window.
    wbig = jnp.zeros((8 * D, 7 * C), jnp.float32)
    for bi, K in enumerate((2, 3, 5, 7)):
        k0 = _TAP_START[K]
        wf = jnp.transpose(p[f"wf{K}"], (0, 2, 1)).reshape(D, K * C)
        wg = jnp.transpose(p[f"wg{K}"], (0, 2, 1)).reshape(D, K * C)
        wbig = wbig.at[bi * D:(bi + 1) * D, k0 * C:(k0 + K) * C].set(wf)
        wbig = wbig.at[(4 + bi) * D:(5 + bi) * D, k0 * C:(k0 + K) * C].set(wg)
    bbig = jnp.concatenate([p["bf2"], p["bf3"], p["bf5"], p["bf7"],
                            p["bg2"], p["bg3"], p["bg5"], p["bg7"]]
                           ).reshape(8 * D, 1)

    # Graph-conv weight with the learned 4-way branch mix folded in
    # (gconv is linear, so gconv(sum_i w_i x_i) = sum_i w_i gconv(x_i)).
    wmix = p["weights"]
    gc_blocks = []
    for j in range(E + 1):                 # j=0: identity (W0), j>0: edge e=j-1
        wj = p["gc_w"][:, j * D:(j + 1) * D]
        gc_blocks += [wmix[i] * wj for i in range(4)]
    wgc = jnp.concatenate(gc_blocks, axis=1)           # [C, (1+E)*4D]

    scale = (p["bn_gamma"] / jnp.sqrt(p["bn_var"] + eps))
    shift = (p["gc_b"] - p["bn_mean"]) * scale + p["bn_beta"]

    return dict(
        wbig=wbig.astype(jnp.bfloat16), bbig=bbig,
        skip_w=p["skip_w"].astype(jnp.bfloat16),
        skip_b=p["skip_b"].reshape(S, 1),
        wgc=wgc.astype(jnp.bfloat16),
        bn_scale=scale.reshape(C, 1), bn_shift=shift.reshape(C, 1))


def preprocess_params(params):
    return {
        "enter_w": params["enter_w"].astype(jnp.bfloat16),
        "enter_b": params["enter_b"].reshape(-1, 1),
        "out1_w": params["out1_w"].astype(jnp.bfloat16),
        "out1_b": params["out1_b"].reshape(-1, 1),
        "out2_w": params["out2_w"].astype(jnp.bfloat16),
        "out2_b": params["out2_b"].reshape(-1, 1),
        "blocks": [[_prep_layer(p) for p in block]
                   for block in params["blocks"]],
    }


# ----------------------------------------------------------------------------
# Model forward (mirrors STLayer / STBlock / StackedSTBlocks / Predictor).
# ----------------------------------------------------------------------------
def predictor_forward(pp, inputs, supports, *, n_pred, receptive_field):
    """inputs: [B, T, N, F], supports: [E, N, N] -> [B, n_pred, N, n_out]."""
    x = jnp.transpose(inputs, (0, 3, 2, 1))            # [B, F, N, T]
    if x.shape[3] < receptive_field:
        x = jnp.pad(x, ((0, 0), (0, 0), (0, 0),
                        (receptive_field - x.shape[3], 0)))
    B, F, N, T = x.shape
    x = x.reshape(B, F, N * T)

    x = enter_conv(x, pp["enter_w"], pp["enter_b"])     # [B, C, N*T]
    S = pp["out1_w"].shape[1]
    skip = jnp.zeros((B, S, N * T), jnp.float32)

    t = T
    for block in pp["blocks"]:
        for li, lw in enumerate(block):
            d = 2 ** li
            x, skip = st_layer(x, skip, supports, lw, N=N, T=t, d=d)
            t -= d

    y = out_head(skip, pp["out1_w"], pp["out1_b"],
                 pp["out2_w"], pp["out2_b"])            # [B, n_pred*n_out, N*t]
    # Same row-major element order as the reference's NCHW y_, so the
    # reference `reshape(b, n_pred, -1, n).transpose(-1, -2)` maps 1:1.
    y = y.reshape(B, n_pred, -1, N)
    return jnp.swapaxes(y, -1, -2)


# ----------------------------------------------------------------------------
# Deterministic parameter construction (shapes follow the PyTorch __init__).
# ----------------------------------------------------------------------------
def init_params(key, *, n_in, n_out, n_pred, edge_dim, n_residuals, n_dilations,
                n_skips, n_ends, n_blocks, n_layers):
    keys = iter(jax.random.split(key, 4096))

    def nrm(shape, scale=0.1):
        return (scale * jax.random.normal(next(keys), shape)).astype(jnp.float32)

    params = {
        "enter_w": nrm((n_residuals, n_in)),
        "enter_b": nrm((n_residuals,)),
        "out1_w": nrm((n_ends, n_skips)),
        "out1_b": nrm((n_ends,)),
        "out2_w": nrm((n_pred * n_out, n_ends)),
        "out2_b": nrm((n_pred * n_out,)),
    }

    blocks = []
    for _ in range(n_blocks):
        layers = []
        for _li in range(n_layers):
            p = {"weights": nrm((4,), 1.0)}
            for K in (2, 3, 5, 7):
                p[f"wf{K}"] = nrm((n_dilations, n_residuals, K))
                p[f"bf{K}"] = nrm((n_dilations,))
                p[f"wg{K}"] = nrm((n_dilations, n_residuals, K))
                p[f"bg{K}"] = nrm((n_dilations,))
            p["skip_w"] = nrm((n_skips, n_dilations))
            p["skip_b"] = nrm((n_skips,))
            p["gc_w"] = nrm((n_residuals, n_dilations * (edge_dim + 1)))
            p["gc_b"] = nrm((n_residuals,))
            p["bn_gamma"] = jnp.ones((n_residuals,), jnp.float32)
            p["bn_beta"] = jnp.zeros((n_residuals,), jnp.float32)
            p["bn_mean"] = jnp.zeros((n_residuals,), jnp.float32)
            p["bn_var"] = jnp.ones((n_residuals,), jnp.float32)
            layers.append(p)
        blocks.append(layers)
    params["blocks"] = blocks
    return params


if __name__ == "__main__":
    hp = dict(n_in=4, n_out=2, n_pred=3, edge_dim=2, n_residuals=8,
              n_dilations=8, n_skips=16, n_ends=16, kernel_size=2,
              n_blocks=2, n_layers=2, dropout=0.1)
    receptive_field = (hp["n_blocks"] * (hp["kernel_size"] - 1)
                       * (2 ** hp["n_layers"] - 1) + 1)          # = 7

    B, T, N, F = 2, 6, 8, hp["n_in"]

    key = jax.random.PRNGKey(0)
    k_param, k_in, k_sup = jax.random.split(key, 3)

    params = init_params(
        k_param, n_in=hp["n_in"], n_out=hp["n_out"], n_pred=hp["n_pred"],
        edge_dim=hp["edge_dim"], n_residuals=hp["n_residuals"],
        n_dilations=hp["n_dilations"], n_skips=hp["n_skips"],
        n_ends=hp["n_ends"], n_blocks=hp["n_blocks"], n_layers=hp["n_layers"])
    pp = preprocess_params(params)       # one-time weight packing / bf16 cast

    inputs = jax.random.normal(k_in, (B, T, N, F), jnp.float32)     # [B,T,N,F]
    supports = 0.1 * jax.random.normal(k_sup, (hp["edge_dim"], N, N),
                                       jnp.float32)

    fwd = jax.jit(functools.partial(predictor_forward,
                                    n_pred=hp["n_pred"],
                                    receptive_field=receptive_field))
    y = fwd(pp, inputs, supports)
    y = jax.block_until_ready(y)
    assert y.shape == (B, hp["n_pred"], N, hp["n_out"]), y.shape
    print("KERNEL_OK")
</pallas_src>

<mosaic_0001>
module attributes {stable_mosaic.version = 11 : i64} {
  func.func @_enter_kernel(%arg0: i32, %arg1: memref<1x4x56xf32, #tpu.memory_space<vmem>>, %arg2: memref<8x4xbf16, #tpu.memory_space<vmem>>, %arg3: memref<8x1xf32, #tpu.memory_space<vmem>>, %arg4: memref<1x8x56xf32, #tpu.memory_space<vmem>>) attributes {dimension_semantics = [#tpu.dimension_semantics<parallel>], iteration_bounds = array<i64: 2>, scalar_prefetch = 0 : i64, scratch_operands = 0 : i64, tpu.core_type = #tpu.core_type<tc>, window_params = [{transform_indices = @transform_0, window_bounds = array<i64: 1, 4, 56>}, {pipeline_mode = #tpu.pipeline_mode<synchronous>, transform_indices = @transform_1, window_bounds = array<i64: 8, 4>}, {pipeline_mode = #tpu.pipeline_mode<synchronous>, transform_indices = @transform_2, window_bounds = array<i64: 8, 1>}, {transform_indices = @transform_3, window_bounds = array<i64: 1, 8, 56>}]} {
    %c0 = arith.constant 0 : index
    %c0_0 = arith.constant 0 : index
    %0 = vector.load %arg2[%c0, %c0_0] : memref<8x4xbf16, #tpu.memory_space<vmem>>, vector<8x4xbf16>
    %c0_1 = arith.constant 0 : index
    %c0_2 = arith.constant 0 : index
    %c0_3 = arith.constant 0 : index
    %1 = vector.load %arg1[%c0_1, %c0_2, %c0_3] : memref<1x4x56xf32, #tpu.memory_space<vmem>>, vector<1x4x56xf32>
    %2 = vector.shape_cast %1 : vector<1x4x56xf32> to vector<4x56xf32>
    %3 = arith.truncf %2 : vector<4x56xf32> to vector<4x56xbf16>
    %cst = arith.constant dense<0.000000e+00> : vector<8x56xf32>
    %4 = tpu.matmul %0, %3, %cst {dimension_numbers = #tpu.dot_dimension_numbers<[1], [0], [0], [1], [0, 0, 1, 1], [], []>} : vector<8x4xbf16>, vector<4x56xbf16>, vector<8x56xf32> -> vector<8x56xf32>
    %c0_4 = arith.constant 0 : index
    %c0_5 = arith.constant 0 : index
    %5 = vector.load %arg3[%c0_4, %c0_5] : memref<8x1xf32, #tpu.memory_space<vmem>>, vector<8x1xf32>
    %6 = vector.broadcast %5 : vector<8x1xf32> to vector<8x56xf32>
    %7 = arith.addf %4, %6 : vector<8x56xf32>
    %c0_6 = arith.constant 0 : index
    %c0_7 = arith.constant 0 : index
    %c0_8 = arith.constant 0 : index
    %8 = vector.load %arg4[%c0_6, %c0_7, %c0_8] : memref<1x8x56xf32, #tpu.memory_space<vmem>>, vector<1x8x56xf32>
    %9 = vector.shape_cast %8 : vector<1x8x56xf32> to vector<8x56xf32>
    %10 = vector.shape_cast %7 : vector<8x56xf32> to vector<1x8x56xf32>
    tpu.vector_store %arg4[%c0_6, %c0_7, %c0_8], %10 {strides = array<i32>} : memref<1x8x56xf32, #tpu.memory_space<vmem>>, vector<1x8x56xf32>,
    return
  }
  func.func @transform_0(%arg0: i32) -> (i32, i32, i32) {
    %c0_i32 = arith.constant 0 : i32
    %c0_i32_0 = arith.constant 0 : i32
    %c0_i32_1 = arith.constant 0 : i32
    return %arg0, %c0_i32, %c0_i32_0 : i32, i32, i32
  }
  func.func @transform_1(%arg0: i32) -> (i32, i32) {
    %c0_i32 = arith.constant 0 : i32
    %c0_i32_0 = arith.constant 0 : i32
    %c0_i32_1 = arith.constant 0 : i32
    return %c0_i32, %c0_i32_0 : i32, i32
  }
  func.func @transform_2(%arg0: i32) -> (i32, i32) {
    %c0_i32 = arith.constant 0 : i32
    %c0_i32_0 = arith.constant 0 : i32
    %c0_i32_1 = arith.constant 0 : i32
    return %c0_i32, %c0_i32_0 : i32, i32
  }
  func.func @transform_3(%arg0: i32) -> (i32, i32, i32) {
    %c0_i32 = arith.constant 0 : i32
    %c0_i32_0 = arith.constant 0 : i32
    %c0_i32_1 = arith.constant 0 : i32
    return %arg0, %c0_i32, %c0_i32_0 : i32, i32, i32
  }
}

module attributes {stable_mosaic.version = 11 : i64} {
  func.func @_st_layer_kernel(%arg0: i32, %arg1: memref<1x8x56xf32, #tpu.memory_space<vmem>>, %arg2: memref<1x16x56xf32, #tpu.memory_space<vmem>>, %arg3: memref<56x336xf32, #tpu.memory_space<vmem>>, %arg4: memref<48x96xf32, #tpu.memory_space<vmem>>, %arg5: memref<64x56xbf16, #tpu.memory_space<vmem>>, %arg6: memref<64x1xf32, #tpu.memory_space<vmem>>, %arg7: memref<16x8xbf16, #tpu.memory_space<vmem>>, %arg8: memref<16x1xf32, #tpu.memory_space<vmem>>, %arg9: memref<8x96xbf16, #tpu.memory_space<vmem>>, %arg10: memref<8x1xf32, #tpu.memory_space<vmem>>, %arg11: memref<8x1xf32, #tpu.memory_space<vmem>>, %arg12: memref<1x8x48xf32, #tpu.memory_space<vmem>>, %arg13: memref<1x16x48xf32, #tpu.memory_space<vmem>>) attributes {dimension_semantics = [#tpu.dimension_semantics<parallel>], iteration_bounds = array<i64: 2>, scalar_prefetch = 0 : i64, scratch_operands = 0 : i64, tpu.core_type = #tpu.core_type<tc>, window_params = [{transform_indices = @transform_0, window_bounds = array<i64: 1, 8, 56>}, {transform_indices = @transform_1, window_bounds = array<i64: 1, 16, 56>}, {pipeline_mode = #tpu.pipeline_mode<synchronous>, transform_indices = @transform_2, window_bounds = array<i64: 56, 336>}, {pipeline_mode = #tpu.pipeline_mode<synchronous>, transform_indices = @transform_3, window_bounds = array<i64: 48, 96>}, {pipeline_mode = #tpu.pipeline_mode<synchronous>, transform_indices = @transform_4, window_bounds = array<i64: 64, 56>}, {pipeline_mode = #tpu.pipeline_mode<synchronous>, transform_indices = @transform_5, window_bounds = array<i64: 64, 1>}, {pipeline_mode = #tpu.pipeline_mode<synchronous>, transform_indices = @transform_6, window_bounds = array<i64: 16, 8>}, {pipeline_mode = #tpu.pipeline_mode<synchronous>, transform_indices = @transform_7, window_bounds = array<i64: 16, 1>}, {pipeline_mode = #tpu.pipeline_mode<synchronous>, transform_indices = @transform_8, window_bounds = array<i64: 8, 96>}, {pipeline_mode = #tpu.pipeline_mode<synchronous>, transform_indices = @transform_9, window_bounds = array<i64: 8, 1>}, {pipeline_mode = #tpu.pipeline_mode<synchronous>, transform_indices = @transform_10, window_bounds = array<i64: 8, 1>}, {transform_indices = @transform_11, window_bounds = array<i64: 1, 8, 48>}, {transform_indices = @transform_12, window_bounds = array<i64: 1, 16, 48>}]} {
    %c0 = arith.constant 0 : index
    %c0_0 = arith.constant 0 : index
    %c0_1 = arith.constant 0 : index
    %0 = vector.load %arg1[%c0, %c0_0, %c0_1] : memref<1x8x56xf32, #tpu.memory_space<vmem>>, vector<1x8x56xf32>
    %1 = vector.shape_cast %0 : vector<1x8x56xf32> to vector<8x56xf32>
    %c0_2 = arith.constant 0 : index
    %c0_3 = arith.constant 0 : index
    %c0_4 = arith.constant 0 : index
    %2 = vector.load %arg2[%c0_2, %c0_3, %c0_4] : memref<1x16x56xf32, #tpu.memory_space<vmem>>, vector<1x16x56xf32>
    %3 = vector.shape_cast %2 : vector<1x16x56xf32> to vector<16x56xf32>
    %4 = tpu.concatenate %1, %3 in 0 : vector<8x56xf32>, vector<16x56xf32> -> vector<24x56xf32>
    %c0_5 = arith.constant 0 : index
    %c0_6 = arith.constant 0 : index
    %5 = vector.load %arg3[%c0_5, %c0_6] : memref<56x336xf32, #tpu.memory_space<vmem>>, vector<56x336xf32>
    %cst = arith.constant dense<0.000000e+00> : vector<24x336xf32>
    %6 = tpu.matmul %4, %5, %cst {dimension_numbers = #tpu.dot_dimension_numbers<[1], [0], [0], [1], [0, 0, 1, 1], [], []>} : vector<24x56xf32>, vector<56x336xf32>, vector<24x336xf32> -> vector<24x336xf32>
    %7 = vector.extract_strided_slice %6 {offsets = [0, 0], sizes = [8, 48], strides = [1, 1]} : vector<24x336xf32> to vector<8x48xf32>
    %8 = vector.extract_strided_slice %6 {offsets = [0, 48], sizes = [8, 48], strides = [1, 1]} : vector<24x336xf32> to vector<8x48xf32>
    %9 = vector.extract_strided_slice %6 {offsets = [0, 96], sizes = [8, 48], strides = [1, 1]} : vector<24x336xf32> to vector<8x48xf32>
    %10 = vector.extract_strided_slice %6 {offsets = [0, 144], sizes = [8, 48], strides = [1, 1]} : vector<24x336xf32> to vector<8x48xf32>
    %11 = vector.extract_strided_slice %6 {offsets = [0, 192], sizes = [8, 48], strides = [1, 1]} : vector<24x336xf32> to vector<8x48xf32>
    %12 = vector.extract_strided_slice %6 {offsets = [0, 240], sizes = [8, 48], strides = [1, 1]} : vector<24x336xf32> to vector<8x48xf32>
    %13 = vector.extract_strided_slice %6 {offsets = [0, 288], sizes = [8, 48], strides = [1, 1]} : vector<24x336xf32> to vector<8x48xf32>
    %14 = tpu.concatenate %7, %8, %9, %10, %11, %12, %13 in 0 : vector<8x48xf32>, vector<8x48xf32>, vector<8x48xf32>, vector<8x48xf32>, vector<8x48xf32>, vector<8x48xf32>, vector<8x48xf32> -> vector<56x48xf32>
    %15 = vector.extract_strided_slice %6 {offsets = [0, 192], sizes = [8, 48], strides = [1, 1]} : vector<24x336xf32> to vector<8x48xf32>
    %16 = vector.extract_strided_slice %6 {offsets = [8, 192], sizes = [16, 48], strides = [1, 1]} : vector<24x336xf32> to vector<16x48xf32>
    %c0_7 = arith.constant 0 : index
    %c0_8 = arith.constant 0 : index
    %17 = vector.load %arg5[%c0_7, %c0_8] : memref<64x56xbf16, #tpu.memory_space<vmem>>, vector<64x56xbf16>
    %18 = arith.truncf %14 : vector<56x48xf32> to vector<56x48xbf16>
    %cst_9 = arith.constant dense<0.000000e+00> : vector<64x48xf32>
    %19 = tpu.matmul %17, %18, %cst_9 {dimension_numbers = #tpu.dot_dimension_numbers<[1], [0], [0], [1], [0, 0, 1, 1], [], []>} : vector<64x56xbf16>, vector<56x48xbf16>, vector<64x48xf32> -> vector<64x48xf32>
    %c0_10 = arith.constant 0 : index
    %c0_11 = arith.constant 0 : index
    %20 = vector.load %arg6[%c0_10, %c0_11] : memref<64x1xf32, #tpu.memory_space<vmem>>, vector<64x1xf32>
    %21 = vector.broadcast %20 : vector<64x1xf32> to vector<64x48xf32>
    %22 = arith.addf %19, %21 : vector<64x48xf32>
    %23 = vector.extract_strided_slice %22 {offsets = [0, 0], sizes = [32, 48], strides = [1, 1]} : vector<64x48xf32> to vector<32x48xf32>
    %24 = math.tanh %23 : vector<32x48xf32>
    %25 = vector.extract_strided_slice %22 {offsets = [32, 0], sizes = [32, 48], strides = [1, 1]} : vector<64x48xf32> to vector<32x48xf32>
    %26 = arith.negf %25 : vector<32x48xf32>
    %27 = math.exp %26 : vector<32x48xf32>
    %cst_12 = arith.constant 1.000000e+00 : f32
    %28 = vector.broadcast %cst_12 : f32 to vector<32x48xf32>
    %29 = arith.addf %28, %27 : vector<32x48xf32>
    %30 = arith.divf %28, %29 : vector<32x48xf32>
    %31 = arith.mulf %24, %30 : vector<32x48xf32>
    %c0_13 = arith.constant 0 : index
    %c0_14 = arith.constant 0 : index
    %32 = vector.load %arg7[%c0_13, %c0_14] : memref<16x8xbf16, #tpu.memory_space<vmem>>, vector<16x8xbf16>
    %33 = vector.extract_strided_slice %31 {offsets = [0, 0], sizes = [8, 48], strides = [1, 1]} : vector<32x48xf32> to vector<8x48xf32>
    %34 = arith.truncf %33 : vector<8x48xf32> to vector<8x48xbf16>
    %cst_15 = arith.constant dense<0.000000e+00> : vector<16x48xf32>
    %35 = tpu.matmul %32, %34, %cst_15 {dimension_numbers = #tpu.dot_dimension_numbers<[1], [0], [0], [1], [0, 0, 1, 1], [], []>} : vector<16x8xbf16>, vector<8x48xbf16>, vector<16x48xf32> -> vector<16x48xf32>
    %c0_16 = arith.constant 0 : index
    %c0_17 = arith.constant 0 : index
    %36 = vector.load %arg8[%c0_16, %c0_17] : memref<16x1xf32, #tpu.memory_space<vmem>>, vector<16x1xf32>
    %37 = vector.broadcast %36 : vector<16x1xf32> to vector<16x48xf32>
    %38 = arith.addf %35, %37 : vector<16x48xf32>
    %39 = arith.addf %38, %16 : vector<16x48xf32>
    %c0_18 = arith.constant 0 : index
    %c0_19 = arith.constant 0 : index
    %c0_20 = arith.constant 0 : index
    %40 = vector.load %arg13[%c0_18, %c0_19, %c0_20] : memref<1x16x48xf32, #tpu.memory_space<vmem>>, vector<1x16x48xf32>
    %41 = vector.shape_cast %40 : vector<1x16x48xf32> to vector<16x48xf32>
    %42 = vector.shape_cast %39 : vector<16x48xf32> to vector<1x16x48xf32>
    tpu.vector_store %arg13[%c0_18, %c0_19, %c0_20], %42 {strides = array<i32>} : memref<1x16x48xf32, #tpu.memory_space<vmem>>, vector<1x16x48xf32>,
    %c0_21 = arith.constant 0 : index
    %c0_22 = arith.constant 0 : index
    %43 = vector.load %arg4[%c0_21, %c0_22] : memref<48x96xf32, #tpu.memory_space<vmem>>, vector<48x96xf32>
    %cst_23 = arith.constant dense<0.000000e+00> : vector<32x96xf32>
    %44 = tpu.matmul %31, %43, %cst_23 {dimension_numbers = #tpu.dot_dimension_numbers<[1], [0], [0], [1], [0, 0, 1, 1], [], []>} : vector<32x48xf32>, vector<48x96xf32>, vector<32x96xf32> -> vector<32x96xf32>
    %45 = vector.extract_strided_slice %44 {offsets = [0, 0], sizes = [32, 48], strides = [1, 1]} : vector<32x96xf32> to vector<32x48xf32>
    %46 = vector.extract_strided_slice %44 {offsets = [0, 48], sizes = [32, 48], strides = [1, 1]} : vector<32x96xf32> to vector<32x48xf32>
    %47 = tpu.concatenate %31, %45, %46 in 0 : vector<32x48xf32>, vector<32x48xf32>, vector<32x48xf32> -> vector<96x48xf32>
    %c0_24 = arith.constant 0 : index
    %c0_25 = arith.constant 0 : index
    %48 = vector.load %arg9[%c0_24, %c0_25] : memref<8x96xbf16, #tpu.memory_space<vmem>>, vector<8x96xbf16>
    %49 = arith.truncf %47 : vector<96x48xf32> to vector<96x48xbf16>
    %cst_26 = arith.constant dense<0.000000e+00> : vector<8x48xf32>
    %50 = tpu.matmul %48, %49, %cst_26 {dimension_numbers = #tpu.dot_dimension_numbers<[1], [0], [0], [1], [0, 0, 1, 1], [], []>} : vector<8x96xbf16>, vector<96x48xbf16>, vector<8x48xf32> -> vector<8x48xf32>
    %51 = arith.addf %50, %15 : vector<8x48xf32>
    %c0_27 = arith.constant 0 : index
    %c0_28 = arith.constant 0 : index
    %52 = vector.load %arg10[%c0_27, %c0_28] : memref<8x1xf32, #tpu.memory_space<vmem>>, vector<8x1xf32>
    %53 = vector.broadcast %52 : vector<8x1xf32> to vector<8x48xf32>
    %54 = arith.mulf %51, %53 : vector<8x48xf32>
    %c0_29 = arith.constant 0 : index
    %c0_30 = arith.constant 0 : index
    %55 = vector.load %arg11[%c0_29, %c0_30] : memref<8x1xf32, #tpu.memory_space<vmem>>, vector<8x1xf32>
    %56 = vector.broadcast %55 : vector<8x1xf32> to vector<8x48xf32>
    %57 = arith.addf %54, %56 : vector<8x48xf32>
    %c0_31 = arith.constant 0 : index
    %c0_32 = arith.constant 0 : index
    %c0_33 = arith.constant 0 : index
    %58 = vector.load %arg12[%c0_31, %c0_32, %c0_33] : memref<1x8x48xf32, #tpu.memory_space<vmem>>, vector<1x8x48xf32>
    %59 = vector.shape_cast %58 : vector<1x8x48xf32> to vector<8x48xf32>
    %60 = vector.shape_cast %57 : vector<8x48xf32> to vector<1x8x48xf32>
    tpu.vector_store %arg12[%c0_31, %c0_32, %c0_33], %60 {strides = array<i32>} : memref<1x8x48xf32, #tpu.memory_space<vmem>>, vector<1x8x48xf32>,
    return
  }
  func.func @transform_0(%arg0: i32) -> (i32, i32, i32) {
    %c0_i32 = arith.constant 0 : i32
    %c0_i32_0 = arith.constant 0 : i32
    %c0_i32_1 = arith.constant 0 : i32
    return %arg0, %c0_i32, %c0_i32_0 : i32, i32, i32
  }
  func.func @transform_1(%arg0: i32) -> (i32, i32, i32) {
    %c0_i32 = arith.constant 0 : i32
    %c0_i32_0 = arith.constant 0 : i32
    %c0_i32_1 = arith.constant 0 : i32
    return %arg0, %c0_i32, %c0_i32_0 : i32, i32, i32
  }
  func.func @transform_2(%arg0: i32) -> (i32, i32) {
    %c0_i32 = arith.constant 0 : i32
    %c0_i32_0 = arith.constant 0 : i32
    %c0_i32_1 = arith.constant 0 : i32
    return %c0_i32, %c0_i32_0 : i32, i32
  }
  func.func @transform_3(%arg0: i32) -> (i32, i32) {
    %c0_i32 = arith.constant 0 : i32
    %c0_i32_0 = arith.constant 0 : i32
    %c0_i32_1 = arith.constant 0 : i32
    return %c0_i32, %c0_i32_0 : i32, i32
  }
  func.func @transform_4(%arg0: i32) -> (i32, i32) {
    %c0_i32 = arith.constant 0 : i32
    %c0_i32_0 = arith.constant 0 : i32
    %c0_i32_1 = arith.constant 0 : i32
    return %c0_i32, %c0_i32_0 : i32, i32
  }
  func.func @transform_5(%arg0: i32) -> (i32, i32) {
    %c0_i32 = arith.constant 0 : i32
    %c0_i32_0 = arith.constant 0 : i32
    %c0_i32_1 = arith.constant 0 : i32
    return %c0_i32, %c0_i32_0 : i32, i32
  }
  func.func @transform_6(%arg0: i32) -> (i32, i32) {
    %c0_i32 = arith.constant 0 : i32
    %c0_i32_0 = arith.constant 0 : i32
    %c0_i32_1 = arith.constant 0 : i32
    return %c0_i32, %c0_i32_0 : i32, i32
  }
  func.func @transform_7(%arg0: i32) -> (i32, i32) {
    %c0_i32 = arith.constant 0 : i32
    %c0_i32_0 = arith.constant 0 : i32
    %c0_i32_1 = arith.constant 0 : i32
    return %c0_i32, %c0_i32_0 : i32, i32
  }
  func.func @transform_8(%arg0: i32) -> (i32, i32) {
    %c0_i32 = arith.constant 0 : i32
    %c0_i32_0 = arith.constant 0 : i32
    %c0_i32_1 = arith.constant 0 : i32
    return %c0_i32, %c0_i32_0 : i32, i32
  }
  func.func @transform_9(%arg0: i32) -> (i32, i32) {
    %c0_i32 = arith.constant 0 : i32
    %c0_i32_0 = arith.constant 0 : i32
    %c0_i32_1 = arith.constant 0 : i32
    return %c0_i32, %c0_i32_0 : i32, i32
  }
  func.func @transform_10(%arg0: i32) -> (i32, i32) {
    %c0_i32 = arith.constant 0 : i32
    %c0_i32_0 = arith.constant 0 : i32
    %c0_i32_1 = arith.constant 0 : i32
    return %c0_i32, %c0_i32_0 : i32, i32
  }
  func.func @transform_11(%arg0: i32) -> (i32, i32, i32) {
    %c0_i32 = arith.constant 0 : i32
    %c0_i32_0 = arith.constant 0 : i32
    %c0_i32_1 = arith.constant 0 : i32
    return %arg0, %c0_i32, %c0_i32_0 : i32, i32, i32
  }
  func.func @transform_12(%arg0: i32) -> (i32, i32, i32) {
    %c0_i32 = arith.constant 0 : i32
    %c0_i32_0 = arith.constant 0 : i32
    %c0_i32_1 = arith.constant 0 : i32
    return %arg0, %c0_i32, %c0_i32_0 : i32, i32, i32
  }
}

module attributes {stable_mosaic.version = 11 : i64} {
  func.func @_st_layer_kernel(%arg0: i32, %arg1: memref<1x8x48xf32, #tpu.memory_space<vmem>>, %arg2: memref<1x16x48xf32, #tpu.memory_space<vmem>>, %arg3: memref<48x224xf32, #tpu.memory_space<vmem>>, %arg4: memref<32x64xf32, #tpu.memory_space<vmem>>, %arg5: memref<64x56xbf16, #tpu.memory_space<vmem>>, %arg6: memref<64x1xf32, #tpu.memory_space<vmem>>, %arg7: memref<16x8xbf16, #tpu.memory_space<vmem>>, %arg8: memref<16x1xf32, #tpu.memory_space<vmem>>, %arg9: memref<8x96xbf16, #tpu.memory_space<vmem>>, %arg10: memref<8x1xf32, #tpu.memory_space<vmem>>, %arg11: memref<8x1xf32, #tpu.memory_space<vmem>>, %arg12: memref<1x8x32xf32, #tpu.memory_space<vmem>>, %arg13: memref<1x16x32xf32, #tpu.memory_space<vmem>>) attributes {dimension_semantics = [#tpu.dimension_semantics<parallel>], iteration_bounds = array<i64: 2>, scalar_prefetch = 0 : i64, scratch_operands = 0 : i64, tpu.core_type = #tpu.core_type<tc>, window_params = [{transform_indices = @transform_0, window_bounds = array<i64: 1, 8, 48>}, {transform_indices = @transform_1, window_bounds = array<i64: 1, 16, 48>}, {pipeline_mode = #tpu.pipeline_mode<synchronous>, transform_indices = @transform_2, window_bounds = array<i64: 48, 224>}, {pipeline_mode = #tpu.pipeline_mode<synchronous>, transform_indices = @transform_3, window_bounds = array<i64: 32, 64>}, {pipeline_mode = #tpu.pipeline_mode<synchronous>, transform_indices = @transform_4, window_bounds = array<i64: 64, 56>}, {pipeline_mode = #tpu.pipeline_mode<synchronous>, transform_indices = @transform_5, window_bounds = array<i64: 64, 1>}, {pipeline_mode = #tpu.pipeline_mode<synchronous>, transform_indices = @transform_6, window_bounds = array<i64: 16, 8>}, {pipeline_mode = #tpu.pipeline_mode<synchronous>, transform_indices = @transform_7, window_bounds = array<i64: 16, 1>}, {pipeline_mode = #tpu.pipeline_mode<synchronous>, transform_indices = @transform_8, window_bounds = array<i64: 8, 96>}, {pipeline_mode = #tpu.pipeline_mode<synchronous>, transform_indices = @transform_9, window_bounds = array<i64: 8, 1>}, {pipeline_mode = #tpu.pipeline_mode<synchronous>, transform_indices = @transform_10, window_bounds = array<i64: 8, 1>}, {transform_indices = @transform_11, window_bounds = array<i64: 1, 8, 32>}, {transform_indices = @transform_12, window_bounds = array<i64: 1, 16, 32>}]} {
    %c0 = arith.constant 0 : index
    %c0_0 = arith.constant 0 : index
    %c0_1 = arith.constant 0 : index
    %0 = vector.load %arg1[%c0, %c0_0, %c0_1] : memref<1x8x48xf32, #tpu.memory_space<vmem>>, vector<1x8x48xf32>
    %1 = vector.shape_cast %0 : vector<1x8x48xf32> to vector<8x48xf32>
    %c0_2 = arith.constant 0 : index
    %c0_3 = arith.constant 0 : index
    %c0_4 = arith.constant 0 : index
    %2 = vector.load %arg2[%c0_2, %c0_3, %c0_4] : memref<1x16x48xf32, #tpu.memory_space<vmem>>, vector<1x16x48xf32>
    %3 = vector.shape_cast %2 : vector<1x16x48xf32> to vector<16x48xf32>
    %4 = tpu.concatenate %1, %3 in 0 : vector<8x48xf32>, vector<16x48xf32> -> vector<24x48xf32>
    %c0_5 = arith.constant 0 : index
    %c0_6 = arith.constant 0 : index
    %5 = vector.load %arg3[%c0_5, %c0_6] : memref<48x224xf32, #tpu.memory_space<vmem>>, vector<48x224xf32>
    %cst = arith.constant dense<0.000000e+00> : vector<24x224xf32>
    %6 = tpu.matmul %4, %5, %cst {dimension_numbers = #tpu.dot_dimension_numbers<[1], [0], [0], [1], [0, 0, 1, 1], [], []>} : vector<24x48xf32>, vector<48x224xf32>, vector<24x224xf32> -> vector<24x224xf32>
    %7 = vector.extract_strided_slice %6 {offsets = [0, 0], sizes = [8, 32], strides = [1, 1]} : vector<24x224xf32> to vector<8x32xf32>
    %8 = vector.extract_strided_slice %6 {offsets = [0, 32], sizes = [8, 32], strides = [1, 1]} : vector<24x224xf32> to vector<8x32xf32>
    %9 = vector.extract_strided_slice %6 {offsets = [0, 64], sizes = [8, 32], strides = [1, 1]} : vector<24x224xf32> to vector<8x32xf32>
    %10 = vector.extract_strided_slice %6 {offsets = [0, 96], sizes = [8, 32], strides = [1, 1]} : vector<24x224xf32> to vector<8x32xf32>
    %11 = vector.extract_strided_slice %6 {offsets = [0, 128], sizes = [8, 32], strides = [1, 1]} : vector<24x224xf32> to vector<8x32xf32>
    %12 = vector.extract_strided_slice %6 {offsets = [0, 160], sizes = [8, 32], strides = [1, 1]} : vector<24x224xf32> to vector<8x32xf32>
    %13 = vector.extract_strided_slice %6 {offsets = [0, 192], sizes = [8, 32], strides = [1, 1]} : vector<24x224xf32> to vector<8x32xf32>
    %14 = tpu.concatenate %7, %8, %9, %10, %11, %12, %13 in 0 : vector<8x32xf32>, vector<8x32xf32>, vector<8x32xf32>, vector<8x32xf32>, vector<8x32xf32>, vector<8x32xf32>, vector<8x32xf32> -> vector<56x32xf32>
    %15 = vector.extract_strided_slice %6 {offsets = [0, 128], sizes = [8, 32], strides = [1, 1]} : vector<24x224xf32> to vector<8x32xf32>
    %16 = vector.extract_strided_slice %6 {offsets = [8, 128], sizes = [16, 32], strides = [1, 1]} : vector<24x224xf32> to vector<16x32xf32>
    %c0_7 = arith.constant 0 : index
    %c0_8 = arith.constant 0 : index
    %17 = vector.load %arg5[%c0_7, %c0_8] : memref<64x56xbf16, #tpu.memory_space<vmem>>, vector<64x56xbf16>
    %18 = arith.truncf %14 : vector<56x32xf32> to vector<56x32xbf16>
    %cst_9 = arith.constant dense<0.000000e+00> : vector<64x32xf32>
    %19 = tpu.matmul %17, %18, %cst_9 {dimension_numbers = #tpu.dot_dimension_numbers<[1], [0], [0], [1], [0, 0, 1, 1], [], []>} : vector<64x56xbf16>, vector<56x32xbf16>, vector<64x32xf32> -> vector<64x32xf32>
    %c0_10 = arith.constant 0 : index
    %c0_11 = arith.constant 0 : index
    %20 = vector.load %arg6[%c0_10, %c0_11] : memref<64x1xf32, #tpu.memory_space<vmem>>, vector<64x1xf32>
    %21 = vector.broadcast %20 : vector<64x1xf32> to vector<64x32xf32>
    %22 = arith.addf %19, %21 : vector<64x32xf32>
    %23 = vector.extract_strided_slice %22 {offsets = [0, 0], sizes = [32, 32], strides = [1, 1]} : vector<64x32xf32> to vector<32x32xf32>
    %24 = math.tanh %23 : vector<32x32xf32>
    %25 = vector.extract_strided_slice %22 {offsets = [32, 0], sizes = [32, 32], strides = [1, 1]} : vector<64x32xf32> to vector<32x32xf32>
    %26 = arith.negf %25 : vector<32x32xf32>
    %27 = math.exp %26 : vector<32x32xf32>
    %cst_12 = arith.constant 1.000000e+00 : f32
    %28 = vector.broadcast %cst_12 : f32 to vector<32x32xf32>
    %29 = arith.addf %28, %27 : vector<32x32xf32>
    %30 = arith.divf %28, %29 : vector<32x32xf32>
    %31 = arith.mulf %24, %30 : vector<32x32xf32>
    %c0_13 = arith.constant 0 : index
    %c0_14 = arith.constant 0 : index
    %32 = vector.load %arg7[%c0_13, %c0_14] : memref<16x8xbf16, #tpu.memory_space<vmem>>, vector<16x8xbf16>
    %33 = vector.extract_strided_slice %31 {offsets = [0, 0], sizes = [8, 32], strides = [1, 1]} : vector<32x32xf32> to vector<8x32xf32>
    %34 = arith.truncf %33 : vector<8x32xf32> to vector<8x32xbf16>
    %cst_15 = arith.constant dense<0.000000e+00> : vector<16x32xf32>
    %35 = tpu.matmul %32, %34, %cst_15 {dimension_numbers = #tpu.dot_dimension_numbers<[1], [0], [0], [1], [0, 0, 1, 1], [], []>} : vector<16x8xbf16>, vector<8x32xbf16>, vector<16x32xf32> -> vector<16x32xf32>
    %c0_16 = arith.constant 0 : index
    %c0_17 = arith.constant 0 : index
    %36 = vector.load %arg8[%c0_16, %c0_17] : memref<16x1xf32, #tpu.memory_space<vmem>>, vector<16x1xf32>
    %37 = vector.broadcast %36 : vector<16x1xf32> to vector<16x32xf32>
    %38 = arith.addf %35, %37 : vector<16x32xf32>
    %39 = arith.addf %38, %16 : vector<16x32xf32>
    %c0_18 = arith.constant 0 : index
    %c0_19 = arith.constant 0 : index
    %c0_20 = arith.constant 0 : index
    %40 = vector.load %arg13[%c0_18, %c0_19, %c0_20] : memref<1x16x32xf32, #tpu.memory_space<vmem>>, vector<1x16x32xf32>
    %41 = vector.shape_cast %40 : vector<1x16x32xf32> to vector<16x32xf32>
    %42 = vector.shape_cast %39 : vector<16x32xf32> to vector<1x16x32xf32>
    tpu.vector_store %arg13[%c0_18, %c0_19, %c0_20], %42 {strides = array<i32>} : memref<1x16x32xf32, #tpu.memory_space<vmem>>, vector<1x16x32xf32>,
    %c0_21 = arith.constant 0 : index
    %c0_22 = arith.constant 0 : index
    %43 = vector.load %arg4[%c0_21, %c0_22] : memref<32x64xf32, #tpu.memory_space<vmem>>, vector<32x64xf32>
    %cst_23 = arith.constant dense<0.000000e+00> : vector<32x64xf32>
    %44 = tpu.matmul %31, %43, %cst_23 {dimension_numbers = #tpu.dot_dimension_numbers<[1], [0], [0], [1], [0, 0, 1, 1], [], []>} : vector<32x32xf32>, vector<32x64xf32>, vector<32x64xf32> -> vector<32x64xf32>
    %45 = vector.extract_strided_slice %44 {offsets = [0, 0], sizes = [32, 32], strides = [1, 1]} : vector<32x64xf32> to vector<32x32xf32>
    %46 = vector.extract_strided_slice %44 {offsets = [0, 32], sizes = [32, 32], strides = [1, 1]} : vector<32x64xf32> to vector<32x32xf32>
    %47 = tpu.concatenate %31, %45, %46 in 0 : vector<32x32xf32>, vector<32x32xf32>, vector<32x32xf32> -> vector<96x32xf32>
    %c0_24 = arith.constant 0 : index
    %c0_25 = arith.constant 0 : index
    %48 = vector.load %arg9[%c0_24, %c0_25] : memref<8x96xbf16, #tpu.memory_space<vmem>>, vector<8x96xbf16>
    %49 = arith.truncf %47 : vector<96x32xf32> to vector<96x32xbf16>
    %cst_26 = arith.constant dense<0.000000e+00> : vector<8x32xf32>
    %50 = tpu.matmul %48, %49, %cst_26 {dimension_numbers = #tpu.dot_dimension_numbers<[1], [0], [0], [1], [0, 0, 1, 1], [], []>} : vector<8x96xbf16>, vector<96x32xbf16>, vector<8x32xf32> -> vector<8x32xf32>
    %51 = arith.addf %50, %15 : vector<8x32xf32>
    %c0_27 = arith.constant 0 : index
    %c0_28 = arith.constant 0 : index
    %52 = vector.load %arg10[%c0_27, %c0_28] : memref<8x1xf32, #tpu.memory_space<vmem>>, vector<8x1xf32>
    %53 = vector.broadcast %52 : vector<8x1xf32> to vector<8x32xf32>
    %54 = arith.mulf %51, %53 : vector<8x32xf32>
    %c0_29 = arith.constant 0 : index
    %c0_30 = arith.constant 0 : index
    %55 = vector.load %arg11[%c0_29, %c0_30] : memref<8x1xf32, #tpu.memory_space<vmem>>, vector<8x1xf32>
    %56 = vector.broadcast %55 : vector<8x1xf32> to vector<8x32xf32>
    %57 = arith.addf %54, %56 : vector<8x32xf32>
    %c0_31 = arith.constant 0 : index
    %c0_32 = arith.constant 0 : index
    %c0_33 = arith.constant 0 : index
    %58 = vector.load %arg12[%c0_31, %c0_32, %c0_33] : memref<1x8x32xf32, #tpu.memory_space<vmem>>, vector<1x8x32xf32>
    %59 = vector.shape_cast %58 : vector<1x8x32xf32> to vector<8x32xf32>
    %60 = vector.shape_cast %57 : vector<8x32xf32> to vector<1x8x32xf32>
    tpu.vector_store %arg12[%c0_31, %c0_32, %c0_33], %60 {strides = array<i32>} : memref<1x8x32xf32, #tpu.memory_space<vmem>>, vector<1x8x32xf32>,
    return
  }
  func.func @transform_0(%arg0: i32) -> (i32, i32, i32) {
    %c0_i32 = arith.constant 0 : i32
    %c0_i32_0 = arith.constant 0 : i32
    %c0_i32_1 = arith.constant 0 : i32
    return %arg0, %c0_i32, %c0_i32_0 : i32, i32, i32
  }
  func.func @transform_1(%arg0: i32) -> (i32, i32, i32) {
    %c0_i32 = arith.constant 0 : i32
    %c0_i32_0 = arith.constant 0 : i32
    %c0_i32_1 = arith.constant 0 : i32
    return %arg0, %c0_i32, %c0_i32_0 : i32, i32, i32
  }
  func.func @transform_2(%arg0: i32) -> (i32, i32) {
    %c0_i32 = arith.constant 0 : i32
    %c0_i32_0 = arith.constant 0 : i32
    %c0_i32_1 = arith.constant 0 : i32
    return %c0_i32, %c0_i32_0 : i32, i32
  }
  func.func @transform_3(%arg0: i32) -> (i32, i32) {
    %c0_i32 = arith.constant 0 : i32
    %c0_i32_0 = arith.constant 0 : i32
    %c0_i32_1 = arith.constant 0 : i32
    return %c0_i32, %c0_i32_0 : i32, i32
  }
  func.func @transform_4(%arg0: i32) -> (i32, i32) {
    %c0_i32 = arith.constant 0 : i32
    %c0_i32_0 = arith.constant 0 : i32
    %c0_i32_1 = arith.constant 0 : i32
    return %c0_i32, %c0_i32_0 : i32, i32
  }
  func.func @transform_5(%arg0: i32) -> (i32, i32) {
    %c0_i32 = arith.constant 0 : i32
    %c0_i32_0 = arith.constant 0 : i32
    %c0_i32_1 = arith.constant 0 : i32
    return %c0_i32, %c0_i32_0 : i32, i32
  }
  func.func @transform_6(%arg0: i32) -> (i32, i32) {
    %c0_i32 = arith.constant 0 : i32
    %c0_i32_0 = arith.constant 0 : i32
    %c0_i32_1 = arith.constant 0 : i32
    return %c0_i32, %c0_i32_0 : i32, i32
  }
  func.func @transform_7(%arg0: i32) -> (i32, i32) {
    %c0_i32 = arith.constant 0 : i32
    %c0_i32_0 = arith.constant 0 : i32
    %c0_i32_1 = arith.constant 0 : i32
    return %c0_i32, %c0_i32_0 : i32, i32
  }
  func.func @transform_8(%arg0: i32) -> (i32, i32) {
    %c0_i32 = arith.constant 0 : i32
    %c0_i32_0 = arith.constant 0 : i32
    %c0_i32_1 = arith.constant 0 : i32
    return %c0_i32, %c0_i32_0 : i32, i32
  }
  func.func @transform_9(%arg0: i32) -> (i32, i32) {
    %c0_i32 = arith.constant 0 : i32
    %c0_i32_0 = arith.constant 0 : i32
    %c0_i32_1 = arith.constant 0 : i32
    return %c0_i32, %c0_i32_0 : i32, i32
  }
  func.func @transform_10(%arg0: i32) -> (i32, i32) {
    %c0_i32 = arith.constant 0 : i32
    %c0_i32_0 = arith.constant 0 : i32
    %c0_i32_1 = arith.constant 0 : i32
    return %c0_i32, %c0_i32_0 : i32, i32
  }
  func.func @transform_11(%arg0: i32) -> (i32, i32, i32) {
    %c0_i32 = arith.constant 0 : i32
    %c0_i32_0 = arith.constant 0 : i32
    %c0_i32_1 = arith.constant 0 : i32
    return %arg0, %c0_i32, %c0_i32_0 : i32, i32, i32
  }
  func.func @transform_12(%arg0: i32) -> (i32, i32, i32) {
    %c0_i32 = arith.constant 0 : i32
    %c0_i32_0 = arith.constant 0 : i32
    %c0_i32_1 = arith.constant 0 : i32
    return %arg0, %c0_i32, %c0_i32_0 : i32, i32, i32
  }
}

module attributes {stable_mosaic.version = 11 : i64} {
  func.func @_st_layer_kernel(%arg0: i32, %arg1: memref<1x8x32xf32, #tpu.memory_space<vmem>>, %arg2: memref<1x16x32xf32, #tpu.memory_space<vmem>>, %arg3: memref<32x168xf32, #tpu.memory_space<vmem>>, %arg4: memref<24x48xf32, #tpu.memory_space<vmem>>, %arg5: memref<64x56xbf16, #tpu.memory_space<vmem>>, %arg6: memref<64x1xf32, #tpu.memory_space<vmem>>, %arg7: memref<16x8xbf16, #tpu.memory_space<vmem>>, %arg8: memref<16x1xf32, #tpu.memory_space<vmem>>, %arg9: memref<8x96xbf16, #tpu.memory_space<vmem>>, %arg10: memref<8x1xf32, #tpu.memory_space<vmem>>, %arg11: memref<8x1xf32, #tpu.memory_space<vmem>>, %arg12: memref<1x8x24xf32, #tpu.memory_space<vmem>>, %arg13: memref<1x16x24xf32, #tpu.memory_space<vmem>>) attributes {dimension_semantics = [#tpu.dimension_semantics<parallel>], iteration_bounds = array<i64: 2>, scalar_prefetch = 0 : i64, scratch_operands = 0 : i64, tpu.core_type = #tpu.core_type<tc>, window_params = [{transform_indices = @transform_0, window_bounds = array<i64: 1, 8, 32>}, {transform_indices = @transform_1, window_bounds = array<i64: 1, 16, 32>}, {pipeline_mode = #tpu.pipeline_mode<synchronous>, transform_indices = @transform_2, window_bounds = array<i64: 32, 168>}, {pipeline_mode = #tpu.pipeline_mode<synchronous>, transform_indices = @transform_3, window_bounds = array<i64: 24, 48>}, {pipeline_mode = #tpu.pipeline_mode<synchronous>, transform_indices = @transform_4, window_bounds = array<i64: 64, 56>}, {pipeline_mode = #tpu.pipeline_mode<synchronous>, transform_indices = @transform_5, window_bounds = array<i64: 64, 1>}, {pipeline_mode = #tpu.pipeline_mode<synchronous>, transform_indices = @transform_6, window_bounds = array<i64: 16, 8>}, {pipeline_mode = #tpu.pipeline_mode<synchronous>, transform_indices = @transform_7, window_bounds = array<i64: 16, 1>}, {pipeline_mode = #tpu.pipeline_mode<synchronous>, transform_indices = @transform_8, window_bounds = array<i64: 8, 96>}, {pipeline_mode = #tpu.pipeline_mode<synchronous>, transform_indices = @transform_9, window_bounds = array<i64: 8, 1>}, {pipeline_mode = #tpu.pipeline_mode<synchronous>, transform_indices = @transform_10, window_bounds = array<i64: 8, 1>}, {transform_indices = @transform_11, window_bounds = array<i64: 1, 8, 24>}, {transform_indices = @transform_12, window_bounds = array<i64: 1, 16, 24>}]} {
    %c0 = arith.constant 0 : index
    %c0_0 = arith.constant 0 : index
    %c0_1 = arith.constant 0 : index
    %0 = vector.load %arg1[%c0, %c0_0, %c0_1] : memref<1x8x32xf32, #tpu.memory_space<vmem>>, vector<1x8x32xf32>
    %1 = vector.shape_cast %0 : vector<1x8x32xf32> to vector<8x32xf32>
    %c0_2 = arith.constant 0 : index
    %c0_3 = arith.constant 0 : index
    %c0_4 = arith.constant 0 : index
    %2 = vector.load %arg2[%c0_2, %c0_3, %c0_4] : memref<1x16x32xf32, #tpu.memory_space<vmem>>, vector<1x16x32xf32>
    %3 = vector.shape_cast %2 : vector<1x16x32xf32> to vector<16x32xf32>
    %4 = tpu.concatenate %1, %3 in 0 : vector<8x32xf32>, vector<16x32xf32> -> vector<24x32xf32>
    %c0_5 = arith.constant 0 : index
    %c0_6 = arith.constant 0 : index
    %5 = vector.load %arg3[%c0_5, %c0_6] : memref<32x168xf32, #tpu.memory_space<vmem>>, vector<32x168xf32>
    %cst = arith.constant dense<0.000000e+00> : vector<24x168xf32>
    %6 = tpu.matmul %4, %5, %cst {dimension_numbers = #tpu.dot_dimension_numbers<[1], [0], [0], [1], [0, 0, 1, 1], [], []>} : vector<24x32xf32>, vector<32x168xf32>, vector<24x168xf32> -> vector<24x168xf32>
    %7 = vector.extract_strided_slice %6 {offsets = [0, 0], sizes = [8, 24], strides = [1, 1]} : vector<24x168xf32> to vector<8x24xf32>
    %8 = vector.extract_strided_slice %6 {offsets = [0, 24], sizes = [8, 24], strides = [1, 1]} : vector<24x168xf32> to vector<8x24xf32>
    %9 = vector.extract_strided_slice %6 {offsets = [0, 48], sizes = [8, 24], strides = [1, 1]} : vector<24x168xf32> to vector<8x24xf32>
    %10 = vector.extract_strided_slice %6 {offsets = [0, 72], sizes = [8, 24], strides = [1, 1]} : vector<24x168xf32> to vector<8x24xf32>
    %11 = vector.extract_strided_slice %6 {offsets = [0, 96], sizes = [8, 24], strides = [1, 1]} : vector<24x168xf32> to vector<8x24xf32>
    %12 = vector.extract_strided_slice %6 {offsets = [0, 120], sizes = [8, 24], strides = [1, 1]} : vector<24x168xf32> to vector<8x24xf32>
    %13 = vector.extract_strided_slice %6 {offsets = [0, 144], sizes = [8, 24], strides = [1, 1]} : vector<24x168xf32> to vector<8x24xf32>
    %14 = tpu.concatenate %7, %8, %9, %10, %11, %12, %13 in 0 : vector<8x24xf32>, vector<8x24xf32>, vector<8x24xf32>, vector<8x24xf32>, vector<8x24xf32>, vector<8x24xf32>, vector<8x24xf32> -> vector<56x24xf32>
    %15 = vector.extract_strided_slice %6 {offsets = [0, 96], sizes = [8, 24], strides = [1, 1]} : vector<24x168xf32> to vector<8x24xf32>
    %16 = vector.extract_strided_slice %6 {offsets = [8, 96], sizes = [16, 24], strides = [1, 1]} : vector<24x168xf32> to vector<16x24xf32>
    %c0_7 = arith.constant 0 : index
    %c0_8 = arith.constant 0 : index
    %17 = vector.load %arg5[%c0_7, %c0_8] : memref<64x56xbf16, #tpu.memory_space<vmem>>, vector<64x56xbf16>
    %18 = arith.truncf %14 : vector<56x24xf32> to vector<56x24xbf16>
    %cst_9 = arith.constant dense<0.000000e+00> : vector<64x24xf32>
    %19 = tpu.matmul %17, %18, %cst_9 {dimension_numbers = #tpu.dot_dimension_numbers<[1], [0], [0], [1], [0, 0, 1, 1], [], []>} : vector<64x56xbf16>, vector<56x24xbf16>, vector<64x24xf32> -> vector<64x24xf32>
    %c0_10 = arith.constant 0 : index
    %c0_11 = arith.constant 0 : index
    %20 = vector.load %arg6[%c0_10, %c0_11] : memref<64x1xf32, #tpu.memory_space<vmem>>, vector<64x1xf32>
    %21 = vector.broadcast %20 : vector<64x1xf32> to vector<64x24xf32>
    %22 = arith.addf %19, %21 : vector<64x24xf32>
    %23 = vector.extract_strided_slice %22 {offsets = [0, 0], sizes = [32, 24], strides = [1, 1]} : vector<64x24xf32> to vector<32x24xf32>
    %24 = math.tanh %23 : vector<32x24xf32>
    %25 = vector.extract_strided_slice %22 {offsets = [32, 0], sizes = [32, 24], strides = [1, 1]} : vector<64x24xf32> to vector<32x24xf32>
    %26 = arith.negf %25 : vector<32x24xf32>
    %27 = math.exp %26 : vector<32x24xf32>
    %cst_12 = arith.constant 1.000000e+00 : f32
    %28 = vector.broadcast %cst_12 : f32 to vector<32x24xf32>
    %29 = arith.addf %28, %27 : vector<32x24xf32>
    %30 = arith.divf %28, %29 : vector<32x24xf32>
    %31 = arith.mulf %24, %30 : vector<32x24xf32>
    %c0_13 = arith.constant 0 : index
    %c0_14 = arith.constant 0 : index
    %32 = vector.load %arg7[%c0_13, %c0_14] : memref<16x8xbf16, #tpu.memory_space<vmem>>, vector<16x8xbf16>
    %33 = vector.extract_strided_slice %31 {offsets = [0, 0], sizes = [8, 24], strides = [1, 1]} : vector<32x24xf32> to vector<8x24xf32>
    %34 = arith.truncf %33 : vector<8x24xf32> to vector<8x24xbf16>
    %cst_15 = arith.constant dense<0.000000e+00> : vector<16x24xf32>
    %35 = tpu.matmul %32, %34, %cst_15 {dimension_numbers = #tpu.dot_dimension_numbers<[1], [0], [0], [1], [0, 0, 1, 1], [], []>} : vector<16x8xbf16>, vector<8x24xbf16>, vector<16x24xf32> -> vector<16x24xf32>
    %c0_16 = arith.constant 0 : index
    %c0_17 = arith.constant 0 : index
    %36 = vector.load %arg8[%c0_16, %c0_17] : memref<16x1xf32, #tpu.memory_space<vmem>>, vector<16x1xf32>
    %37 = vector.broadcast %36 : vector<16x1xf32> to vector<16x24xf32>
    %38 = arith.addf %35, %37 : vector<16x24xf32>
    %39 = arith.addf %38, %16 : vector<16x24xf32>
    %c0_18 = arith.constant 0 : index
    %c0_19 = arith.constant 0 : index
    %c0_20 = arith.constant 0 : index
    %40 = vector.load %arg13[%c0_18, %c0_19, %c0_20] : memref<1x16x24xf32, #tpu.memory_space<vmem>>, vector<1x16x24xf32>
    %41 = vector.shape_cast %40 : vector<1x16x24xf32> to vector<16x24xf32>
    %42 = vector.shape_cast %39 : vector<16x24xf32> to vector<1x16x24xf32>
    tpu.vector_store %arg13[%c0_18, %c0_19, %c0_20], %42 {strides = array<i32>} : memref<1x16x24xf32, #tpu.memory_space<vmem>>, vector<1x16x24xf32>,
    %c0_21 = arith.constant 0 : index
    %c0_22 = arith.constant 0 : index
    %43 = vector.load %arg4[%c0_21, %c0_22] : memref<24x48xf32, #tpu.memory_space<vmem>>, vector<24x48xf32>
    %cst_23 = arith.constant dense<0.000000e+00> : vector<32x48xf32>
    %44 = tpu.matmul %31, %43, %cst_23 {dimension_numbers = #tpu.dot_dimension_numbers<[1], [0], [0], [1], [0, 0, 1, 1], [], []>} : vector<32x24xf32>, vector<24x48xf32>, vector<32x48xf32> -> vector<32x48xf32>
    %45 = vector.extract_strided_slice %44 {offsets = [0, 0], sizes = [32, 24], strides = [1, 1]} : vector<32x48xf32> to vector<32x24xf32>
    %46 = vector.extract_strided_slice %44 {offsets = [0, 24], sizes = [32, 24], strides = [1, 1]} : vector<32x48xf32> to vector<32x24xf32>
    %47 = tpu.concatenate %31, %45, %46 in 0 : vector<32x24xf32>, vector<32x24xf32>, vector<32x24xf32> -> vector<96x24xf32>
    %c0_24 = arith.constant 0 : index
    %c0_25 = arith.constant 0 : index
    %48 = vector.load %arg9[%c0_24, %c0_25] : memref<8x96xbf16, #tpu.memory_space<vmem>>, vector<8x96xbf16>
    %49 = arith.truncf %47 : vector<96x24xf32> to vector<96x24xbf16>
    %cst_26 = arith.constant dense<0.000000e+00> : vector<8x24xf32>
    %50 = tpu.matmul %48, %49, %cst_26 {dimension_numbers = #tpu.dot_dimension_numbers<[1], [0], [0], [1], [0, 0, 1, 1], [], []>} : vector<8x96xbf16>, vector<96x24xbf16>, vector<8x24xf32> -> vector<8x24xf32>
    %51 = arith.addf %50, %15 : vector<8x24xf32>
    %c0_27 = arith.constant 0 : index
    %c0_28 = arith.constant 0 : index
    %52 = vector.load %arg10[%c0_27, %c0_28] : memref<8x1xf32, #tpu.memory_space<vmem>>, vector<8x1xf32>
    %53 = vector.broadcast %52 : vector<8x1xf32> to vector<8x24xf32>
    %54 = arith.mulf %51, %53 : vector<8x24xf32>
    %c0_29 = arith.constant 0 : index
    %c0_30 = arith.constant 0 : index
    %55 = vector.load %arg11[%c0_29, %c0_30] : memref<8x1xf32, #tpu.memory_space<vmem>>, vector<8x1xf32>
    %56 = vector.broadcast %55 : vector<8x1xf32> to vector<8x24xf32>
    %57 = arith.addf %54, %56 : vector<8x24xf32>
    %c0_31 = arith.constant 0 : index
    %c0_32 = arith.constant 0 : index
    %c0_33 = arith.constant 0 : index
    %58 = vector.load %arg12[%c0_31, %c0_32, %c0_33] : memref<1x8x24xf32, #tpu.memory_space<vmem>>, vector<1x8x24xf32>
    %59 = vector.shape_cast %58 : vector<1x8x24xf32> to vector<8x24xf32>
    %60 = vector.shape_cast %57 : vector<8x24xf32> to vector<1x8x24xf32>
    tpu.vector_store %arg12[%c0_31, %c0_32, %c0_33], %60 {strides = array<i32>} : memref<1x8x24xf32, #tpu.memory_space<vmem>>, vector<1x8x24xf32>,
    return
  }
  func.func @transform_0(%arg0: i32) -> (i32, i32, i32) {
    %c0_i32 = arith.constant 0 : i32
    %c0_i32_0 = arith.constant 0 : i32
    %c0_i32_1 = arith.constant 0 : i32
    return %arg0, %c0_i32, %c0_i32_0 : i32, i32, i32
  }
  func.func @transform_1(%arg0: i32) -> (i32, i32, i32) {
    %c0_i32 = arith.constant 0 : i32
    %c0_i32_0 = arith.constant 0 : i32
    %c0_i32_1 = arith.constant 0 : i32
    return %arg0, %c0_i32, %c0_i32_0 : i32, i32, i32
  }
  func.func @transform_2(%arg0: i32) -> (i32, i32) {
    %c0_i32 = arith.constant 0 : i32
    %c0_i32_0 = arith.constant 0 : i32
    %c0_i32_1 = arith.constant 0 : i32
    return %c0_i32, %c0_i32_0 : i32, i32
  }
  func.func @transform_3(%arg0: i32) -> (i32, i32) {
    %c0_i32 = arith.constant 0 : i32
    %c0_i32_0 = arith.constant 0 : i32
    %c0_i32_1 = arith.constant 0 : i32
    return %c0_i32, %c0_i32_0 : i32, i32
  }
  func.func @transform_4(%arg0: i32) -> (i32, i32) {
    %c0_i32 = arith.constant 0 : i32
    %c0_i32_0 = arith.constant 0 : i32
    %c0_i32_1 = arith.constant 0 : i32
    return %c0_i32, %c0_i32_0 : i32, i32
  }
  func.func @transform_5(%arg0: i32) -> (i32, i32) {
    %c0_i32 = arith.constant 0 : i32
    %c0_i32_0 = arith.constant 0 : i32
    %c0_i32_1 = arith.constant 0 : i32
    return %c0_i32, %c0_i32_0 : i32, i32
  }
  func.func @transform_6(%arg0: i32) -> (i32, i32) {
    %c0_i32 = arith.constant 0 : i32
    %c0_i32_0 = arith.constant 0 : i32
    %c0_i32_1 = arith.constant 0 : i32
    return %c0_i32, %c0_i32_0 : i32, i32
  }
  func.func @transform_7(%arg0: i32) -> (i32, i32) {
    %c0_i32 = arith.constant 0 : i32
    %c0_i32_0 = arith.constant 0 : i32
    %c0_i32_1 = arith.constant 0 : i32
    return %c0_i32, %c0_i32_0 : i32, i32
  }
  func.func @transform_8(%arg0: i32) -> (i32, i32) {
    %c0_i32 = arith.constant 0 : i32
    %c0_i32_0 = arith.constant 0 : i32
    %c0_i32_1 = arith.constant 0 : i32
    return %c0_i32, %c0_i32_0 : i32, i32
  }
  func.func @transform_9(%arg0: i32) -> (i32, i32) {
    %c0_i32 = arith.constant 0 : i32
    %c0_i32_0 = arith.constant 0 : i32
    %c0_i32_1 = arith.constant 0 : i32
    return %c0_i32, %c0_i32_0 : i32, i32
  }
  func.func @transform_10(%arg0: i32) -> (i32, i32) {
    %c0_i32 = arith.constant 0 : i32
    %c0_i32_0 = arith.constant 0 : i32
    %c0_i32_1 = arith.constant 0 : i32
    return %c0_i32, %c0_i32_0 : i32, i32
  }
  func.func @transform_11(%arg0: i32) -> (i32, i32, i32) {
    %c0_i32 = arith.constant 0 : i32
    %c0_i32_0 = arith.constant 0 : i32
    %c0_i32_1 = arith.constant 0 : i32
    return %arg0, %c0_i32, %c0_i32_0 : i32, i32, i32
  }
  func.func @transform_12(%arg0: i32) -> (i32, i32, i32) {
    %c0_i32 = arith.constant 0 : i32
    %c0_i32_0 = arith.constant 0 : i32
    %c0_i32_1 = arith.constant 0 : i32
    return %arg0, %c0_i32, %c0_i32_0 : i32, i32, i32
  }
}

module attributes {stable_mosaic.version = 11 : i64} {
  func.func @_st_layer_kernel(%arg0: i32, %arg1: memref<1x8x24xf32, #tpu.memory_space<vmem>>, %arg2: memref<1x16x24xf32, #tpu.memory_space<vmem>>, %arg3: memref<24x56xf32, #tpu.memory_space<vmem>>, %arg4: memref<8x16xf32, #tpu.memory_space<vmem>>, %arg5: memref<64x56xbf16, #tpu.memory_space<vmem>>, %arg6: memref<64x1xf32, #tpu.memory_space<vmem>>, %arg7: memref<16x8xbf16, #tpu.memory_space<vmem>>, %arg8: memref<16x1xf32, #tpu.memory_space<vmem>>, %arg9: memref<8x96xbf16, #tpu.memory_space<vmem>>, %arg10: memref<8x1xf32, #tpu.memory_space<vmem>>, %arg11: memref<8x1xf32, #tpu.memory_space<vmem>>, %arg12: memref<1x8x8xf32, #tpu.memory_space<vmem>>, %arg13: memref<1x16x8xf32, #tpu.memory_space<vmem>>) attributes {dimension_semantics = [#tpu.dimension_semantics<parallel>], iteration_bounds = array<i64: 2>, scalar_prefetch = 0 : i64, scratch_operands = 0 : i64, tpu.core_type = #tpu.core_type<tc>, window_params = [{transform_indices = @transform_0, window_bounds = array<i64: 1, 8, 24>}, {transform_indices = @transform_1, window_bounds = array<i64: 1, 16, 24>}, {pipeline_mode = #tpu.pipeline_mode<synchronous>, transform_indices = @transform_2, window_bounds = array<i64: 24, 56>}, {pipeline_mode = #tpu.pipeline_mode<synchronous>, transform_indices = @transform_3, window_bounds = array<i64: 8, 16>}, {pipeline_mode = #tpu.pipeline_mode<synchronous>, transform_indices = @transform_4, window_bounds = array<i64: 64, 56>}, {pipeline_mode = #tpu.pipeline_mode<synchronous>, transform_indices = @transform_5, window_bounds = array<i64: 64, 1>}, {pipeline_mode = #tpu.pipeline_mode<synchronous>, transform_indices = @transform_6, window_bounds = array<i64: 16, 8>}, {pipeline_mode = #tpu.pipeline_mode<synchronous>, transform_indices = @transform_7, window_bounds = array<i64: 16, 1>}, {pipeline_mode = #tpu.pipeline_mode<synchronous>, transform_indices = @transform_8, window_bounds = array<i64: 8, 96>}, {pipeline_mode = #tpu.pipeline_mode<synchronous>, transform_indices = @transform_9, window_bounds = array<i64: 8, 1>}, {pipeline_mode = #tpu.pipeline_mode<synchronous>, transform_indices = @transform_10, window_bounds = array<i64: 8, 1>}, {transform_indices = @transform_11, window_bounds = array<i64: 1, 8, 8>}, {transform_indices = @transform_12, window_bounds = array<i64: 1, 16, 8>}]} {
    %c0 = arith.constant 0 : index
    %c0_0 = arith.constant 0 : index
    %c0_1 = arith.constant 0 : index
    %0 = vector.load %arg1[%c0, %c0_0, %c0_1] : memref<1x8x24xf32, #tpu.memory_space<vmem>>, vector<1x8x24xf32>
    %1 = vector.shape_cast %0 : vector<1x8x24xf32> to vector<8x24xf32>
    %c0_2 = arith.constant 0 : index
    %c0_3 = arith.constant 0 : index
    %c0_4 = arith.constant 0 : index
    %2 = vector.load %arg2[%c0_2, %c0_3, %c0_4] : memref<1x16x24xf32, #tpu.memory_space<vmem>>, vector<1x16x24xf32>
    %3 = vector.shape_cast %2 : vector<1x16x24xf32> to vector<16x24xf32>
    %4 = tpu.concatenate %1, %3 in 0 : vector<8x24xf32>, vector<16x24xf32> -> vector<24x24xf32>
    %c0_5 = arith.constant 0 : index
    %c0_6 = arith.constant 0 : index
    %5 = vector.load %arg3[%c0_5, %c0_6] : memref<24x56xf32, #tpu.memory_space<vmem>>, vector<24x56xf32>
    %cst = arith.constant dense<0.000000e+00> : vector<24x56xf32>
    %6 = tpu.matmul %4, %5, %cst {dimension_numbers = #tpu.dot_dimension_numbers<[1], [0], [0], [1], [0, 0, 1, 1], [], []>} : vector<24x24xf32>, vector<24x56xf32>, vector<24x56xf32> -> vector<24x56xf32>
    %7 = vector.extract_strided_slice %6 {offsets = [0, 0], sizes = [8, 8], strides = [1, 1]} : vector<24x56xf32> to vector<8x8xf32>
    %8 = vector.extract_strided_slice %6 {offsets = [0, 8], sizes = [8, 8], strides = [1, 1]} : vector<24x56xf32> to vector<8x8xf32>
    %9 = vector.extract_strided_slice %6 {offsets = [0, 16], sizes = [8, 8], strides = [1, 1]} : vector<24x56xf32> to vector<8x8xf32>
    %10 = vector.extract_strided_slice %6 {offsets = [0, 24], sizes = [8, 8], strides = [1, 1]} : vector<24x56xf32> to vector<8x8xf32>
    %11 = vector.extract_strided_slice %6 {offsets = [0, 32], sizes = [8, 8], strides = [1, 1]} : vector<24x56xf32> to vector<8x8xf32>
    %12 = vector.extract_strided_slice %6 {offsets = [0, 40], sizes = [8, 8], strides = [1, 1]} : vector<24x56xf32> to vector<8x8xf32>
    %13 = vector.extract_strided_slice %6 {offsets = [0, 48], sizes = [8, 8], strides = [1, 1]} : vector<24x56xf32> to vector<8x8xf32>
    %14 = tpu.concatenate %7, %8, %9, %10, %11, %12, %13 in 0 : vector<8x8xf32>, vector<8x8xf32>, vector<8x8xf32>, vector<8x8xf32>, vector<8x8xf32>, vector<8x8xf32>, vector<8x8xf32> -> vector<56x8xf32>
    %15 = vector.extract_strided_slice %6 {offsets = [0, 32], sizes = [8, 8], strides = [1, 1]} : vector<24x56xf32> to vector<8x8xf32>
    %16 = vector.extract_strided_slice %6 {offsets = [8, 32], sizes = [16, 8], strides = [1, 1]} : vector<24x56xf32> to vector<16x8xf32>
    %c0_7 = arith.constant 0 : index
    %c0_8 = arith.constant 0 : index
    %17 = vector.load %arg5[%c0_7, %c0_8] : memref<64x56xbf16, #tpu.memory_space<vmem>>, vector<64x56xbf16>
    %18 = arith.truncf %14 : vector<56x8xf32> to vector<56x8xbf16>
    %cst_9 = arith.constant dense<0.000000e+00> : vector<64x8xf32>
    %19 = tpu.matmul %17, %18, %cst_9 {dimension_numbers = #tpu.dot_dimension_numbers<[1], [0], [0], [1], [0, 0, 1, 1], [], []>} : vector<64x56xbf16>, vector<56x8xbf16>, vector<64x8xf32> -> vector<64x8xf32>
    %c0_10 = arith.constant 0 : index
    %c0_11 = arith.constant 0 : index
    %20 = vector.load %arg6[%c0_10, %c0_11] : memref<64x1xf32, #tpu.memory_space<vmem>>, vector<64x1xf32>
    %21 = vector.broadcast %20 : vector<64x1xf32> to vector<64x8xf32>
    %22 = arith.addf %19, %21 : vector<64x8xf32>
    %23 = vector.extract_strided_slice %22 {offsets = [0, 0], sizes = [32, 8], strides = [1, 1]} : vector<64x8xf32> to vector<32x8xf32>
    %24 = math.tanh %23 : vector<32x8xf32>
    %25 = vector.extract_strided_slice %22 {offsets = [32, 0], sizes = [32, 8], strides = [1, 1]} : vector<64x8xf32> to vector<32x8xf32>
    %26 = arith.negf %25 : vector<32x8xf32>
    %27 = math.exp %26 : vector<32x8xf32>
    %cst_12 = arith.constant 1.000000e+00 : f32
    %28 = vector.broadcast %cst_12 : f32 to vector<32x8xf32>
    %29 = arith.addf %28, %27 : vector<32x8xf32>
    %30 = arith.divf %28, %29 : vector<32x8xf32>
    %31 = arith.mulf %24, %30 : vector<32x8xf32>
    %c0_13 = arith.constant 0 : index
    %c0_14 = arith.constant 0 : index
    %32 = vector.load %arg7[%c0_13, %c0_14] : memref<16x8xbf16, #tpu.memory_space<vmem>>, vector<16x8xbf16>
    %33 = vector.extract_strided_slice %31 {offsets = [0, 0], sizes = [8, 8], strides = [1, 1]} : vector<32x8xf32> to vector<8x8xf32>
    %34 = arith.truncf %33 : vector<8x8xf32> to vector<8x8xbf16>
    %cst_15 = arith.constant dense<0.000000e+00> : vector<16x8xf32>
    %35 = tpu.matmul %32, %34, %cst_15 {dimension_numbers = #tpu.dot_dimension_numbers<[1], [0], [0], [1], [0, 0, 1, 1], [], []>} : vector<16x8xbf16>, vector<8x8xbf16>, vector<16x8xf32> -> vector<16x8xf32>
    %c0_16 = arith.constant 0 : index
    %c0_17 = arith.constant 0 : index
    %36 = vector.load %arg8[%c0_16, %c0_17] : memref<16x1xf32, #tpu.memory_space<vmem>>, vector<16x1xf32>
    %37 = vector.broadcast %36 : vector<16x1xf32> to vector<16x8xf32>
    %38 = arith.addf %35, %37 : vector<16x8xf32>
    %39 = arith.addf %38, %16 : vector<16x8xf32>
    %c0_18 = arith.constant 0 : index
    %c0_19 = arith.constant 0 : index
    %c0_20 = arith.constant 0 : index
    %40 = vector.load %arg13[%c0_18, %c0_19, %c0_20] : memref<1x16x8xf32, #tpu.memory_space<vmem>>, vector<1x16x8xf32>
    %41 = vector.shape_cast %40 : vector<1x16x8xf32> to vector<16x8xf32>
    %42 = vector.shape_cast %39 : vector<16x8xf32> to vector<1x16x8xf32>
    tpu.vector_store %arg13[%c0_18, %c0_19, %c0_20], %42 {strides = array<i32>} : memref<1x16x8xf32, #tpu.memory_space<vmem>>, vector<1x16x8xf32>,
    %c0_21 = arith.constant 0 : index
    %c0_22 = arith.constant 0 : index
    %43 = vector.load %arg4[%c0_21, %c0_22] : memref<8x16xf32, #tpu.memory_space<vmem>>, vector<8x16xf32>
    %cst_23 = arith.constant dense<0.000000e+00> : vector<32x16xf32>
    %44 = tpu.matmul %31, %43, %cst_23 {dimension_numbers = #tpu.dot_dimension_numbers<[1], [0], [0], [1], [0, 0, 1, 1], [], []>} : vector<32x8xf32>, vector<8x16xf32>, vector<32x16xf32> -> vector<32x16xf32>
    %45 = vector.extract_strided_slice %44 {offsets = [0, 0], sizes = [32, 8], strides = [1, 1]} : vector<32x16xf32> to vector<32x8xf32>
    %46 = vector.extract_strided_slice %44 {offsets = [0, 8], sizes = [32, 8], strides = [1, 1]} : vector<32x16xf32> to vector<32x8xf32>
    %47 = tpu.concatenate %31, %45, %46 in 0 : vector<32x8xf32>, vector<32x8xf32>, vector<32x8xf32> -> vector<96x8xf32>
    %c0_24 = arith.constant 0 : index
    %c0_25 = arith.constant 0 : index
    %48 = vector.load %arg9[%c0_24, %c0_25] : memref<8x96xbf16, #tpu.memory_space<vmem>>, vector<8x96xbf16>
    %49 = arith.truncf %47 : vector<96x8xf32> to vector<96x8xbf16>
    %cst_26 = arith.constant dense<0.000000e+00> : vector<8x8xf32>
    %50 = tpu.matmul %48, %49, %cst_26 {dimension_numbers = #tpu.dot_dimension_numbers<[1], [0], [0], [1], [0, 0, 1, 1], [], []>} : vector<8x96xbf16>, vector<96x8xbf16>, vector<8x8xf32> -> vector<8x8xf32>
    %51 = arith.addf %50, %15 : vector<8x8xf32>
    %c0_27 = arith.constant 0 : index
    %c0_28 = arith.constant 0 : index
    %52 = vector.load %arg10[%c0_27, %c0_28] : memref<8x1xf32, #tpu.memory_space<vmem>>, vector<8x1xf32>
    %53 = vector.broadcast %52 : vector<8x1xf32> to vector<8x8xf32>
    %54 = arith.mulf %51, %53 : vector<8x8xf32>
    %c0_29 = arith.constant 0 : index
    %c0_30 = arith.constant 0 : index
    %55 = vector.load %arg11[%c0_29, %c0_30] : memref<8x1xf32, #tpu.memory_space<vmem>>, vector<8x1xf32>
    %56 = vector.broadcast %55 : vector<8x1xf32> to vector<8x8xf32>
    %57 = arith.addf %54, %56 : vector<8x8xf32>
    %c0_31 = arith.constant 0 : index
    %c0_32 = arith.constant 0 : index
    %c0_33 = arith.constant 0 : index
    %58 = vector.load %arg12[%c0_31, %c0_32, %c0_33] : memref<1x8x8xf32, #tpu.memory_space<vmem>>, vector<1x8x8xf32>
    %59 = vector.shape_cast %58 : vector<1x8x8xf32> to vector<8x8xf32>
    %60 = vector.shape_cast %57 : vector<8x8xf32> to vector<1x8x8xf32>
    tpu.vector_store %arg12[%c0_31, %c0_32, %c0_33], %60 {strides = array<i32>} : memref<1x8x8xf32, #tpu.memory_space<vmem>>, vector<1x8x8xf32>,
    return
  }
  func.func @transform_0(%arg0: i32) -> (i32, i32, i32) {
    %c0_i32 = arith.constant 0 : i32
    %c0_i32_0 = arith.constant 0 : i32
    %c0_i32_1 = arith.constant 0 : i32
    return %arg0, %c0_i32, %c0_i32_0 : i32, i32, i32
  }
  func.func @transform_1(%arg0: i32) -> (i32, i32, i32) {
    %c0_i32 = arith.constant 0 : i32
    %c0_i32_0 = arith.constant 0 : i32
    %c0_i32_1 = arith.constant 0 : i32
    return %arg0, %c0_i32, %c0_i32_0 : i32, i32, i32
  }
  func.func @transform_2(%arg0: i32) -> (i32, i32) {
    %c0_i32 = arith.constant 0 : i32
    %c0_i32_0 = arith.constant 0 : i32
    %c0_i32_1 = arith.constant 0 : i32
    return %c0_i32, %c0_i32_0 : i32, i32
  }
  func.func @transform_3(%arg0: i32) -> (i32, i32) {
    %c0_i32 = arith.constant 0 : i32
    %c0_i32_0 = arith.constant 0 : i32
    %c0_i32_1 = arith.constant 0 : i32
    return %c0_i32, %c0_i32_0 : i32, i32
  }
  func.func @transform_4(%arg0: i32) -> (i32, i32) {
    %c0_i32 = arith.constant 0 : i32
    %c0_i32_0 = arith.constant 0 : i32
    %c0_i32_1 = arith.constant 0 : i32
    return %c0_i32, %c0_i32_0 : i32, i32
  }
  func.func @transform_5(%arg0: i32) -> (i32, i32) {
    %c0_i32 = arith.constant 0 : i32
    %c0_i32_0 = arith.constant 0 : i32
    %c0_i32_1 = arith.constant 0 : i32
    return %c0_i32, %c0_i32_0 : i32, i32
  }
  func.func @transform_6(%arg0: i32) -> (i32, i32) {
    %c0_i32 = arith.constant 0 : i32
    %c0_i32_0 = arith.constant 0 : i32
    %c0_i32_1 = arith.constant 0 : i32
    return %c0_i32, %c0_i32_0 : i32, i32
  }
  func.func @transform_7(%arg0: i32) -> (i32, i32) {
    %c0_i32 = arith.constant 0 : i32
    %c0_i32_0 = arith.constant 0 : i32
    %c0_i32_1 = arith.constant 0 : i32
    return %c0_i32, %c0_i32_0 : i32, i32
  }
  func.func @transform_8(%arg0: i32) -> (i32, i32) {
    %c0_i32 = arith.constant 0 : i32
    %c0_i32_0 = arith.constant 0 : i32
    %c0_i32_1 = arith.constant 0 : i32
    return %c0_i32, %c0_i32_0 : i32, i32
  }
  func.func @transform_9(%arg0: i32) -> (i32, i32) {
    %c0_i32 = arith.constant 0 : i32
    %c0_i32_0 = arith.constant 0 : i32
    %c0_i32_1 = arith.constant 0 : i32
    return %c0_i32, %c0_i32_0 : i32, i32
  }
  func.func @transform_10(%arg0: i32) -> (i32, i32) {
    %c0_i32 = arith.constant 0 : i32
    %c0_i32_0 = arith.constant 0 : i32
    %c0_i32_1 = arith.constant 0 : i32
    return %c0_i32, %c0_i32_0 : i32, i32
  }
  func.func @transform_11(%arg0: i32) -> (i32, i32, i32) {
    %c0_i32 = arith.constant 0 : i32
    %c0_i32_0 = arith.constant 0 : i32
    %c0_i32_1 = arith.constant 0 : i32
    return %arg0, %c0_i32, %c0_i32_0 : i32, i32, i32
  }
  func.func @transform_12(%arg0: i32) -> (i32, i32, i32) {
    %c0_i32 = arith.constant 0 : i32
    %c0_i32_0 = arith.constant 0 : i32
    %c0_i32_1 = arith.constant 0 : i32
    return %arg0, %c0_i32, %c0_i32_0 : i32, i32, i32
  }
}

module attributes {stable_mosaic.version = 11 : i64} {
  func.func @_head_kernel(%arg0: i32, %arg1: memref<1x16x8xf32, #tpu.memory_space<vmem>>, %arg2: memref<16x16xbf16, #tpu.memory_space<vmem>>, %arg3: memref<16x1xf32, #tpu.memory_space<vmem>>, %arg4: memref<6x16xbf16, #tpu.memory_space<vmem>>, %arg5: memref<6x1xf32, #tpu.memory_space<vmem>>, %arg6: memref<1x6x8xf32, #tpu.memory_space<vmem>>) attributes {dimension_semantics = [#tpu.dimension_semantics<parallel>], iteration_bounds = array<i64: 2>, scalar_prefetch = 0 : i64, scratch_operands = 0 : i64, tpu.core_type = #tpu.core_type<tc>, window_params = [{transform_indices = @transform_0, window_bounds = array<i64: 1, 16, 8>}, {pipeline_mode = #tpu.pipeline_mode<synchronous>, transform_indices = @transform_1, window_bounds = array<i64: 16, 16>}, {pipeline_mode = #tpu.pipeline_mode<synchronous>, transform_indices = @transform_2, window_bounds = array<i64: 16, 1>}, {pipeline_mode = #tpu.pipeline_mode<synchronous>, transform_indices = @transform_3, window_bounds = array<i64: 6, 16>}, {pipeline_mode = #tpu.pipeline_mode<synchronous>, transform_indices = @transform_4, window_bounds = array<i64: 6, 1>}, {transform_indices = @transform_5, window_bounds = array<i64: 1, 6, 8>}]} {
    %c0 = arith.constant 0 : index
    %c0_0 = arith.constant 0 : index
    %c0_1 = arith.constant 0 : index
    %0 = vector.load %arg1[%c0, %c0_0, %c0_1] : memref<1x16x8xf32, #tpu.memory_space<vmem>>, vector<1x16x8xf32>
    %1 = vector.shape_cast %0 : vector<1x16x8xf32> to vector<16x8xf32>
    %cst = arith.constant 0.000000e+00 : f32
    %2 = vector.broadcast %cst : f32 to vector<16x8xf32>
    %3 = arith.maximumf %1, %2 : vector<16x8xf32>
    %c0_2 = arith.constant 0 : index
    %c0_3 = arith.constant 0 : index
    %4 = vector.load %arg2[%c0_2, %c0_3] : memref<16x16xbf16, #tpu.memory_space<vmem>>, vector<16x16xbf16>
    %5 = arith.truncf %3 : vector<16x8xf32> to vector<16x8xbf16>
    %cst_4 = arith.constant dense<0.000000e+00> : vector<16x8xf32>
    %6 = tpu.matmul %4, %5, %cst_4 {dimension_numbers = #tpu.dot_dimension_numbers<[1], [0], [0], [1], [0, 0, 1, 1], [], []>} : vector<16x16xbf16>, vector<16x8xbf16>, vector<16x8xf32> -> vector<16x8xf32>
    %c0_5 = arith.constant 0 : index
    %c0_6 = arith.constant 0 : index
    %7 = vector.load %arg3[%c0_5, %c0_6] : memref<16x1xf32, #tpu.memory_space<vmem>>, vector<16x1xf32>
    %8 = vector.broadcast %7 : vector<16x1xf32> to vector<16x8xf32>
    %9 = arith.addf %6, %8 : vector<16x8xf32>
    %cst_7 = arith.constant 0.000000e+00 : f32
    %10 = vector.broadcast %cst_7 : f32 to vector<16x8xf32>
    %11 = arith.maximumf %9, %10 : vector<16x8xf32>
    %c0_8 = arith.constant 0 : index
    %c0_9 = arith.constant 0 : index
    %12 = vector.load %arg4[%c0_8, %c0_9] : memref<6x16xbf16, #tpu.memory_space<vmem>>, vector<6x16xbf16>
    %13 = arith.truncf %11 : vector<16x8xf32> to vector<16x8xbf16>
    %cst_10 = arith.constant dense<0.000000e+00> : vector<6x8xf32>
    %14 = tpu.matmul %12, %13, %cst_10 {dimension_numbers = #tpu.dot_dimension_numbers<[1], [0], [0], [1], [0, 0, 1, 1], [], []>} : vector<6x16xbf16>, vector<16x8xbf16>, vector<6x8xf32> -> vector<6x8xf32>
    %c0_11 = arith.constant 0 : index
    %c0_12 = arith.constant 0 : index
    %15 = vector.load %arg5[%c0_11, %c0_12] : memref<6x1xf32, #tpu.memory_space<vmem>>, vector<6x1xf32>
    %16 = vector.broadcast %15 : vector<6x1xf32> to vector<6x8xf32>
    %17 = arith.addf %14, %16 : vector<6x8xf32>
    %c0_13 = arith.constant 0 : index
    %c0_14 = arith.constant 0 : index
    %c0_15 = arith.constant 0 : index
    %18 = vector.load %arg6[%c0_13, %c0_14, %c0_15] : memref<1x6x8xf32, #tpu.memory_space<vmem>>, vector<1x6x8xf32>
    %19 = vector.shape_cast %18 : vector<1x6x8xf32> to vector<6x8xf32>
    %20 = vector.shape_cast %17 : vector<6x8xf32> to vector<1x6x8xf32>
    tpu.vector_store %arg6[%c0_13, %c0_14, %c0_15], %20 {strides = array<i32>} : memref<1x6x8xf32, #tpu.memory_space<vmem>>, vector<1x6x8xf32>,
    return
  }
  func.func @transform_0(%arg0: i32) -> (i32, i32, i32) {
    %c0_i32 = arith.constant 0 : i32
    %c0_i32_0 = arith.constant 0 : i32
    %c0_i32_1 = arith.constant 0 : i32
    return %arg0, %c0_i32, %c0_i32_0 : i32, i32, i32
  }
  func.func @transform_1(%arg0: i32) -> (i32, i32) {
    %c0_i32 = arith.constant 0 : i32
    %c0_i32_0 = arith.constant 0 : i32
    %c0_i32_1 = arith.constant 0 : i32
    return %c0_i32, %c0_i32_0 : i32, i32
  }
  func.func @transform_2(%arg0: i32) -> (i32, i32) {
    %c0_i32 = arith.constant 0 : i32
    %c0_i32_0 = arith.constant 0 : i32
    %c0_i32_1 = arith.constant 0 : i32
    return %c0_i32, %c0_i32_0 : i32, i32
  }
  func.func @transform_3(%arg0: i32) -> (i32, i32) {
    %c0_i32 = arith.constant 0 : i32
    %c0_i32_0 = arith.constant 0 : i32
    %c0_i32_1 = arith.constant 0 : i32
    return %c0_i32, %c0_i32_0 : i32, i32
  }
  func.func @transform_4(%arg0: i32) -> (i32, i32) {
    %c0_i32 = arith.constant 0 : i32
    %c0_i32_0 = arith.constant 0 : i32
    %c0_i32_1 = arith.constant 0 : i32
    return %c0_i32, %c0_i32_0 : i32, i32
  }
  func.func @transform_5(%arg0: i32) -> (i32, i32, i32) {
    %c0_i32 = arith.constant 0 : i32
    %c0_i32_0 = arith.constant 0 : i32
    %c0_i32_1 = arith.constant 0 : i32
    return %arg0, %c0_i32, %c0_i32_0 : i32, i32, i32
  }
}

</mosaic_0001>

<llo_original>
// kernel: predictor_forward.6
$region0: #{predictor_forward.6}
  #allocation0 [shape = 'u32[]', space=smem, size = 0x4, offset = 0x4, fixed_abs, tag = 'smem constant byte address 0x4 - core index']
  #allocation1 [shape = 'u32[144,128]{1,0:T(1,128)}', space=vmem, size = 0x12000, scoped, tag = 'internal scratch']
  %s0 = inlined_call_operand.vmem [shape: f32[2,4,56], index: 0, kind: input, shape index: {}]
  %s1 = inlined_call_operand.vmem [shape: bf16[8,4], index: 1, kind: input, shape index: {}]
  %s2 = inlined_call_operand.vmem [shape: f32[8,1], index: 2, kind: input, shape index: {}]
  %s3 = inlined_call_operand.vmem [shape: f32[2,8,56], index: 3, kind: output, shape index: {}]
  %s4 = sld [smem:[#allocation0]]
  $region45: #{predictor_forward.6} parent=0
    _
  %s6 = ssub.s32 1, %s4
  %s7 = scalar_select 0, %s6, %s4
  loop: start=0, step=1, limit=4
  $region2: #{predictor_forward.6} parent=0 // loop_pre_header
    _
  $region3: #{predictor_forward.6} parent=0 // loop_header
    %s9 = sphi 0, %s13
    %p10 = scmp.ge.s32.totalorder %s9, 4
    %s19 = sphi 0, %s21
    %s22 = sphi 0, %s19
    %s23 = sphi 0, %s22
    %s39 = sphi 0, %s23
    %s43 = sphi 0, %s43
    %s45 = sphi 0, %s43
    %s46 = sphi 0, %s45
    %s60 = sphi 0, %s46
    %s64 = sphi 0, %s64
    %s66 = sphi 0, %s64
    %s67 = sphi 0, %s66
    %s81 = sphi 0, %s67
    %s87 = sphi 0, %s89
    %s90 = sphi 0, %s87
    %s91 = sphi 0, %s90
    %s107 = sphi 0, %s91
  $region4: #{predictor_forward.6} parent=0 // loop_header_branch
    %12 = sbr.rel (%p10) target = $region8
  $region5: #{predictor_forward.6} parent=0 // loop_body
    %s14 = ssub.s32 %s9, 1
    %s15 = ssub.s32 %s9, 2
    %s16 = sadd.s32 %s9, 1
    %s17 = ssub.s32 %s9, %s16
    %p18 = scmp.eq.s32.totalorder %s17, 0
    %s20 = sadd.s32 %s19, 1
    %s21 = scalar_select %p18, %s19, %s20
    %p24 = pneg %p18
    %p25 = scmp.eq.s32.totalorder %s9, 1
    %p26 = por %p24, %p25
    %p27 = scmp.ne.s32.totalorder %s19, %s22
    %p28 = scmp.eq.s32.totalorder %s9, 0
    %p29 = por %p27, %p28
    %p30 = scmp.ne.s32.totalorder %s19, %s22
    %p31 = scmp.eq.s32.totalorder %s14, 1
    %p32 = por %p30, %p31
    %p33 = scmp.ne.s32.totalorder %s22, %s23
    %p34 = scmp.eq.s32.totalorder %s14, 0
    %p35 = por %p33, %p34
    %p36 = scmp.ne.s32.totalorder %s22, %s23
    %p37 = scmp.eq.s32.totalorder %s15, 1
    %p38 = por %p36, %p37
    %p40 = scmp.ne.s32.totalorder %s23, %s39
    %p41 = scmp.eq.s32.totalorder %s15, 0
    %p42 = por %p40, %p41
    %s44 = sadd.s32 %s43, 1
    %p47 = scmp.eq.s32.totalorder %s9, 1
    %p48 = scmp.ne.s32.totalorder %s43, %s45
    %p49 = scmp.eq.s32.totalorder %s9, 0
    %p50 = por %p48, %p49
    %p51 = scmp.ne.s32.totalorder %s43, %s45
    %p52 = scmp.eq.s32.totalorder %s14, 1
    %p53 = por %p51, %p52
    %p54 = scmp.ne.s32.totalorder %s45, %s46
    %p55 = scmp.eq.s32.totalorder %s14, 0
    %p56 = por %p54, %p55
    %p57 = scmp.ne.s32.totalorder %s45, %s46
    %p58 = scmp.eq.s32.totalorder %s15, 1
    %p59 = por %p57, %p58
    %p61 = scmp.ne.s32.totalorder %s46, %s60
    %p62 = scmp.eq.s32.totalorder %s15, 0
    %p63 = por %p61, %p62
    %s65 = sadd.s32 %s64, 1
    %p68 = scmp.eq.s32.totalorder %s9, 1
    %p69 = scmp.ne.s32.totalorder %s64, %s66
    %p70 = scmp.eq.s32.totalorder %s9, 0
    %p71 = por %p69, %p70
    %p72 = scmp.ne.s32.totalorder %s64, %s66
    %p73 = scmp.eq.s32.totalorder %s14, 1
    %p74 = por %p72, %p73
    %p75 = scmp.ne.s32.totalorder %s66, %s67
    %p76 = scmp.eq.s32.totalorder %s14, 0
    %p77 = por %p75, %p76
    %p78 = scmp.ne.s32.totalorder %s66, %s67
    %p79 = scmp.eq.s32.totalorder %s15, 1
    %p80 = por %p78, %p79
    %p82 = scmp.ne.s32.totalorder %s67, %s81
    %p83 = scmp.eq.s32.totalorder %s15, 0
    %p84 = por %p82, %p83
    %s85 = ssub.s32 %s9, %s16
    %p86 = scmp.eq.s32.totalorder %s85, 0
    %s88 = sadd.s32 %s87, 1
    %s89 = scalar_select %p86, %s87, %s88
    %p92 = pneg %p86
    %p93 = scmp.eq.s32.totalorder %s9, 1
    %p94 = por %p92, %p93
    %p95 = scmp.ne.s32.totalorder %s87, %s90
    %p96 = scmp.eq.s32.totalorder %s9, 0
    %p97 = por %p95, %p96
    %p98 = scmp.ne.s32.totalorder %s87, %s90
    %p99 = scmp.eq.s32.totalorder %s14, 1
    %p100 = por %p98, %p99
    %p101 = scmp.ne.s32.totalorder %s90, %s91
    %p102 = scmp.eq.s32.totalorder %s14, 0
    %p103 = por %p101, %p102
    %p104 = scmp.ne.s32.totalorder %s90, %s91
    %p105 = scmp.eq.s32.totalorder %s15, 1
    %p106 = por %p104, %p105
    %p108 = scmp.ne.s32.totalorder %s91, %s107
    %p109 = scmp.eq.s32.totalorder %s15, 0
    %p110 = por %p108, %p109
    %p111 = scmp.le.s32.totalorder 1, %s9
    %p112 = scmp.lt.s32.totalorder %s9, 3
    %p113 = pnand %p111, %p112
    %p114 = pneg %p113
    // Predicated region
    $region9: #{predictor_forward.6} parent=5 // pred_check
      _
    $region10: #{predictor_forward.6} parent=5 // pred_check_branch
      %116 = sbr.rel (%p113) target = $region12
    $region11: #{predictor_forward.6} parent=5 // pred_region
      %s117 = ssub.s32 %s9, 1
      // Predicated region
      $region13: #{predictor_forward.6} parent=11 // pred_check
        %p118 = pneg %p56
      $region14: #{predictor_forward.6} parent=11 // pred_check_branch
        %120 = sbr.rel (%p118) target = $region16
      $region15: #{predictor_forward.6} parent=11 // pred_region
        _
      $region16: #{predictor_forward.6} parent=11 // pred_fallthru
        _
      // Predicated region
      $region17: #{predictor_forward.6} parent=11 // pred_check
        %p121 = pneg %p77
      $region18: #{predictor_forward.6} parent=11 // pred_check_branch
        %123 = sbr.rel (%p121) target = $region20
      $region19: #{predictor_forward.6} parent=11 // pred_region
        _
      $region20: #{predictor_forward.6} parent=11 // pred_fallthru
        _
    $region12: #{predictor_forward.6} parent=5 // pred_fallthru
      _
    %p124 = scmp.lt.s32.totalorder %s9, 2
    // Predicated region
    $region21: #{predictor_forward.6} parent=5 // pred_check
      %p125 = pneg %p124
    $region22: #{predictor_forward.6} parent=5 // pred_check_branch
      %127 = sbr.rel (%p125) target = $region24
    $region23: #{predictor_forward.6} parent=5 // pred_region
      // Predicated region
      $region25: #{predictor_forward.6} parent=23 // pred_check
        %p128 = pneg %p29
      $region26: #{predictor_forward.6} parent=23 // pred_check_branch
        %130 = sbr.rel (%p128) target = $region28
      $region27: #{predictor_forward.6} parent=23 // pred_region
        %p131 = scmp.lt.s32.totalorder %s9, 1
        %s132 = scalar_select %p131, %s9, 1
        %s133 = smul.addr %s132, 4
        %s134 = scalar_lea.vmem %s0, %s133
      $region28: #{predictor_forward.6} parent=23 // pred_fallthru
        _
    $region24: #{predictor_forward.6} parent=5 // pred_fallthru
      _
    %p135 = scmp.le.s32.totalorder 1, %s9
    %p136 = scmp.lt.s32.totalorder %s9, 3
    %p137 = pnand %p135, %p136
    %p138 = pneg %p137
    // Predicated region
    $region29: #{predictor_forward.6} parent=5 // pred_check
      _
    $region30: #{predictor_forward.6} parent=5 // pred_check_branch
      %140 = sbr.rel (%p137) target = $region32
    $region31: #{predictor_forward.6} parent=5 // pred_region
      %s141 = ssub.s32 %s9, 1
      %p142 = scmp.lt.s32.totalorder %s14, 1
      %s143 = scalar_select %p142, %s14, 1
      %s144 = smul.addr %s143, 4
      %s145 = scalar_lea.vmem %s0, %s144
      %p146 = pneg %p35
      %p147 = pneg %p32
      %p148 = pneg %p56
      %p149 = pneg %p53
      %p150 = pneg %p77
      %p151 = pneg %p74
      %p152 = pneg %p103
      %p153 = pneg %p100
      %p154 = scmp.lt.s32.totalorder %s14, 1
      %s155 = scalar_select %p154, %s14, 1
      %s156 = smul.addr %s155, 8
      %s157 = scalar_lea.vmem %s3, %s156
      %p158 = scmp.lt.s32.totalorder %s14, 1
      %s159 = scalar_select %p158, %s14, 1
      %s160 = smul.addr %s159, 4
      %s161 = scalar_lea.vmem %s0, %s160
      %p162 = scmp.lt.s32.totalorder %s14, 1
      %s163 = scalar_select %p162, %s14, 1
      %s164 = smul.addr %s163, 8
      %s165 = scalar_lea.vmem %s3, %s164
      %v167 = vld [vmem:[%s1] sm:$0xf]
      %v168 = vld [vmem:[%s161] sm:$0xf]
      %v169 = vpack.c.bf16 %v168, %v168
      %v170 = vld [vmem:[%s2] sm:$0xff]
      %172 = vset.pattern.permute.xlu0 0
      %173 = vperm.xlu0 %172, %v170
      %v174 = vpop.permute.xlu0 %173
      %vm176 = vcmask 31744
      %v178 = vsel %vm176, %v167, 0
      %vm180 = vcmask 1041408
      %v182 = vsel %vm180, %v169, 0
      %184 = vmatprep.subr.bf16.mxu0 0
      %185 = vmatpush1.bf16.msra.mxu0 %v182
      %186 = vmatprep.subr.bf16.mxu0 0
      %187 = vmatpush1.bf16.msra.mxu0 0
      %188 = vmatprep.subr.bf16.mxu0 0
      %189 = vmatpush1.bf16.msra.mxu0 0
      %190 = vmatprep.subr.bf16.mxu0 0
      %191 = vmatpush1.bf16.msra.mxu0 0
      %192 = vmatprep.subr.bf16.mxu0 0
      %193 = vmatpush1.bf16.msra.mxu0 0
      %194 = vmatprep.subr.bf16.mxu0 0
      %195 = vmatpush1.bf16.msra.mxu0 0
      %196 = vmatprep.subr.bf16.mxu0 0
      %197 = vmatpush1.bf16.msra.mxu0 0
      %198 = vmatprep.subr.bf16.mxu0 0
      %199 = vmatpush1.bf16.msra.mxu0 0
      %200 = vmatprep.subr.bf16.mxu0 0
      %201 = vmatpush1.bf16.msra.mxu0 0
      %202 = vmatprep.subr.bf16.mxu0 0
      %203 = vmatpush1.bf16.msra.mxu0 0
      %204 = vmatprep.subr.bf16.mxu0 0
      %205 = vmatpush1.bf16.msra.mxu0 0
      %206 = vmatprep.subr.bf16.mxu0 0
      %207 = vmatpush1.bf16.msra.mxu0 0
      %208 = vmatprep.subr.bf16.mxu0 0
      %209 = vmatpush1.bf16.msra.mxu0 0
      %210 = vmatprep.subr.bf16.mxu0 0
      %211 = vmatpush1.bf16.msra.mxu0 0
      %212 = vmatprep.subr.bf16.mxu0 0
      %213 = vmatpush1.bf16.msra.mxu0 0
      %214 = vmatprep.subr.bf16.mxu0 0
      %215 = vmatpush1.bf16.msra.mxu0 0
      %216 = vmatprep.mubr.bf16.mxu0 0
      %217 = vmatmul.mubr.bf16.gmra.mrb[0].mxu0 %v178
      %v218 = vpop.f32.mrb[0].mxu0
      %v219 = vadd.f32 %v174, %v218
      %v220 = vpop.f32.mrb[0].mxu0
      %v221 = vpop.f32.mrb[0].mxu0
      %v222 = vpop.f32.mrb[0].mxu0
      %223 = vdwg.mxu0
      %vm224 = vcmask 457728
      %225 = vst.msk [vmem:[%s165] sm:$0xff] %vm224, %v219
      %p226 = scmp.lt.s32.totalorder %s14, 1
      %s227 = scalar_select %p226, %s14, 1
      %s228 = smul.addr %s227, 8
      %s229 = scalar_lea.vmem %s3, %s228
      // Predicated region
      $region33: #{predictor_forward.6} parent=31 // pred_check
        %p230 = pneg %p100
      $region34: #{predictor_forward.6} parent=31 // pred_check_branch
        %232 = sbr.rel (%p230) target = $region36
      $region35: #{predictor_forward.6} parent=31 // pred_region
        _
      $region36: #{predictor_forward.6} parent=31 // pred_fallthru
        _
    $region32: #{predictor_forward.6} parent=5 // pred_fallthru
      _
    %p233 = scmp.le.s32.totalorder 2, %s9
    // Predicated region
    $region37: #{predictor_forward.6} parent=5 // pred_check
      %p234 = pneg %p233
    $region38: #{predictor_forward.6} parent=5 // pred_check_branch
      %236 = sbr.rel (%p234) target = $region40
    $region39: #{predictor_forward.6} parent=5 // pred_region
      %s237 = ssub.s32 %s9, 2
      // Predicated region
      $region41: #{predictor_forward.6} parent=39 // pred_check
        %p238 = pneg %p106
      $region42: #{predictor_forward.6} parent=39 // pred_check_branch
        %240 = sbr.rel (%p238) target = $region44
      $region43: #{predictor_forward.6} parent=39 // pred_region
        %p241 = scmp.lt.s32.totalorder %s15, 1
        %s242 = scalar_select %p241, %s15, 1
        %s243 = smul.addr %s242, 8
        %s244 = scalar_lea.vmem %s3, %s243
      $region44: #{predictor_forward.6} parent=39 // pred_fallthru
        _
    $region40: #{predictor_forward.6} parent=5 // pred_fallthru
      _
  $region6: #{predictor_forward.6} parent=0 // loop_footer
    %s13 = sadd.s32 1, %s9
  $region7: #{predictor_forward.6} parent=0 // loop_footer_branch
    %8 = sbr.rel target = $region3
  $region8: #{predictor_forward.6} parent=0 // loop_exit
    _

// kernel: predictor_forward.7
$region0: #{predictor_forward.7}
  #allocation0 [shape = 'u32[]', space=smem, size = 0x4, offset = 0x4, fixed_abs, tag = 'smem constant byte address 0x4 - core index']
  #allocation1 [shape = 'u32[144,128]{1,0:T(1,128)}', space=vmem, size = 0x12000, scoped, tag = 'internal scratch']
  %s0 = inlined_call_operand.vmem [shape: f32[2,8,56], index: 0, kind: input, shape index: {}]
  %s1 = inlined_call_operand.vmem [shape: f32[2,16,56], index: 1, kind: input, shape index: {}]
  %s2 = inlined_call_operand.vmem [shape: f32[56,336], index: 2, kind: input, shape index: {}]
  %s3 = inlined_call_operand.vmem [shape: f32[48,96], index: 3, kind: input, shape index: {}]
  %s4 = inlined_call_operand.vmem [shape: bf16[64,56], index: 4, kind: input, shape index: {}]
  %s5 = inlined_call_operand.vmem [shape: f32[64,1], index: 5, kind: input, shape index: {}]
  %s6 = inlined_call_operand.vmem [shape: bf16[16,8], index: 6, kind: input, shape index: {}]
  %s7 = inlined_call_operand.vmem [shape: f32[16,1], index: 7, kind: input, shape index: {}]
  %s8 = inlined_call_operand.vmem [shape: bf16[8,96], index: 8, kind: input, shape index: {}]
  %s9 = inlined_call_operand.vmem [shape: f32[8,1], index: 9, kind: input, shape index: {}]
  %s10 = inlined_call_operand.vmem [shape: f32[8,1], index: 10, kind: input, shape index: {}]
  %s11 = inlined_call_operand.vmem [shape: f32[2,8,48], index: 11, kind: output, shape index: {0}]
  %s12 = inlined_call_operand.vmem [shape: f32[2,16,48], index: 12, kind: output, shape index: {1}]
  %13 = xla_tuple %s11, %s12
  %s14 = sld [smem:[#allocation0]]
  $region85: #{predictor_forward.7} parent=0
    _
  %s16 = ssub.s32 1, %s14
  %s17 = scalar_select 0, %s16, %s14
  loop: start=0, step=1, limit=4
  $region2: #{predictor_forward.7} parent=0 // loop_pre_header
    _
  $region3: #{predictor_forward.7} parent=0 // loop_header
    %s19 = sphi 0, %s23
    %p20 = scmp.ge.s32.totalorder %s19, 4
    %s29 = sphi 0, %s31
    %s32 = sphi 0, %s29
    %s33 = sphi 0, %s32
    %s49 = sphi 0, %s33
    %s55 = sphi 0, %s57
    %s58 = sphi 0, %s55
    %s59 = sphi 0, %s58
    %s75 = sphi 0, %s59
    %s79 = sphi 0, %s79
    %s81 = sphi 0, %s79
    %s82 = sphi 0, %s81
    %s96 = sphi 0, %s82
    %s100 = sphi 0, %s100
    %s102 = sphi 0, %s100
    %s103 = sphi 0, %s102
    %s117 = sphi 0, %s103
    %s121 = sphi 0, %s121
    %s123 = sphi 0, %s121
    %s124 = sphi 0, %s123
    %s138 = sphi 0, %s124
    %s142 = sphi 0, %s142
    %s144 = sphi 0, %s142
    %s145 = sphi 0, %s144
    %s159 = sphi 0, %s145
    %s163 = sphi 0, %s163
    %s165 = sphi 0, %s163
    %s166 = sphi 0, %s165
    %s180 = sphi 0, %s166
    %s184 = sphi 0, %s184
    %s186 = sphi 0, %s184
    %s187 = sphi 0, %s186
    %s201 = sphi 0, %s187
    %s205 = sphi 0, %s205
    %s207 = sphi 0, %s205
    %s208 = sphi 0, %s207
    %s222 = sphi 0, %s208
    %s226 = sphi 0, %s226
    %s228 = sphi 0, %s226
    %s229 = sphi 0, %s228
    %s243 = sphi 0, %s229
    %s247 = sphi 0, %s247
    %s249 = sphi 0, %s247
    %s250 = sphi 0, %s249
    %s264 = sphi 0, %s250
    %s270 = sphi 0, %s272
    %s273 = sphi 0, %s270
    %s274 = sphi 0, %s273
    %s290 = sphi 0, %s274
    %s296 = sphi 0, %s298
    %s299 = sphi 0, %s296
    %s300 = sphi 0, %s299
    %s316 = sphi 0, %s300
  $region4: #{predictor_forward.7} parent=0 // loop_header_branch
    %22 = sbr.rel (%p20) target = $region8
  $region5: #{predictor_forward.7} parent=0 // loop_body
    %s24 = ssub.s32 %s19, 1
    %s25 = ssub.s32 %s19, 2
    %s26 = sadd.s32 %s19, 1
    %s27 = ssub.s32 %s19, %s26
    %p28 = scmp.eq.s32.totalorder %s27, 0
    %s30 = sadd.s32 %s29, 1
    %s31 = scalar_select %p28, %s29, %s30
    %p34 = pneg %p28
    %p35 = scmp.eq.s32.totalorder %s19, 1
    %p36 = por %p34, %p35
    %p37 = scmp.ne.s32.totalorder %s29, %s32
    %p38 = scmp.eq.s32.totalorder %s19, 0
    %p39 = por %p37, %p38
    %p40 = scmp.ne.s32.totalorder %s29, %s32
    %p41 = scmp.eq.s32.totalorder %s24, 1
    %p42 = por %p40, %p41
    %p43 = scmp.ne.s32.totalorder %s32, %s33
    %p44 = scmp.eq.s32.totalorder %s24, 0
    %p45 = por %p43, %p44
    %p46 = scmp.ne.s32.totalorder %s32, %s33
    %p47 = scmp.eq.s32.totalorder %s25, 1
    %p48 = por %p46, %p47
    %p50 = scmp.ne.s32.totalorder %s33, %s49
    %p51 = scmp.eq.s32.totalorder %s25, 0
    %p52 = por %p50, %p51
    %s53 = ssub.s32 %s19, %s26
    %p54 = scmp.eq.s32.totalorder %s53, 0
    %s56 = sadd.s32 %s55, 1
    %s57 = scalar_select %p54, %s55, %s56
    %p60 = pneg %p54
    %p61 = scmp.eq.s32.totalorder %s19, 1
    %p62 = por %p60, %p61
    %p63 = scmp.ne.s32.totalorder %s55, %s58
    %p64 = scmp.eq.s32.totalorder %s19, 0
    %p65 = por %p63, %p64
    %p66 = scmp.ne.s32.totalorder %s55, %s58
    %p67 = scmp.eq.s32.totalorder %s24, 1
    %p68 = por %p66, %p67
    %p69 = scmp.ne.s32.totalorder %s58, %s59
    %p70 = scmp.eq.s32.totalorder %s24, 0
    %p71 = por %p69, %p70
    %p72 = scmp.ne.s32.totalorder %s58, %s59
    %p73 = scmp.eq.s32.totalorder %s25, 1
    %p74 = por %p72, %p73
    %p76 = scmp.ne.s32.totalorder %s59, %s75
    %p77 = scmp.eq.s32.totalorder %s25, 0
    %p78 = por %p76, %p77
    %s80 = sadd.s32 %s79, 1
    %p83 = scmp.eq.s32.totalorder %s19, 1
    %p84 = scmp.ne.s32.totalorder %s79, %s81
    %p85 = scmp.eq.s32.totalorder %s19, 0
    %p86 = por %p84, %p85
    %p87 = scmp.ne.s32.totalorder %s79, %s81
    %p88 = scmp.eq.s32.totalorder %s24, 1
    %p89 = por %p87, %p88
    %p90 = scmp.ne.s32.totalorder %s81, %s82
    %p91 = scmp.eq.s32.totalorder %s24, 0
    %p92 = por %p90, %p91
    %p93 = scmp.ne.s32.totalorder %s81, %s82
    %p94 = scmp.eq.s32.totalorder %s25, 1
    %p95 = por %p93, %p94
    %p97 = scmp.ne.s32.totalorder %s82, %s96
    %p98 = scmp.eq.s32.totalorder %s25, 0
    %p99 = por %p97, %p98
    %s101 = sadd.s32 %s100, 1
    %p104 = scmp.eq.s32.totalorder %s19, 1
    %p105 = scmp.ne.s32.totalorder %s100, %s102
    %p106 = scmp.eq.s32.totalorder %s19, 0
    %p107 = por %p105, %p106
    %p108 = scmp.ne.s32.totalorder %s100, %s102
    %p109 = scmp.eq.s32.totalorder %s24, 1
    %p110 = por %p108, %p109
    %p111 = scmp.ne.s32.totalorder %s102, %s103
    %p112 = scmp.eq.s32.totalorder %s24, 0
    %p113 = por %p111, %p112
    %p114 = scmp.ne.s32.totalorder %s102, %s103
    %p115 = scmp.eq.s32.totalorder %s25, 1
    %p116 = por %p114, %p115
    %p118 = scmp.ne.s32.totalorder %s103, %s117
    %p119 = scmp.eq.s32.totalorder %s25, 0
    %p120 = por %p118, %p119
    %s122 = sadd.s32 %s121, 1
    %p125 = scmp.eq.s32.totalorder %s19, 1
    %p126 = scmp.ne.s32.totalorder %s121, %s123
    %p127 = scmp.eq.s32.totalorder %s19, 0
    %p128 = por %p126, %p127
    %p129 = scmp.ne.s32.totalorder %s121, %s123
    %p130 = scmp.eq.s32.totalorder %s24, 1
    %p131 = por %p129, %p130
    %p132 = scmp.ne.s32.totalorder %s123, %s124
    %p133 = scmp.eq.s32.totalorder %s24, 0
    %p134 = por %p132, %p133
    %p135 = scmp.ne.s32.totalorder %s123, %s124
    %p136 = scmp.eq.s32.totalorder %s25, 1
    %p137 = por %p135, %p136
    %p139 = scmp.ne.s32.totalorder %s124, %s138
    %p140 = scmp.eq.s32.totalorder %s25, 0
    %p141 = por %p139, %p140
    %s143 = sadd.s32 %s142, 1
    %p146 = scmp.eq.s32.totalorder %s19, 1
    %p147 = scmp.ne.s32.totalorder %s142, %s144
    %p148 = scmp.eq.s32.totalorder %s19, 0
    %p149 = por %p147, %p148
    %p150 = scmp.ne.s32.totalorder %s142, %s144
    %p151 = scmp.eq.s32.totalorder %s24, 1
    %p152 = por %p150, %p151
    %p153 = scmp.ne.s32.totalorder %s144, %s145
    %p154 = scmp.eq.s32.totalorder %s24, 0
    %p155 = por %p153, %p154
    %p156 = scmp.ne.s32.totalorder %s144, %s145
    %p157 = scmp.eq.s32.totalorder %s25, 1
    %p158 = por %p156, %p157
    %p160 = scmp.ne.s32.totalorder %s145, %s159
    %p161 = scmp.eq.s32.totalorder %s25, 0
    %p162 = por %p160, %p161
    %s164 = sadd.s32 %s163, 1
    %p167 = scmp.eq.s32.totalorder %s19, 1
    %p168 = scmp.ne.s32.totalorder %s163, %s165
    %p169 = scmp.eq.s32.totalorder %s19, 0
    %p170 = por %p168, %p169
    %p171 = scmp.ne.s32.totalorder %s163, %s165
    %p172 = scmp.eq.s32.totalorder %s24, 1
    %p173 = por %p171, %p172
    %p174 = scmp.ne.s32.totalorder %s165, %s166
    %p175 = scmp.eq.s32.totalorder %s24, 0
    %p176 = por %p174, %p175
    %p177 = scmp.ne.s32.totalorder %s165, %s166
    %p178 = scmp.eq.s32.totalorder %s25, 1
    %p179 = por %p177, %p178
    %p181 = scmp.ne.s32.totalorder %s166, %s180
    %p182 = scmp.eq.s32.totalorder %s25, 0
    %p183 = por %p181, %p182
    %s185 = sadd.s32 %s184, 1
    %p188 = scmp.eq.s32.totalorder %s19, 1
    %p189 = scmp.ne.s32.totalorder %s184, %s186
    %p190 = scmp.eq.s32.totalorder %s19, 0
    %p191 = por %p189, %p190
    %p192 = scmp.ne.s32.totalorder %s184, %s186
    %p193 = scmp.eq.s32.totalorder %s24, 1
    %p194 = por %p192, %p193
    %p195 = scmp.ne.s32.totalorder %s186, %s187
    %p196 = scmp.eq.s32.totalorder %s24, 0
    %p197 = por %p195, %p196
    %p198 = scmp.ne.s32.totalorder %s186, %s187
    %p199 = scmp.eq.s32.totalorder %s25, 1
    %p200 = por %p198, %p199
    %p202 = scmp.ne.s32.totalorder %s187, %s201
    %p203 = scmp.eq.s32.totalorder %s25, 0
    %p204 = por %p202, %p203
    %s206 = sadd.s32 %s205, 1
    %p209 = scmp.eq.s32.totalorder %s19, 1
    %p210 = scmp.ne.s32.totalorder %s205, %s207
    %p211 = scmp.eq.s32.totalorder %s19, 0
    %p212 = por %p210, %p211
    %p213 = scmp.ne.s32.totalorder %s205, %s207
    %p214 = scmp.eq.s32.totalorder %s24, 1
    %p215 = por %p213, %p214
    %p216 = scmp.ne.s32.totalorder %s207, %s208
    %p217 = scmp.eq.s32.totalorder %s24, 0
    %p218 = por %p216, %p217
    %p219 = scmp.ne.s32.totalorder %s207, %s208
    %p220 = scmp.eq.s32.totalorder %s25, 1
    %p221 = por %p219, %p220
    %p223 = scmp.ne.s32.totalorder %s208, %s222
    %p224 = scmp.eq.s32.totalorder %s25, 0
    %p225 = por %p223, %p224
    %s227 = sadd.s32 %s226, 1
    %p230 = scmp.eq.s32.totalorder %s19, 1
    %p231 = scmp.ne.s32.totalorder %s226, %s228
    %p232 = scmp.eq.s32.totalorder %s19, 0
    %p233 = por %p231, %p232
    %p234 = scmp.ne.s32.totalorder %s226, %s228
    %p235 = scmp.eq.s32.totalorder %s24, 1
    %p236 = por %p234, %p235
    %p237 = scmp.ne.s32.totalorder %s228, %s229
    %p238 = scmp.eq.s32.totalorder %s24, 0
    %p239 = por %p237, %p238
    %p240 = scmp.ne.s32.totalorder %s228, %s229
    %p241 = scmp.eq.s32.totalorder %s25, 1
    %p242 = por %p240, %p241
    %p244 = scmp.ne.s32.totalorder %s229, %s243
    %p245 = scmp.eq.s32.totalorder %s25, 0
    %p246 = por %p244, %p245
    %s248 = sadd.s32 %s247, 1
    %p251 = scmp.eq.s32.totalorder %s19, 1
    %p252 = scmp.ne.s32.totalorder %s247, %s249
    %p253 = scmp.eq.s32.totalorder %s19, 0
    %p254 = por %p252, %p253
    %p255 = scmp.ne.s32.totalorder %s247, %s249
    %p256 = scmp.eq.s32.totalorder %s24, 1
    %p257 = por %p255, %p256
    %p258 = scmp.ne.s32.totalorder %s249, %s250
    %p259 = scmp.eq.s32.totalorder %s24, 0
    %p260 = por %p258, %p259
    %p261 = scmp.ne.s32.totalorder %s249, %s250
    %p262 = scmp.eq.s32.totalorder %s25, 1
    %p263 = por %p261, %p262
    %p265 = scmp.ne.s32.totalorder %s250, %s264
    %p266 = scmp.eq.s32.totalorder %s25, 0
    %p267 = por %p265, %p266
    %s268 = ssub.s32 %s19, %s26
    %p269 = scmp.eq.s32.totalorder %s268, 0
    %s271 = sadd.s32 %s270, 1
    %s272 = scalar_select %p269, %s270, %s271
    %p275 = pneg %p269
    %p276 = scmp.eq.s32.totalorder %s19, 1
    %p277 = por %p275, %p276
    %p278 = scmp.ne.s32.totalorder %s270, %s273
    %p279 = scmp.eq.s32.totalorder %s19, 0
    %p280 = por %p278, %p279
    %p281 = scmp.ne.s32.totalorder %s270, %s273
    %p282 = scmp.eq.s32.totalorder %s24, 1
    %p283 = por %p281, %p282
    %p284 = scmp.ne.s32.totalorder %s273, %s274
    %p285 = scmp.eq.s32.totalorder %s24, 0
    %p286 = por %p284, %p285
    %p287 = scmp.ne.s32.totalorder %s273, %s274
    %p288 = scmp.eq.s32.totalorder %s25, 1
    %p289 = por %p287, %p288
    %p291 = scmp.ne.s32.totalorder %s274, %s290
    %p292 = scmp.eq.s32.totalorder %s25, 0
    %p293 = por %p291, %p292
    %s294 = ssub.s32 %s19, %s26
    %p295 = scmp.eq.s32.totalorder %s294, 0
    %s297 = sadd.s32 %s296, 1
    %s298 = scalar_select %p295, %s296, %s297
    %p301 = pneg %p295
    %p302 = scmp.eq.s32.totalorder %s19, 1
    %p303 = por %p301, %p302
    %p304 = scmp.ne.s32.totalorder %s296, %s299
    %p305 = scmp.eq.s32.totalorder %s19, 0
    %p306 = por %p304, %p305
    %p307 = scmp.ne.s32.totalorder %s296, %s299
    %p308 = scmp.eq.s32.totalorder %s24, 1
    %p309 = por %p307, %p308
    %p310 = scmp.ne.s32.totalorder %s299, %s300
    %p311 = scmp.eq.s32.totalorder %s24, 0
    %p312 = por %p310, %p311
    %p313 = scmp.ne.s32.totalorder %s299, %s300
    %p314 = scmp.eq.s32.totalorder %s25, 1
    %p315 = por %p313, %p314
    %p317 = scmp.ne.s32.totalorder %s300, %s316
    %p318 = scmp.eq.s32.totalorder %s25, 0
    %p319 = por %p317, %p318
    %p320 = scmp.le.s32.totalorder 1, %s19
    %p321 = scmp.lt.s32.totalorder %s19, 3
    %p322 = pnand %p320, %p321
    %p323 = pneg %p322
    // Predicated region
    $region9: #{predictor_forward.7} parent=5 // pred_check
      _
    $region10: #{predictor_forward.7} parent=5 // pred_check_branch
      %325 = sbr.rel (%p322) target = $region12
    $region11: #{predictor_forward.7} parent=5 // pred_region
      %s326 = ssub.s32 %s19, 1
      // Predicated region
      $region13: #{predictor_forward.7} parent=11 // pred_check
        %p327 = pneg %p92
      $region14: #{predictor_forward.7} parent=11 // pred_check_branch
        %329 = sbr.rel (%p327) target = $region16
      $region15: #{predictor_forward.7} parent=11 // pred_region
        _
      $region16: #{predictor_forward.7} parent=11 // pred_fallthru
        _
      // Predicated region
      $region17: #{predictor_forward.7} parent=11 // pred_check
        %p330 = pneg %p113
      $region18: #{predictor_forward.7} parent=11 // pred_check_branch
        %332 = sbr.rel (%p330) target = $region20
      $region19: #{predictor_forward.7} parent=11 // pred_region
        _
      $region20: #{predictor_forward.7} parent=11 // pred_fallthru
        _
      // Predicated region
      $region21: #{predictor_forward.7} parent=11 // pred_check
        %p333 = pneg %p134
      $region22: #{predictor_forward.7} parent=11 // pred_check_branch
        %335 = sbr.rel (%p333) target = $region24
      $region23: #{predictor_forward.7} parent=11 // pred_region
        _
      $region24: #{predictor_forward.7} parent=11 // pred_fallthru
        _
      // Predicated region
      $region25: #{predictor_forward.7} parent=11 // pred_check
        %p336 = pneg %p155
      $region26: #{predictor_forward.7} parent=11 // pred_check_branch
        %338 = sbr.rel (%p336) target = $region28
      $region27: #{predictor_forward.7} parent=11 // pred_region
        _
      $region28: #{predictor_forward.7} parent=11 // pred_fallthru
        _
      // Predicated region
      $region29: #{predictor_forward.7} parent=11 // pred_check
        %p339 = pneg %p176
      $region30: #{predictor_forward.7} parent=11 // pred_check_branch
        %341 = sbr.rel (%p339) target = $region32
      $region31: #{predictor_forward.7} parent=11 // pred_region
        _
      $region32: #{predictor_forward.7} parent=11 // pred_fallthru
        _
      // Predicated region
      $region33: #{predictor_forward.7} parent=11 // pred_check
        %p342 = pneg %p197
      $region34: #{predictor_forward.7} parent=11 // pred_check_branch
        %344 = sbr.rel (%p342) target = $region36
      $region35: #{predictor_forward.7} parent=11 // pred_region
        _
      $region36: #{predictor_forward.7} parent=11 // pred_fallthru
        _
      // Predicated region
      $region37: #{predictor_forward.7} parent=11 // pred_check
        %p345 = pneg %p218
      $region38: #{predictor_forward.7} parent=11 // pred_check_branch
        %347 = sbr.rel (%p345) target = $region40
      $region39: #{predictor_forward.7} parent=11 // pred_region
        _
      $region40: #{predictor_forward.7} parent=11 // pred_fallthru
        _
      // Predicated region
      $region41: #{predictor_forward.7} parent=11 // pred_check
        %p348 = pneg %p239
      $region42: #{predictor_forward.7} parent=11 // pred_check_branch
        %350 = sbr.rel (%p348) target = $region44
      $region43: #{predictor_forward.7} parent=11 // pred_region
        _
      $region44: #{predictor_forward.7} parent=11 // pred_fallthru
        _
      // Predicated region
      $region45: #{predictor_forward.7} parent=11 // pred_check
        %p351 = pneg %p260
      $region46: #{predictor_forward.7} parent=11 // pred_check_branch
        %353 = sbr.rel (%p351) target = $region48
      $region47: #{predictor_forward.7} parent=11 // pred_region
        _
      $region48: #{predictor_forward.7} parent=11 // pred_fallthru
        _
    $region12: #{predictor_forward.7} parent=5 // pred_fallthru
      _
    %p354 = scmp.lt.s32.totalorder %s19, 2
    // Predicated region
    $region49: #{predictor_forward.7} parent=5 // pred_check
      %p355 = pneg %p354
    $region50: #{predictor_forward.7} parent=5 // pred_check_branch
      %357 = sbr.rel (%p355) target = $region52
    $region51: #{predictor_forward.7} parent=5 // pred_region
      // Predicated region
      $region53: #{predictor_forward.7} parent=51 // pred_check
        %p358 = pneg %p39
      $region54: #{predictor_forward.7} parent=51 // pred_check_branch
        %360 = sbr.rel (%p358) target = $region56
      $region55: #{predictor_forward.7} parent=51 // pred_region
        %p361 = scmp.lt.s32.totalorder %s19, 1
        %s362 = scalar_select %p361, %s19, 1
        %s363 = smul.addr %s362, 8
        %s364 = scalar_lea.vmem %s0, %s363
      $region56: #{predictor_forward.7} parent=51 // pred_fallthru
        _
      // Predicated region
      $region57: #{predictor_forward.7} parent=51 // pred_check
        %p365 = pneg %p65
      $region58: #{predictor_forward.7} parent=51 // pred_check_branch
        %367 = sbr.rel (%p365) target = $region60
      $region59: #{predictor_forward.7} parent=51 // pred_region
        %p368 = scmp.lt.s32.totalorder %s19, 1
        %s369 = scalar_select %p368, %s19, 1
        %s370 = smul.addr %s369, 2
        %s371 = smul.addr %s370, 8
        %s372 = scalar_lea.vmem %s1, %s371
      $region60: #{predictor_forward.7} parent=51 // pred_fallthru
        _
    $region52: #{predictor_forward.7} parent=5 // pred_fallthru
      _
    %p373 = scmp.le.s32.totalorder 1, %s19
    %p374 = scmp.lt.s32.totalorder %s19, 3
    %p375 = pnand %p373, %p374
    %p376 = pneg %p375
    // Predicated region
    $region61: #{predictor_forward.7} parent=5 // pred_check
      _
    $region62: #{predictor_forward.7} parent=5 // pred_check_branch
      %378 = sbr.rel (%p375) target = $region64
    $region63: #{predictor_forward.7} parent=5 // pred_region
      %s379 = ssub.s32 %s19, 1
      %p380 = scmp.lt.s32.totalorder %s24, 1
      %s381 = scalar_select %p380, %s24, 1
      %s382 = smul.addr %s381, 8
      %s383 = scalar_lea.vmem %s0, %s382
      %p384 = pneg %p45
      %p385 = pneg %p42
      %p386 = scmp.lt.s32.totalorder %s24, 1
      %s387 = scalar_select %p386, %s24, 1
      %s388 = smul.addr %s387, 2
      %s389 = smul.addr %s388, 8
      %s390 = scalar_lea.vmem %s1, %s389
      %p391 = pneg %p71
      %p392 = pneg %p68
      %p393 = pneg %p92
      %p394 = pneg %p89
      %p395 = pneg %p113
      %p396 = pneg %p110
      %p397 = pneg %p134
      %p398 = pneg %p131
      %p399 = pneg %p155
      %p400 = pneg %p152
      %p401 = pneg %p176
      %p402 = pneg %p173
      %p403 = pneg %p197
      %p404 = pneg %p194
      %p405 = pneg %p218
      %p406 = pneg %p215
      %p407 = pneg %p239
      %p408 = pneg %p236
      %p409 = pneg %p260
      %p410 = pneg %p257
      %p411 = pneg %p286
      %p412 = pneg %p283
      %p413 = scmp.lt.s32.totalorder %s24, 1
      %s414 = scalar_select %p413, %s24, 1
      %s415 = smul.addr %s414, 8
      %s416 = scalar_lea.vmem %s11, %s415
      %p417 = pneg %p312
      %p418 = pneg %p309
      %p419 = scmp.lt.s32.totalorder %s24, 1
      %s420 = scalar_select %p419, %s24, 1
      %s421 = smul.addr %s420, 2
      %s422 = smul.addr %s421, 8
      %s423 = scalar_lea.vmem %s12, %s422
      %p424 = scmp.lt.s32.totalorder %s24, 1
      %s425 = scalar_select %p424, %s24, 1
      %s426 = smul.addr %s425, 8
      %s427 = scalar_lea.vmem %s0, %s426
      %p428 = scmp.lt.s32.totalorder %s24, 1
      %s429 = scalar_select %p428, %s24, 1
      %s430 = smul.addr %s429, 2
      %s431 = smul.addr %s430, 8
      %s432 = scalar_lea.vmem %s1, %s431
      %p433 = scmp.lt.s32.totalorder %s24, 1
      %s434 = scalar_select %p433, %s24, 1
      %s435 = smul.addr %s434, 8
      %s436 = scalar_lea.vmem %s11, %s435
      %p437 = scmp.lt.s32.totalorder %s24, 1
      %s438 = scalar_select %p437, %s24, 1
      %s439 = smul.addr %s438, 2
      %s440 = smul.addr %s439, 8
      %s441 = scalar_lea.vmem %s12, %s440
      %v443 = vld [vmem:[%s427] sm:$0xff]
      %v444 = vld [vmem:[%s432] sm:$0xff]
      %v445 = vld [vmem:[%s432 + $0x8] sm:$0xff]
      %v446 = vld [vmem:[%s2] sm:$0xff]
      %v447 = vld [vmem:[%s2 + $0x8] sm:$0xff]
      %v448 = vld [vmem:[%s2 + $0x10] sm:$0xff]
      %v449 = vld [vmem:[%s2 + $0x18] sm:$0xff]
      %v450 = vld [vmem:[%s2 + $0x20] sm:$0xff]
      %v451 = vld [vmem:[%s2 + $0x28] sm:$0xff]
      %v452 = vld [vmem:[%s2 + $0x30] sm:$0xff]
      %v453 = vld [vmem:[%s2 + $0x38] sm:$0xff]
      %v454 = vld [vmem:[%s2 + $0x40] sm:$0xff]
      %v455 = vld [vmem:[%s2 + $0x48] sm:$0xff]
      %v456 = vld [vmem:[%s2 + $0x50] sm:$0xff]
      %v457 = vld [vmem:[%s2 + $0x58] sm:$0xff]
      %v458 = vld [vmem:[%s2 + $0x60] sm:$0xff]
      %v459 = vld [vmem:[%s2 + $0x68] sm:$0xff]
      %v460 = vld [vmem:[%s2 + $0x70] sm:$0xff]
      %v461 = vld [vmem:[%s2 + $0x78] sm:$0xff]
      %v462 = vld [vmem:[%s2 + $0x80] sm:$0xff]
      %v463 = vld [vmem:[%s2 + $0x88] sm:$0xff]
      %v464 = vld [vmem:[%s2 + $0x90] sm:$0xff]
      %v465 = vld [vmem:[%s2 + $0x98] sm:$0xff]
      %v466 = vld [vmem:[%s2 + $0xa0] sm:$0xff]
      %vm467 = vcmask 457728
      %v469 = vsel %vm467, %v443, 0
      %v472 = vsel %vm467, %v444, 0
      %v475 = vsel %vm467, %v445, 0
      %477 = vmatprep.subr.mxu0 %v447
      %478 = vmatpush1.msra.mxu0 %v446
      %479 = vmatprep.subr.mxu0 %v450
      %480 = vmatpush1.msra.mxu0 %v449
      %481 = vmatprep.subr.mxu0 %v453
      %482 = vmatpush1.msra.mxu0 %v452
      %483 = vmatprep.subr.mxu0 %v456
      %484 = vmatpush1.msra.mxu0 %v455
      %485 = vmatprep.subr.mxu0 %v459
      %486 = vmatpush1.msra.mxu0 %v458
      %487 = vmatprep.subr.mxu0 %v462
      %488 = vmatpush1.msra.mxu0 %v461
      %489 = vmatprep.subr.mxu0 %v465
      %490 = vmatpush1.msra.mxu0 %v464
      %491 = vmatprep.subr.mxu0 0.0
      %492 = vmatpush1.msra.mxu0 0.0
      %493 = vmatprep.subr.mxu0 0.0
      %494 = vmatpush1.msra.mxu0 0.0
      %495 = vmatprep.subr.mxu0 0.0
      %496 = vmatpush1.msra.mxu0 0.0
      %497 = vmatprep.subr.mxu0 0.0
      %498 = vmatpush1.msra.mxu0 0.0
      %499 = vmatprep.subr.mxu0 0.0
      %500 = vmatpush1.msra.mxu0 0.0
      %501 = vmatprep.subr.mxu0 0.0
      %502 = vmatpush1.msra.mxu0 0.0
      %503 = vmatprep.subr.mxu0 0.0
      %504 = vmatpush1.msra.mxu0 0.0
      %505 = vmatprep.subr.mxu0 0.0
      %506 = vmatpush1.msra.mxu0 0.0
      %507 = vmatprep.subr.mxu0 0.0
      %508 = vmatpush1.msra.mxu0 0.0
      %509 = vmatprep.subr.mxu0 0.0
      %510 = vmatpush1.msra.mxu0 0.0
      %511 = vmatprep.subr.mxu0 0.0
      %512 = vmatpush1.msra.mxu0 0.0
      %513 = vmatprep.subr.mxu0 0.0
      %514 = vmatpush1.msra.mxu0 0.0
      %515 = vmatprep.subr.mxu0 0.0
      %516 = vmatpush1.msra.mxu0 0.0
      %517 = vmatprep.subr.mxu0 0.0
      %518 = vmatpush1.msra.mxu0 0.0
      %519 = vmatprep.subr.mxu0 0.0
      %520 = vmatpush1.msra.mxu0 0.0
      %521 = vmatprep.subr.mxu0 0.0
      %522 = vmatpush1.msra.mxu0 0.0
      %523 = vmatprep.subr.mxu0 0.0
      %524 = vmatpush1.msra.mxu0 0.0
      %525 = vmatprep.subr.mxu0 0.0
      %526 = vmatpush1.msra.mxu0 0.0
      %527 = vmatprep.subr.mxu0 0.0
      %528 = vmatpush1.msra.mxu0 0.0
      %529 = vmatprep.subr.mxu0 0.0
      %530 = vmatpush1.msra.mxu0 0.0
      %531 = vmatprep.subr.mxu0 0.0
      %532 = vmatpush1.msra.mxu0 0.0
      %533 = vmatprep.subr.mxu0 0.0
      %534 = vmatpush1.msra.mxu0 0.0
      %535 = vmatprep.subr.mxu0 0.0
      %536 = vmatpush1.msra.mxu0 0.0
      %537 = vmatprep.subr.mxu0 0.0
      %538 = vmatpush1.msra.mxu0 0.0
      %539 = vmatprep.subr.mxu0 0.0
      %540 = vmatpush1.msra.mxu0 0.0
      %541 = vmatprep.mubr.f32.mxu0 0.0
      %542 = vmatmul.mubr.f32.gmra.mrb[0].mxu0 %v469
      %v543 = vpop.f32.mrb[0].mxu0
      %v544 = vadd.f32 0.0, %v543
      %v545 = vpop.f32.mrb[0].mxu0
      %v546 = vadd.f32 0.0, %v545
      %547 = vmatprep.mubr.f32.mxu0 0.0
      %548 = vmatmul.mubr.f32.gmra.mrb[0].mxu0 %v472
      %v549 = vpop.f32.mrb[0].mxu0
      %v550 = vpop.f32.mrb[0].mxu0
      %v551 = vadd.f32 0.0, %v550
      %552 = vmatprep.mubr.f32.mxu0 0.0
      %553 = vmatmul.mubr.f32.gmra.mrb[0].mxu0 %v475
      %v554 = vpop.f32.mrb[0].mxu0
      %v555 = vpop.f32.mrb[0].mxu0
      %v556 = vadd.f32 0.0, %v555
      %557 = vdwg.mxu0
      %558 = vmatprep.subr.mxu0 0.0
      %559 = vmatpush1.msra.mxu0 %v448
      %560 = vmatprep.subr.mxu0 0.0
      %561 = vmatpush1.msra.mxu0 %v451
      %562 = vmatprep.subr.mxu0 0.0
      %563 = vmatpush1.msra.mxu0 %v454
      %564 = vmatprep.subr.mxu0 0.0
      %565 = vmatpush1.msra.mxu0 %v457
      %566 = vmatprep.subr.mxu0 0.0
      %567 = vmatpush1.msra.mxu0 %v460
      %568 = vmatprep.subr.mxu0 0.0
      %569 = vmatpush1.msra.mxu0 %v463
      %570 = vmatprep.subr.mxu0 0.0
      %571 = vmatpush1.msra.mxu0 %v466
      %572 = vmatprep.subr.mxu0 0.0
      %573 = vmatpush1.msra.mxu0 0.0
      %574 = vmatprep.subr.mxu0 0.0
      %575 = vmatpush1.msra.mxu0 0.0
      %576 = vmatprep.subr.mxu0 0.0
      %577 = vmatpush1.msra.mxu0 0.0
      %578 = vmatprep.subr.mxu0 0.0
      %579 = vmatpush1.msra.mxu0 0.0
      %580 = vmatprep.subr.mxu0 0.0
      %581 = vmatpush1.msra.mxu0 0.0
      %582 = vmatprep.subr.mxu0 0.0
      %583 = vmatpush1.msra.mxu0 0.0
      %584 = vmatprep.subr.mxu0 0.0
      %585 = vmatpush1.msra.mxu0 0.0
      %586 = vmatprep.subr.mxu0 0.0
      %587 = vmatpush1.msra.mxu0 0.0
      %588 = vmatprep.subr.mxu0 0.0
      %589 = vmatpush1.msra.mxu0 0.0
      %590 = vmatprep.subr.mxu0 0.0
      %591 = vmatpush1.msra.mxu0 0.0
      %592 = vmatprep.subr.mxu0 0.0
      %593 = vmatpush1.msra.mxu0 0.0
      %594 = vmatprep.subr.mxu0 0.0
      %595 = vmatpush1.msra.mxu0 0.0
      %596 = vmatprep.subr.mxu0 0.0
      %597 = vmatpush1.msra.mxu0 0.0
      %598 = vmatprep.subr.mxu0 0.0
      %599 = vmatpush1.msra.mxu0 0.0
      %600 = vmatprep.subr.mxu0 0.0
      %601 = vmatpush1.msra.mxu0 0.0
      %602 = vmatprep.subr.mxu0 0.0
      %603 = vmatpush1.msra.mxu0 0.0
      %604 = vmatprep.subr.mxu0 0.0
      %605 = vmatpush1.msra.mxu0 0.0
      %606 = vmatprep.subr.mxu0 0.0
      %607 = vmatpush1.msra.mxu0 0.0
      %608 = vmatprep.subr.mxu0 0.0
      %609 = vmatpush1.msra.mxu0 0.0
      %610 = vmatprep.subr.mxu0 0.0
      %611 = vmatpush1.msra.mxu0 0.0
      %612 = vmatprep.subr.mxu0 0.0
      %613 = vmatpush1.msra.mxu0 0.0
      %614 = vmatprep.subr.mxu0 0.0
      %615 = vmatpush1.msra.mxu0 0.0
      %616 = vmatprep.subr.mxu0 0.0
      %617 = vmatpush1.msra.mxu0 0.0
      %618 = vmatprep.subr.mxu0 0.0
      %619 = vmatpush1.msra.mxu0 0.0
      %620 = vmatprep.subr.mxu0 0.0
      %621 = vmatpush1.msra.mxu0 0.0
      %622 = vmatprep.mubr.f32.mxu0 0.0
      %623 = vmatmul.mubr.f32.gmra.mrb[0].mxu0 %v469
      %v624 = vpop.f32.mrb[0].mxu0
      %v625 = vadd.f32 0.0, %v624
      %v626 = vpop.f32.mrb[0].mxu0
      %627 = vmatprep.mubr.f32.mxu0 0.0
      %628 = vmatmul.mubr.f32.gmra.mrb[0].mxu0 %v472
      %v629 = vpop.f32.mrb[0].mxu0
      %v630 = vpop.f32.mrb[0].mxu0
      %631 = vmatprep.mubr.f32.mxu0 0.0
      %632 = vmatmul.mubr.f32.gmra.mrb[0].mxu0 %v475
      %v633 = vpop.f32.mrb[0].mxu0
      %v634 = vpop.f32.mrb[0].mxu0
      %635 = vdwg.mxu0
      %637 = vrot.lane.b32.xlu0 %v544, 80
      %v638 = vpop.permute.xlu0 %637
      %641 = vrot.lane.b32.xlu0 %v544, 32
      %v642 = vpop.permute.xlu0 %641
      %643 = vrot.lane.b32.xlu0 %v546, 32
      %v644 = vpop.permute.xlu0 %643
      %vm645 = vcmask 261120
      %v646 = vsel %vm645, %v642, %v644
      %648 = vrot.lane.b32.xlu0 %v546, 112
      %v649 = vpop.permute.xlu0 %648
      %651 = vrot.lane.b32.xlu0 %v546, 64
      %v652 = vpop.permute.xlu0 %651
      %655 = vrot.lane.b32.xlu0 %v546, 16
      %v656 = vpop.permute.xlu0 %655
      %657 = vrot.lane.b32.xlu0 %v625, 16
      %v658 = vpop.permute.xlu0 %657
      %vm659 = vcmask 130048
      %v660 = vsel %vm659, %v656, %v658
      %662 = vrot.lane.b32.xlu0 %v625, 96
      %v663 = vpop.permute.xlu0 %662
      %v665 = vld [vmem:[%s4] sm:$0xf]
      %v666 = vld [vmem:[%s4 + $0x4] sm:$0xf]
      %v667 = vld [vmem:[%s4 + $0x8] sm:$0xf]
      %v668 = vld [vmem:[%s4 + $0xc] sm:$0xf]
      %v669 = vld [vmem:[%s4 + $0x10] sm:$0xf]
      %v670 = vld [vmem:[%s4 + $0x14] sm:$0xf]
      %v671 = vld [vmem:[%s4 + $0x18] sm:$0xf]
      %v672 = vld [vmem:[%s4 + $0x1c] sm:$0xf]
      %v673 = vpack.c.bf16 %v638, %v544
      %v674 = vpack.c.bf16 %v649, %v646
      %v675 = vpack.c.bf16 %v660, %v652
      %v676 = vpack.c.bf16 %v663, %v663
      %v677 = vld [vmem:[%s5] sm:$0xff]
      %v678 = vld [vmem:[%s5 + $0x8] sm:$0xff]
      %v679 = vld [vmem:[%s5 + $0x10] sm:$0xff]
      %v680 = vld [vmem:[%s5 + $0x18] sm:$0xff]
      %v681 = vld [vmem:[%s5 + $0x20] sm:$0xff]
      %v682 = vld [vmem:[%s5 + $0x28] sm:$0xff]
      %v683 = vld [vmem:[%s5 + $0x30] sm:$0xff]
      %v684 = vld [vmem:[%s5 + $0x38] sm:$0xff]
      %686 = vset.pattern.permute.xlu0 0
      %687 = vperm.xlu0 %686, %v677
      %v688 = vpop.permute.xlu0 %687
      %691 = vset.pattern.permute.xlu0 0
      %692 = vperm.xlu0 %691, %v678
      %v693 = vpop.permute.xlu0 %692
      %696 = vset.pattern.permute.xlu0 0
      %697 = vperm.xlu0 %696, %v679
      %v698 = vpop.permute.xlu0 %697
      %701 = vset.pattern.permute.xlu0 0
      %702 = vperm.xlu0 %701, %v680
      %v703 = vpop.permute.xlu0 %702
      %706 = vset.pattern.permute.xlu0 0
      %707 = vperm.xlu0 %706, %v681
      %v708 = vpop.permute.xlu0 %707
      %711 = vset.pattern.permute.xlu0 0
      %712 = vperm.xlu0 %711, %v682
      %v713 = vpop.permute.xlu0 %712
      %716 = vset.pattern.permute.xlu0 0
      %717 = vperm.xlu0 %716, %v683
      %v718 = vpop.permute.xlu0 %717
      %721 = vset.pattern.permute.xlu0 0
      %722 = vperm.xlu0 %721, %v684
      %v723 = vpop.permute.xlu0 %722
      %v733 = vunpack.c.l.b16 %v665
      %v734 = vunpack.c.l.b16 %v666
      %v735 = vunpack.c.l.b16 %v667
      %v736 = vunpack.c.l.b16 %v668
      %v737 = vunpack.c.l.b16 %v669
      %v738 = vunpack.c.l.b16 %v670
      %v739 = vunpack.c.l.b16 %v671
      %v740 = vunpack.c.l.b16 %v672
      %v741 = vpack.c.b16 %v734, %v733
      %v742 = vpack.c.b16 %v736, %v735
      %v743 = vpack.c.b16 %v738, %v737
      %v744 = vpack.c.b16 %v740, %v739
      %v746 = vsel %vm467, %v741, 0
      %v749 = vsel %vm467, %v742, 0
      %v752 = vsel %vm467, %v743, 0
      %v755 = vsel %vm467, %v744, 0
      %vm757 = vcmask 1043456
      %v759 = vsel %vm757, %v676, 0
      %761 = vmatprep.subr.bf16.mxu0 0
      %762 = vmatpush1.bf16.msra.mxu0 %v673
      %763 = vmatprep.subr.bf16.mxu0 0
      %764 = vmatpush1.bf16.msra.mxu0 %v674
      %765 = vmatprep.subr.bf16.mxu0 0
      %766 = vmatpush1.bf16.msra.mxu0 %v675
      %767 = vmatprep.subr.bf16.mxu0 0
      %768 = vmatpush1.bf16.msra.mxu0 %v759
      %769 = vmatprep.subr.bf16.mxu0 0
      %770 = vmatpush1.bf16.msra.mxu0 0
      %771 = vmatprep.subr.bf16.mxu0 0
      %772 = vmatpush1.bf16.msra.mxu0 0
      %773 = vmatprep.subr.bf16.mxu0 0
      %774 = vmatpush1.bf16.msra.mxu0 0
      %775 = vmatprep.subr.bf16.mxu0 0
      %776 = vmatpush1.bf16.msra.mxu0 0
      %777 = vmatprep.subr.bf16.mxu0 0
      %778 = vmatpush1.bf16.msra.mxu0 0
      %779 = vmatprep.subr.bf16.mxu0 0
      %780 = vmatpush1.bf16.msra.mxu0 0
      %781 = vmatprep.subr.bf16.mxu0 0
      %782 = vmatpush1.bf16.msra.mxu0 0
      %783 = vmatprep.subr.bf16.mxu0 0
      %784 = vmatpush1.bf16.msra.mxu0 0
      %785 = vmatprep.subr.bf16.mxu0 0
      %786 = vmatpush1.bf16.msra.mxu0 0
      %787 = vmatprep.subr.bf16.mxu0 0
      %788 = vmatpush1.bf16.msra.mxu0 0
      %789 = vmatprep.subr.bf16.mxu0 0
      %790 = vmatpush1.bf16.msra.mxu0 0
      %791 = vmatprep.subr.bf16.mxu0 0
      %792 = vmatpush1.bf16.msra.mxu0 0
      %793 = vmatprep.mubr.bf16.mxu0 0
      %794 = vmatmul.mubr.bf16.gmra.mrb[0].mxu0 %v746
      %v795 = vpop.f32.mrb[0].mxu0
      %v796 = vadd.f32 %v688, %v795
      %v797 = vpop.f32.mrb[0].mxu0
      %v798 = vpop.f32.mrb[0].mxu0
      %v799 = vadd.f32 %v693, %v798
      %v800 = vpop.f32.mrb[0].mxu0
      %801 = vmatprep.mubr.bf16.mxu0 0
      %802 = vmatmul.mubr.bf16.gmra.mrb[0].mxu0 %v749
      %v803 = vpop.f32.mrb[0].mxu0
      %v804 = vadd.f32 %v698, %v803
      %v805 = vpop.f32.mrb[0].mxu0
      %v806 = vpop.f32.mrb[0].mxu0
      %v807 = vadd.f32 %v703, %v806
      %v808 = vpop.f32.mrb[0].mxu0
      %809 = vmatprep.mubr.bf16.mxu0 0
      %810 = vmatmul.mubr.bf16.gmra.mrb[0].mxu0 %v752
      %v811 = vpop.f32.mrb[0].mxu0
      %v812 = vadd.f32 %v708, %v811
      %v813 = vpop.f32.mrb[0].mxu0
      %v814 = vpop.f32.mrb[0].mxu0
      %v815 = vadd.f32 %v713, %v814
      %v816 = vpop.f32.mrb[0].mxu0
      %817 = vmatprep.mubr.bf16.mxu0 0
      %818 = vmatmul.mubr.bf16.gmra.mrb[0].mxu0 %v755
      %v819 = vpop.f32.mrb[0].mxu0
      %v820 = vadd.f32 %v718, %v819
      %v821 = vpop.f32.mrb[0].mxu0
      %v822 = vpop.f32.mrb[0].mxu0
      %v823 = vadd.f32 %v723, %v822
      %v824 = vpop.f32.mrb[0].mxu0
      %825 = vdwg.mxu0
      %v826 = vtanh.pop %v796
      %v827 = vtanh.pop %v799
      %v828 = vtanh.pop %v804
      %v829 = vtanh.pop %v807
      %v830 = vxor.u32 %v812, 2147483648
      %v831 = vxor.u32 %v815, 2147483648
      %v832 = vxor.u32 %v820, 2147483648
      %v833 = vxor.u32 %v823, 2147483648
      %v834 = vmul.f32 %v830, 1.442695
      %v835 = vpow.pop %v834
      %v836 = vmul.f32 %v831, 1.442695
      %v837 = vpow.pop %v836
      %v838 = vmul.f32 %v832, 1.442695
      %v839 = vpow.pop %v838
      %v840 = vmul.f32 %v833, 1.442695
      %v841 = vpow.pop %v840
      %v842 = vadd.f32 %v835, 1.0
      %v843 = vadd.f32 %v837, 1.0
      %v844 = vadd.f32 %v839, 1.0
      %v845 = vadd.f32 %v841, 1.0
      %v846 = vrcp.pop %v842
      %v847 = vmul.f32 1.0, %v846
      %v848 = vrcp.pop %v843
      %v849 = vmul.f32 1.0, %v848
      %v850 = vrcp.pop %v844
      %v851 = vmul.f32 1.0, %v850
      %v852 = vrcp.pop %v845
      %v853 = vmul.f32 1.0, %v852
      %v854 = vmul.f32 %v826, %v847
      %v855 = vmul.f32 %v827, %v849
      %v856 = vmul.f32 %v828, %v851
      %v857 = vmul.f32 %v829, %v853
      %v858 = vld [vmem:[%s6] sm:$0xf]
      %v859 = vld [vmem:[%s6 + $0x4] sm:$0xf]
      %v860 = vpack.c.bf16 %v854, %v854
      %v861 = vld [vmem:[%s7] sm:$0xff]
      %v862 = vld [vmem:[%s7 + $0x8] sm:$0xff]
      %864 = vset.pattern.permute.xlu0 0
      %865 = vperm.xlu0 %864, %v861
      %v866 = vpop.permute.xlu0 %865
      %869 = vset.pattern.permute.xlu0 0
      %870 = vperm.xlu0 %869, %v862
      %v871 = vpop.permute.xlu0 %870
      %v875 = vunpack.c.l.b16 %v858
      %v876 = vunpack.c.l.b16 %v859
      %v877 = vpack.c.b16 %v876, %v875
      %vm878 = vcmask 64512
      %v880 = vsel %vm878, %v877, 0
      %v883 = vsel %vm757, %v860, 0
      %885 = vmatprep.subr.bf16.mxu0 0
      %886 = vmatpush1.bf16.msra.mxu0 %v883
      %887 = vmatprep.subr.bf16.mxu0 0
      %888 = vmatpush1.bf16.msra.mxu0 0
      %889 = vmatprep.subr.bf16.mxu0 0
      %890 = vmatpush1.bf16.msra.mxu0 0
      %891 = vmatprep.subr.bf16.mxu0 0
      %892 = vmatpush1.bf16.msra.mxu0 0
      %893 = vmatprep.subr.bf16.mxu0 0
      %894 = vmatpush1.bf16.msra.mxu0 0
      %895 = vmatprep.subr.bf16.mxu0 0
      %896 = vmatpush1.bf16.msra.mxu0 0
      %897 = vmatprep.subr.bf16.mxu0 0
      %898 = vmatpush1.bf16.msra.mxu0 0
      %899 = vmatprep.subr.bf16.mxu0 0
      %900 = vmatpush1.bf16.msra.mxu0 0
      %901 = vmatprep.subr.bf16.mxu0 0
      %902 = vmatpush1.bf16.msra.mxu0 0
      %903 = vmatprep.subr.bf16.mxu0 0
      %904 = vmatpush1.bf16.msra.mxu0 0
      %905 = vmatprep.subr.bf16.mxu0 0
      %906 = vmatpush1.bf16.msra.mxu0 0
      %907 = vmatprep.subr.bf16.mxu0 0
      %908 = vmatpush1.bf16.msra.mxu0 0
      %909 = vmatprep.subr.bf16.mxu0 0
      %910 = vmatpush1.bf16.msra.mxu0 0
      %911 = vmatprep.subr.bf16.mxu0 0
      %912 = vmatpush1.bf16.msra.mxu0 0
      %913 = vmatprep.subr.bf16.mxu0 0
      %914 = vmatpush1.bf16.msra.mxu0 0
      %915 = vmatprep.subr.bf16.mxu0 0
      %916 = vmatpush1.bf16.msra.mxu0 0
      %917 = vmatprep.mubr.bf16.mxu0 0
      %918 = vmatmul.mubr.bf16.gmra.mrb[0].mxu0 %v880
      %v919 = vpop.f32.mrb[0].mxu0
      %v920 = vadd.f32 %v866, %v919
      %v921 = vpop.f32.mrb[0].mxu0
      %v922 = vpop.f32.mrb[0].mxu0
      %v923 = vadd.f32 %v871, %v922
      %v924 = vpop.f32.mrb[0].mxu0
      %925 = vdwg.mxu0
      %928 = vrot.lane.b32.xlu0 %v551, 64
      %v929 = vpop.permute.xlu0 %928
      %930 = vrot.lane.b32.xlu0 %v556, 64
      %v931 = vpop.permute.xlu0 %930
      %v934 = vadd.f32 %v920, %v929
      %v935 = vadd.f32 %v923, %v931
      %vm936 = vcmask 392192
      %937 = vst.msk [vmem:[%s441] sm:$0xff] %vm936, %v934
      %938 = vst.msk [vmem:[%s441 + $0x8] sm:$0xff] %vm936, %v935
      %v939 = vld [vmem:[%s3] sm:$0xff]
      %v940 = vld [vmem:[%s3 + $0x8] sm:$0xff]
      %v941 = vld [vmem:[%s3 + $0x10] sm:$0xff]
      %v942 = vld [vmem:[%s3 + $0x18] sm:$0xff]
      %v943 = vld [vmem:[%s3 + $0x20] sm:$0xff]
      %v944 = vld [vmem:[%s3 + $0x28] sm:$0xff]
      %v946 = vsel %vm936, %v854, 0
      %v949 = vsel %vm936, %v855, 0
      %v952 = vsel %vm936, %v856, 0
      %v955 = vsel %vm936, %v857, 0
      %957 = vmatprep.subr.mxu0 0.0
      %958 = vmatpush1.msra.mxu0 %v939
      %959 = vmatprep.subr.mxu0 0.0
      %960 = vmatpush1.msra.mxu0 %v940
      %961 = vmatprep.subr.mxu0 0.0
      %962 = vmatpush1.msra.mxu0 %v941
      %963 = vmatprep.subr.mxu0 0.0
      %964 = vmatpush1.msra.mxu0 %v942
      %965 = vmatprep.subr.mxu0 0.0
      %966 = vmatpush1.msra.mxu0 %v943
      %967 = vmatprep.subr.mxu0 0.0
      %968 = vmatpush1.msra.mxu0 %v944
      %969 = vmatprep.subr.mxu0 0.0
      %970 = vmatpush1.msra.mxu0 0.0
      %971 = vmatprep.subr.mxu0 0.0
      %972 = vmatpush1.msra.mxu0 0.0
      %973 = vmatprep.subr.mxu0 0.0
      %974 = vmatpush1.msra.mxu0 0.0
      %975 = vmatprep.subr.mxu0 0.0
      %976 = vmatpush1.msra.mxu0 0.0
      %977 = vmatprep.subr.mxu0 0.0
      %978 = vmatpush1.msra.mxu0 0.0
      %979 = vmatprep.subr.mxu0 0.0
      %980 = vmatpush1.msra.mxu0 0.0
      %981 = vmatprep.subr.mxu0 0.0
      %982 = vmatpush1.msra.mxu0 0.0
      %983 = vmatprep.subr.mxu0 0.0
      %984 = vmatpush1.msra.mxu0 0.0
      %985 = vmatprep.subr.mxu0 0.0
      %986 = vmatpush1.msra.mxu0 0.0
      %987 = vmatprep.subr.mxu0 0.0
      %988 = vmatpush1.msra.mxu0 0.0
      %989 = vmatprep.subr.mxu0 0.0
      %990 = vmatpush1.msra.mxu0 0.0
      %991 = vmatprep.subr.mxu0 0.0
      %992 = vmatpush1.msra.mxu0 0.0
      %993 = vmatprep.subr.mxu0 0.0
      %994 = vmatpush1.msra.mxu0 0.0
      %995 = vmatprep.subr.mxu0 0.0
      %996 = vmatpush1.msra.mxu0 0.0
      %997 = vmatprep.subr.mxu0 0.0
      %998 = vmatpush1.msra.mxu0 0.0
      %999 = vmatprep.subr.mxu0 0.0
      %1000 = vmatpush1.msra.mxu0 0.0
      %1001 = vmatprep.subr.mxu0 0.0
      %1002 = vmatpush1.msra.mxu0 0.0
      %1003 = vmatprep.subr.mxu0 0.0
      %1004 = vmatpush1.msra.mxu0 0.0
      %1005 = vmatprep.subr.mxu0 0.0
      %1006 = vmatpush1.msra.mxu0 0.0
      %1007 = vmatprep.subr.mxu0 0.0
      %1008 = vmatpush1.msra.mxu0 0.0
      %1009 = vmatprep.subr.mxu0 0.0
      %1010 = vmatpush1.msra.mxu0 0.0
      %1011 = vmatprep.subr.mxu0 0.0
      %1012 = vmatpush1.msra.mxu0 0.0
      %1013 = vmatprep.subr.mxu0 0.0
      %1014 = vmatpush1.msra.mxu0 0.0
      %1015 = vmatprep.subr.mxu0 0.0
      %1016 = vmatpush1.msra.mxu0 0.0
      %1017 = vmatprep.subr.mxu0 0.0
      %1018 = vmatpush1.msra.mxu0 0.0
      %1019 = vmatprep.subr.mxu0 0.0
      %1020 = vmatpush1.msra.mxu0 0.0
      %1021 = vmatprep.mubr.f32.mxu0 0.0
      %1022 = vmatmul.mubr.f32.gmra.mrb[0].mxu0 %v946
      %v1023 = vpop.f32.mrb[0].mxu0
      %v1024 = vadd.f32 0.0, %v1023
      %v1025 = vpop.f32.mrb[0].mxu0
      %1026 = vmatprep.mubr.f32.mxu0 0.0
      %1027 = vmatmul.mubr.f32.gmra.mrb[0].mxu0 %v949
      %v1028 = vpop.f32.mrb[0].mxu0
      %v1029 = vadd.f32 0.0, %v1028
      %v1030 = vpop.f32.mrb[0].mxu0
      %1031 = vmatprep.mubr.f32.mxu0 0.0
      %1032 = vmatmul.mubr.f32.gmra.mrb[0].mxu0 %v952
      %v1033 = vpop.f32.mrb[0].mxu0
      %v1034 = vadd.f32 0.0, %v1033
      %v1035 = vpop.f32.mrb[0].mxu0
      %1036 = vmatprep.mubr.f32.mxu0 0.0
      %1037 = vmatmul.mubr.f32.gmra.mrb[0].mxu0 %v955
      %v1038 = vpop.f32.mrb[0].mxu0
      %v1039 = vadd.f32 0.0, %v1038
      %v1040 = vpop.f32.mrb[0].mxu0
      %1041 = vdwg.mxu0
      %1046 = vrot.lane.b32.xlu0 %v1024, 80
      %v1047 = vpop.permute.xlu0 %1046
      %1048 = vrot.lane.b32.xlu0 %v1029, 80
      %v1049 = vpop.permute.xlu0 %1048
      %1050 = vrot.lane.b32.xlu0 %v1034, 80
      %v1051 = vpop.permute.xlu0 %1050
      %1052 = vrot.lane.b32.xlu0 %v1039, 80
      %v1053 = vpop.permute.xlu0 %1052
      %v1058 = vld [vmem:[%s8] sm:$0xf]
      %v1059 = vpack.c.bf16 %v855, %v854
      %v1060 = vpack.c.bf16 %v857, %v856
      %v1061 = vpack.c.bf16 %v1029, %v1024
      %v1062 = vpack.c.bf16 %v1039, %v1034
      %v1063 = vpack.c.bf16 %v1049, %v1047
      %v1064 = vpack.c.bf16 %v1053, %v1051
      %vm1065 = vcmask 785408
      %v1067 = vsel %vm1065, %v1058, 0
      %1069 = vmatprep.subr.bf16.mxu0 0
      %1070 = vmatpush1.bf16.msra.mxu0 %v1059
      %1071 = vmatprep.subr.bf16.mxu0 0
      %1072 = vmatpush1.bf16.msra.mxu0 %v1060
      %1073 = vmatprep.subr.bf16.mxu0 0
      %1074 = vmatpush1.bf16.msra.mxu0 %v1061
      %1075 = vmatprep.subr.bf16.mxu0 0
      %1076 = vmatpush1.bf16.msra.mxu0 %v1062
      %1077 = vmatprep.subr.bf16.mxu0 0
      %1078 = vmatpush1.bf16.msra.mxu0 %v1063
      %1079 = vmatprep.subr.bf16.mxu0 0
      %1080 = vmatpush1.bf16.msra.mxu0 %v1064
      %1081 = vmatprep.subr.bf16.mxu0 0
      %1082 = vmatpush1.bf16.msra.mxu0 0
      %1083 = vmatprep.subr.bf16.mxu0 0
      %1084 = vmatpush1.bf16.msra.mxu0 0
      %1085 = vmatprep.subr.bf16.mxu0 0
      %1086 = vmatpush1.bf16.msra.mxu0 0
      %1087 = vmatprep.subr.bf16.mxu0 0
      %1088 = vmatpush1.bf16.msra.mxu0 0
      %1089 = vmatprep.subr.bf16.mxu0 0
      %1090 = vmatpush1.bf16.msra.mxu0 0
      %1091 = vmatprep.subr.bf16.mxu0 0
      %1092 = vmatpush1.bf16.msra.mxu0 0
      %1093 = vmatprep.subr.bf16.mxu0 0
      %1094 = vmatpush1.bf16.msra.mxu0 0
      %1095 = vmatprep.subr.bf16.mxu0 0
      %1096 = vmatpush1.bf16.msra.mxu0 0
      %1097 = vmatprep.subr.bf16.mxu0 0
      %1098 = vmatpush1.bf16.msra.mxu0 0
      %1099 = vmatprep.subr.bf16.mxu0 0
      %1100 = vmatpush1.bf16.msra.mxu0 0
      %1101 = vmatprep.mubr.bf16.mxu0 0
      %1102 = vmatmul.mubr.bf16.gmra.mrb[0].mxu0 %v1067
      %v1103 = vpop.f32.mrb[0].mxu0
      %v1104 = vadd.f32 %v652, %v1103
      %v1105 = vpop.f32.mrb[0].mxu0
      %v1106 = vpop.f32.mrb[0].mxu0
      %v1107 = vpop.f32.mrb[0].mxu0
      %1108 = vdwg.mxu0
      %v1109 = vld [vmem:[%s9] sm:$0xff]
      %1111 = vset.pattern.permute.xlu0 0
      %1112 = vperm.xlu0 %1111, %v1109
      %v1113 = vpop.permute.xlu0 %1112
      %v1115 = vmul.f32 %v1104, %v1113
      %v1116 = vld [vmem:[%s10] sm:$0xff]
      %1118 = vset.pattern.permute.xlu0 0
      %1119 = vperm.xlu0 %1118, %v1116
      %v1120 = vpop.permute.xlu0 %1119
      %v1122 = vadd.f32 %v1115, %v1120
      %1123 = vst.msk [vmem:[%s436] sm:$0xff] %vm936, %v1122
      %p1124 = scmp.lt.s32.totalorder %s24, 1
      %s1125 = scalar_select %p1124, %s24, 1
      %s1126 = smul.addr %s1125, 8
      %s1127 = scalar_lea.vmem %s11, %s1126
      %p1128 = scmp.lt.s32.totalorder %s24, 1
      %s1129 = scalar_select %p1128, %s24, 1
      %s1130 = smul.addr %s1129, 2
      %s1131 = smul.addr %s1130, 8
      %s1132 = scalar_lea.vmem %s12, %s1131
      // Predicated region
      $region65: #{predictor_forward.7} parent=63 // pred_check
        %p1133 = pneg %p283
      $region66: #{predictor_forward.7} parent=63 // pred_check_branch
        %1135 = sbr.rel (%p1133) target = $region68
      $region67: #{predictor_forward.7} parent=63 // pred_region
        _
      $region68: #{predictor_forward.7} parent=63 // pred_fallthru
        _
      // Predicated region
      $region69: #{predictor_forward.7} parent=63 // pred_check
        %p1136 = pneg %p309
      $region70: #{predictor_forward.7} parent=63 // pred_check_branch
        %1138 = sbr.rel (%p1136) target = $region72
      $region71: #{predictor_forward.7} parent=63 // pred_region
        _
      $region72: #{predictor_forward.7} parent=63 // pred_fallthru
        _
    $region64: #{predictor_forward.7} parent=5 // pred_fallthru
      _
    %p1139 = scmp.le.s32.totalorder 2, %s19
    // Predicated region
    $region73: #{predictor_forward.7} parent=5 // pred_check
      %p1140 = pneg %p1139
    $region74: #{predictor_forward.7} parent=5 // pred_check_branch
      %1142 = sbr.rel (%p1140) target = $region76
    $region75: #{predictor_forward.7} parent=5 // pred_region
      %s1143 = ssub.s32 %s19, 2
      // Predicated region
      $region77: #{predictor_forward.7} parent=75 // pred_check
        %p1144 = pneg %p289
      $region78: #{predictor_forward.7} parent=75 // pred_check_branch
        %1146 = sbr.rel (%p1144) target = $region80
      $region79: #{predictor_forward.7} parent=75 // pred_region
        %p1147 = scmp.lt.s32.totalorder %s25, 1
        %s1148 = scalar_select %p1147, %s25, 1
        %s1149 = smul.addr %s1148, 8
        %s1150 = scalar_lea.vmem %s11, %s1149
      $region80: #{predictor_forward.7} parent=75 // pred_fallthru
        _
      // Predicated region
      $region81: #{predictor_forward.7} parent=75 // pred_check
        %p1151 = pneg %p315
      $region82: #{predictor_forward.7} parent=75 // pred_check_branch
        %1153 = sbr.rel (%p1151) target = $region84
      $region83: #{predictor_forward.7} parent=75 // pred_region
        %p1154 = scmp.lt.s32.totalorder %s25, 1
        %s1155 = scalar_select %p1154, %s25, 1
        %s1156 = smul.addr %s1155, 2
        %s1157 = smul.addr %s1156, 8
        %s1158 = scalar_lea.vmem %s12, %s1157
      $region84: #{predictor_forward.7} parent=75 // pred_fallthru
        _
    $region76: #{predictor_forward.7} parent=5 // pred_fallthru
      _
  $region6: #{predictor_forward.7} parent=0 // loop_footer
    %s23 = sadd.s32 1, %s19
  $region7: #{predictor_forward.7} parent=0 // loop_footer_branch
    %18 = sbr.rel target = $region3
  $region8: #{predictor_forward.7} parent=0 // loop_exit
    _

// kernel: predictor_forward.8
$region0: #{predictor_forward.8}
  #allocation0 [shape = 'u32[]', space=smem, size = 0x4, offset = 0x4, fixed_abs, tag = 'smem constant byte address 0x4 - core index']
  #allocation1 [shape = 'u32[144,128]{1,0:T(1,128)}', space=vmem, size = 0x12000, scoped, tag = 'internal scratch']
  %s0 = inlined_call_operand.vmem [shape: f32[2,8,48], index: 0, kind: input, shape index: {}]
  %s1 = inlined_call_operand.vmem [shape: f32[2,16,48], index: 1, kind: input, shape index: {}]
  %s2 = inlined_call_operand.vmem [shape: f32[48,224], index: 2, kind: input, shape index: {}]
  %s3 = inlined_call_operand.vmem [shape: f32[32,64], index: 3, kind: input, shape index: {}]
  %s4 = inlined_call_operand.vmem [shape: bf16[64,56], index: 4, kind: input, shape index: {}]
  %s5 = inlined_call_operand.vmem [shape: f32[64,1], index: 5, kind: input, shape index: {}]
  %s6 = inlined_call_operand.vmem [shape: bf16[16,8], index: 6, kind: input, shape index: {}]
  %s7 = inlined_call_operand.vmem [shape: f32[16,1], index: 7, kind: input, shape index: {}]
  %s8 = inlined_call_operand.vmem [shape: bf16[8,96], index: 8, kind: input, shape index: {}]
  %s9 = inlined_call_operand.vmem [shape: f32[8,1], index: 9, kind: input, shape index: {}]
  %s10 = inlined_call_operand.vmem [shape: f32[8,1], index: 10, kind: input, shape index: {}]
  %s11 = inlined_call_operand.vmem [shape: f32[2,8,32], index: 11, kind: output, shape index: {0}]
  %s12 = inlined_call_operand.vmem [shape: f32[2,16,32], index: 12, kind: output, shape index: {1}]
  %13 = xla_tuple %s11, %s12
  %s14 = sld [smem:[#allocation0]]
  $region85: #{predictor_forward.8} parent=0
    _
  %s16 = ssub.s32 1, %s14
  %s17 = scalar_select 0, %s16, %s14
  loop: start=0, step=1, limit=4
  $region2: #{predictor_forward.8} parent=0 // loop_pre_header
    _
  $region3: #{predictor_forward.8} parent=0 // loop_header
    %s19 = sphi 0, %s23
    %p20 = scmp.ge.s32.totalorder %s19, 4
    %s29 = sphi 0, %s31
    %s32 = sphi 0, %s29
    %s33 = sphi 0, %s32
    %s49 = sphi 0, %s33
    %s55 = sphi 0, %s57
    %s58 = sphi 0, %s55
    %s59 = sphi 0, %s58
    %s75 = sphi 0, %s59
    %s79 = sphi 0, %s79
    %s81 = sphi 0, %s79
    %s82 = sphi 0, %s81
    %s96 = sphi 0, %s82
    %s100 = sphi 0, %s100
    %s102 = sphi 0, %s100
    %s103 = sphi 0, %s102
    %s117 = sphi 0, %s103
    %s121 = sphi 0, %s121
    %s123 = sphi 0, %s121
    %s124 = sphi 0, %s123
    %s138 = sphi 0, %s124
    %s142 = sphi 0, %s142
    %s144 = sphi 0, %s142
    %s145 = sphi 0, %s144
    %s159 = sphi 0, %s145
    %s163 = sphi 0, %s163
    %s165 = sphi 0, %s163
    %s166 = sphi 0, %s165
    %s180 = sphi 0, %s166
    %s184 = sphi 0, %s184
    %s186 = sphi 0, %s184
    %s187 = sphi 0, %s186
    %s201 = sphi 0, %s187
    %s205 = sphi 0, %s205
    %s207 = sphi 0, %s205
    %s208 = sphi 0, %s207
    %s222 = sphi 0, %s208
    %s226 = sphi 0, %s226
    %s228 = sphi 0, %s226
    %s229 = sphi 0, %s228
    %s243 = sphi 0, %s229
    %s247 = sphi 0, %s247
    %s249 = sphi 0, %s247
    %s250 = sphi 0, %s249
    %s264 = sphi 0, %s250
    %s270 = sphi 0, %s272
    %s273 = sphi 0, %s270
    %s274 = sphi 0, %s273
    %s290 = sphi 0, %s274
    %s296 = sphi 0, %s298
    %s299 = sphi 0, %s296
    %s300 = sphi 0, %s299
    %s316 = sphi 0, %s300
  $region4: #{predictor_forward.8} parent=0 // loop_header_branch
    %22 = sbr.rel (%p20) target = $region8
  $region5: #{predictor_forward.8} parent=0 // loop_body
    %s24 = ssub.s32 %s19, 1
    %s25 = ssub.s32 %s19, 2
    %s26 = sadd.s32 %s19, 1
    %s27 = ssub.s32 %s19, %s26
    %p28 = scmp.eq.s32.totalorder %s27, 0
    %s30 = sadd.s32 %s29, 1
    %s31 = scalar_select %p28, %s29, %s30
    %p34 = pneg %p28
    %p35 = scmp.eq.s32.totalorder %s19, 1
    %p36 = por %p34, %p35
    %p37 = scmp.ne.s32.totalorder %s29, %s32
    %p38 = scmp.eq.s32.totalorder %s19, 0
    %p39 = por %p37, %p38
    %p40 = scmp.ne.s32.totalorder %s29, %s32
    %p41 = scmp.eq.s32.totalorder %s24, 1
    %p42 = por %p40, %p41
    %p43 = scmp.ne.s32.totalorder %s32, %s33
    %p44 = scmp.eq.s32.totalorder %s24, 0
    %p45 = por %p43, %p44
    %p46 = scmp.ne.s32.totalorder %s32, %s33
    %p47 = scmp.eq.s32.totalorder %s25, 1
    %p48 = por %p46, %p47
    %p50 = scmp.ne.s32.totalorder %s33, %s49
    %p51 = scmp.eq.s32.totalorder %s25, 0
    %p52 = por %p50, %p51
    %s53 = ssub.s32 %s19, %s26
    %p54 = scmp.eq.s32.totalorder %s53, 0
    %s56 = sadd.s32 %s55, 1
    %s57 = scalar_select %p54, %s55, %s56
    %p60 = pneg %p54
    %p61 = scmp.eq.s32.totalorder %s19, 1
    %p62 = por %p60, %p61
    %p63 = scmp.ne.s32.totalorder %s55, %s58
    %p64 = scmp.eq.s32.totalorder %s19, 0
    %p65 = por %p63, %p64
    %p66 = scmp.ne.s32.totalorder %s55, %s58
    %p67 = scmp.eq.s32.totalorder %s24, 1
    %p68 = por %p66, %p67
    %p69 = scmp.ne.s32.totalorder %s58, %s59
    %p70 = scmp.eq.s32.totalorder %s24, 0
    %p71 = por %p69, %p70
    %p72 = scmp.ne.s32.totalorder %s58, %s59
    %p73 = scmp.eq.s32.totalorder %s25, 1
    %p74 = por %p72, %p73
    %p76 = scmp.ne.s32.totalorder %s59, %s75
    %p77 = scmp.eq.s32.totalorder %s25, 0
    %p78 = por %p76, %p77
    %s80 = sadd.s32 %s79, 1
    %p83 = scmp.eq.s32.totalorder %s19, 1
    %p84 = scmp.ne.s32.totalorder %s79, %s81
    %p85 = scmp.eq.s32.totalorder %s19, 0
    %p86 = por %p84, %p85
    %p87 = scmp.ne.s32.totalorder %s79, %s81
    %p88 = scmp.eq.s32.totalorder %s24, 1
    %p89 = por %p87, %p88
    %p90 = scmp.ne.s32.totalorder %s81, %s82
    %p91 = scmp.eq.s32.totalorder %s24, 0
    %p92 = por %p90, %p91
    %p93 = scmp.ne.s32.totalorder %s81, %s82
    %p94 = scmp.eq.s32.totalorder %s25, 1
    %p95 = por %p93, %p94
    %p97 = scmp.ne.s32.totalorder %s82, %s96
    %p98 = scmp.eq.s32.totalorder %s25, 0
    %p99 = por %p97, %p98
    %s101 = sadd.s32 %s100, 1
    %p104 = scmp.eq.s32.totalorder %s19, 1
    %p105 = scmp.ne.s32.totalorder %s100, %s102
    %p106 = scmp.eq.s32.totalorder %s19, 0
    %p107 = por %p105, %p106
    %p108 = scmp.ne.s32.totalorder %s100, %s102
    %p109 = scmp.eq.s32.totalorder %s24, 1
    %p110 = por %p108, %p109
    %p111 = scmp.ne.s32.totalorder %s102, %s103
    %p112 = scmp.eq.s32.totalorder %s24, 0
    %p113 = por %p111, %p112
    %p114 = scmp.ne.s32.totalorder %s102, %s103
    %p115 = scmp.eq.s32.totalorder %s25, 1
    %p116 = por %p114, %p115
    %p118 = scmp.ne.s32.totalorder %s103, %s117
    %p119 = scmp.eq.s32.totalorder %s25, 0
    %p120 = por %p118, %p119
    %s122 = sadd.s32 %s121, 1
    %p125 = scmp.eq.s32.totalorder %s19, 1
    %p126 = scmp.ne.s32.totalorder %s121, %s123
    %p127 = scmp.eq.s32.totalorder %s19, 0
    %p128 = por %p126, %p127
    %p129 = scmp.ne.s32.totalorder %s121, %s123
    %p130 = scmp.eq.s32.totalorder %s24, 1
    %p131 = por %p129, %p130
    %p132 = scmp.ne.s32.totalorder %s123, %s124
    %p133 = scmp.eq.s32.totalorder %s24, 0
    %p134 = por %p132, %p133
    %p135 = scmp.ne.s32.totalorder %s123, %s124
    %p136 = scmp.eq.s32.totalorder %s25, 1
    %p137 = por %p135, %p136
    %p139 = scmp.ne.s32.totalorder %s124, %s138
    %p140 = scmp.eq.s32.totalorder %s25, 0
    %p141 = por %p139, %p140
    %s143 = sadd.s32 %s142, 1
    %p146 = scmp.eq.s32.totalorder %s19, 1
    %p147 = scmp.ne.s32.totalorder %s142, %s144
    %p148 = scmp.eq.s32.totalorder %s19, 0
    %p149 = por %p147, %p148
    %p150 = scmp.ne.s32.totalorder %s142, %s144
    %p151 = scmp.eq.s32.totalorder %s24, 1
    %p152 = por %p150, %p151
    %p153 = scmp.ne.s32.totalorder %s144, %s145
    %p154 = scmp.eq.s32.totalorder %s24, 0
    %p155 = por %p153, %p154
    %p156 = scmp.ne.s32.totalorder %s144, %s145
    %p157 = scmp.eq.s32.totalorder %s25, 1
    %p158 = por %p156, %p157
    %p160 = scmp.ne.s32.totalorder %s145, %s159
    %p161 = scmp.eq.s32.totalorder %s25, 0
    %p162 = por %p160, %p161
    %s164 = sadd.s32 %s163, 1
    %p167 = scmp.eq.s32.totalorder %s19, 1
    %p168 = scmp.ne.s32.totalorder %s163, %s165
    %p169 = scmp.eq.s32.totalorder %s19, 0
    %p170 = por %p168, %p169
    %p171 = scmp.ne.s32.totalorder %s163, %s165
    %p172 = scmp.eq.s32.totalorder %s24, 1
    %p173 = por %p171, %p172
    %p174 = scmp.ne.s32.totalorder %s165, %s166
    %p175 = scmp.eq.s32.totalorder %s24, 0
    %p176 = por %p174, %p175
    %p177 = scmp.ne.s32.totalorder %s165, %s166
    %p178 = scmp.eq.s32.totalorder %s25, 1
    %p179 = por %p177, %p178
    %p181 = scmp.ne.s32.totalorder %s166, %s180
    %p182 = scmp.eq.s32.totalorder %s25, 0
    %p183 = por %p181, %p182
    %s185 = sadd.s32 %s184, 1
    %p188 = scmp.eq.s32.totalorder %s19, 1
    %p189 = scmp.ne.s32.totalorder %s184, %s186
    %p190 = scmp.eq.s32.totalorder %s19, 0
    %p191 = por %p189, %p190
    %p192 = scmp.ne.s32.totalorder %s184, %s186
    %p193 = scmp.eq.s32.totalorder %s24, 1
    %p194 = por %p192, %p193
    %p195 = scmp.ne.s32.totalorder %s186, %s187
    %p196 = scmp.eq.s32.totalorder %s24, 0
    %p197 = por %p195, %p196
    %p198 = scmp.ne.s32.totalorder %s186, %s187
    %p199 = scmp.eq.s32.totalorder %s25, 1
    %p200 = por %p198, %p199
    %p202 = scmp.ne.s32.totalorder %s187, %s201
    %p203 = scmp.eq.s32.totalorder %s25, 0
    %p204 = por %p202, %p203
    %s206 = sadd.s32 %s205, 1
    %p209 = scmp.eq.s32.totalorder %s19, 1
    %p210 = scmp.ne.s32.totalorder %s205, %s207
    %p211 = scmp.eq.s32.totalorder %s19, 0
    %p212 = por %p210, %p211
    %p213 = scmp.ne.s32.totalorder %s205, %s207
    %p214 = scmp.eq.s32.totalorder %s24, 1
    %p215 = por %p213, %p214
    %p216 = scmp.ne.s32.totalorder %s207, %s208
    %p217 = scmp.eq.s32.totalorder %s24, 0
    %p218 = por %p216, %p217
    %p219 = scmp.ne.s32.totalorder %s207, %s208
    %p220 = scmp.eq.s32.totalorder %s25, 1
    %p221 = por %p219, %p220
    %p223 = scmp.ne.s32.totalorder %s208, %s222
    %p224 = scmp.eq.s32.totalorder %s25, 0
    %p225 = por %p223, %p224
    %s227 = sadd.s32 %s226, 1
    %p230 = scmp.eq.s32.totalorder %s19, 1
    %p231 = scmp.ne.s32.totalorder %s226, %s228
    %p232 = scmp.eq.s32.totalorder %s19, 0
    %p233 = por %p231, %p232
    %p234 = scmp.ne.s32.totalorder %s226, %s228
    %p235 = scmp.eq.s32.totalorder %s24, 1
    %p236 = por %p234, %p235
    %p237 = scmp.ne.s32.totalorder %s228, %s229
    %p238 = scmp.eq.s32.totalorder %s24, 0
    %p239 = por %p237, %p238
    %p240 = scmp.ne.s32.totalorder %s228, %s229
    %p241 = scmp.eq.s32.totalorder %s25, 1
    %p242 = por %p240, %p241
    %p244 = scmp.ne.s32.totalorder %s229, %s243
    %p245 = scmp.eq.s32.totalorder %s25, 0
    %p246 = por %p244, %p245
    %s248 = sadd.s32 %s247, 1
    %p251 = scmp.eq.s32.totalorder %s19, 1
    %p252 = scmp.ne.s32.totalorder %s247, %s249
    %p253 = scmp.eq.s32.totalorder %s19, 0
    %p254 = por %p252, %p253
    %p255 = scmp.ne.s32.totalorder %s247, %s249
    %p256 = scmp.eq.s32.totalorder %s24, 1
    %p257 = por %p255, %p256
    %p258 = scmp.ne.s32.totalorder %s249, %s250
    %p259 = scmp.eq.s32.totalorder %s24, 0
    %p260 = por %p258, %p259
    %p261 = scmp.ne.s32.totalorder %s249, %s250
    %p262 = scmp.eq.s32.totalorder %s25, 1
    %p263 = por %p261, %p262
    %p265 = scmp.ne.s32.totalorder %s250, %s264
    %p266 = scmp.eq.s32.totalorder %s25, 0
    %p267 = por %p265, %p266
    %s268 = ssub.s32 %s19, %s26
    %p269 = scmp.eq.s32.totalorder %s268, 0
    %s271 = sadd.s32 %s270, 1
    %s272 = scalar_select %p269, %s270, %s271
    %p275 = pneg %p269
    %p276 = scmp.eq.s32.totalorder %s19, 1
    %p277 = por %p275, %p276
    %p278 = scmp.ne.s32.totalorder %s270, %s273
    %p279 = scmp.eq.s32.totalorder %s19, 0
    %p280 = por %p278, %p279
    %p281 = scmp.ne.s32.totalorder %s270, %s273
    %p282 = scmp.eq.s32.totalorder %s24, 1
    %p283 = por %p281, %p282
    %p284 = scmp.ne.s32.totalorder %s273, %s274
    %p285 = scmp.eq.s32.totalorder %s24, 0
    %p286 = por %p284, %p285
    %p287 = scmp.ne.s32.totalorder %s273, %s274
    %p288 = scmp.eq.s32.totalorder %s25, 1
    %p289 = por %p287, %p288
    %p291 = scmp.ne.s32.totalorder %s274, %s290
    %p292 = scmp.eq.s32.totalorder %s25, 0
    %p293 = por %p291, %p292
    %s294 = ssub.s32 %s19, %s26
    %p295 = scmp.eq.s32.totalorder %s294, 0
    %s297 = sadd.s32 %s296, 1
    %s298 = scalar_select %p295, %s296, %s297
    %p301 = pneg %p295
    %p302 = scmp.eq.s32.totalorder %s19, 1
    %p303 = por %p301, %p302
    %p304 = scmp.ne.s32.totalorder %s296, %s299
    %p305 = scmp.eq.s32.totalorder %s19, 0
    %p306 = por %p304, %p305
    %p307 = scmp.ne.s32.totalorder %s296, %s299
    %p308 = scmp.eq.s32.totalorder %s24, 1
    %p309 = por %p307, %p308
    %p310 = scmp.ne.s32.totalorder %s299, %s300
    %p311 = scmp.eq.s32.totalorder %s24, 0
    %p312 = por %p310, %p311
    %p313 = scmp.ne.s32.totalorder %s299, %s300
    %p314 = scmp.eq.s32.totalorder %s25, 1
    %p315 = por %p313, %p314
    %p317 = scmp.ne.s32.totalorder %s300, %s316
    %p318 = scmp.eq.s32.totalorder %s25, 0
    %p319 = por %p317, %p318
    %p320 = scmp.le.s32.totalorder 1, %s19
    %p321 = scmp.lt.s32.totalorder %s19, 3
    %p322 = pnand %p320, %p321
    %p323 = pneg %p322
    // Predicated region
    $region9: #{predictor_forward.8} parent=5 // pred_check
      _
    $region10: #{predictor_forward.8} parent=5 // pred_check_branch
      %325 = sbr.rel (%p322) target = $region12
    $region11: #{predictor_forward.8} parent=5 // pred_region
      %s326 = ssub.s32 %s19, 1
      // Predicated region
      $region13: #{predictor_forward.8} parent=11 // pred_check
        %p327 = pneg %p92
      $region14: #{predictor_forward.8} parent=11 // pred_check_branch
        %329 = sbr.rel (%p327) target = $region16
      $region15: #{predictor_forward.8} parent=11 // pred_region
        _
      $region16: #{predictor_forward.8} parent=11 // pred_fallthru
        _
      // Predicated region
      $region17: #{predictor_forward.8} parent=11 // pred_check
        %p330 = pneg %p113
      $region18: #{predictor_forward.8} parent=11 // pred_check_branch
        %332 = sbr.rel (%p330) target = $region20
      $region19: #{predictor_forward.8} parent=11 // pred_region
        _
      $region20: #{predictor_forward.8} parent=11 // pred_fallthru
        _
      // Predicated region
      $region21: #{predictor_forward.8} parent=11 // pred_check
        %p333 = pneg %p134
      $region22: #{predictor_forward.8} parent=11 // pred_check_branch
        %335 = sbr.rel (%p333) target = $region24
      $region23: #{predictor_forward.8} parent=11 // pred_region
        _
      $region24: #{predictor_forward.8} parent=11 // pred_fallthru
        _
      // Predicated region
      $region25: #{predictor_forward.8} parent=11 // pred_check
        %p336 = pneg %p155
      $region26: #{predictor_forward.8} parent=11 // pred_check_branch
        %338 = sbr.rel (%p336) target = $region28
      $region27: #{predictor_forward.8} parent=11 // pred_region
        _
      $region28: #{predictor_forward.8} parent=11 // pred_fallthru
        _
      // Predicated region
      $region29: #{predictor_forward.8} parent=11 // pred_check
        %p339 = pneg %p176
      $region30: #{predictor_forward.8} parent=11 // pred_check_branch
        %341 = sbr.rel (%p339) target = $region32
      $region31: #{predictor_forward.8} parent=11 // pred_region
        _
      $region32: #{predictor_forward.8} parent=11 // pred_fallthru
        _
      // Predicated region
      $region33: #{predictor_forward.8} parent=11 // pred_check
        %p342 = pneg %p197
      $region34: #{predictor_forward.8} parent=11 // pred_check_branch
        %344 = sbr.rel (%p342) target = $region36
      $region35: #{predictor_forward.8} parent=11 // pred_region
        _
      $region36: #{predictor_forward.8} parent=11 // pred_fallthru
        _
      // Predicated region
      $region37: #{predictor_forward.8} parent=11 // pred_check
        %p345 = pneg %p218
      $region38: #{predictor_forward.8} parent=11 // pred_check_branch
        %347 = sbr.rel (%p345) target = $region40
      $region39: #{predictor_forward.8} parent=11 // pred_region
        _
      $region40: #{predictor_forward.8} parent=11 // pred_fallthru
        _
      // Predicated region
      $region41: #{predictor_forward.8} parent=11 // pred_check
        %p348 = pneg %p239
      $region42: #{predictor_forward.8} parent=11 // pred_check_branch
        %350 = sbr.rel (%p348) target = $region44
      $region43: #{predictor_forward.8} parent=11 // pred_region
        _
      $region44: #{predictor_forward.8} parent=11 // pred_fallthru
        _
      // Predicated region
      $region45: #{predictor_forward.8} parent=11 // pred_check
        %p351 = pneg %p260
      $region46: #{predictor_forward.8} parent=11 // pred_check_branch
        %353 = sbr.rel (%p351) target = $region48
      $region47: #{predictor_forward.8} parent=11 // pred_region
        _
      $region48: #{predictor_forward.8} parent=11 // pred_fallthru
        _
    $region12: #{predictor_forward.8} parent=5 // pred_fallthru
      _
    %p354 = scmp.lt.s32.totalorder %s19, 2
    // Predicated region
    $region49: #{predictor_forward.8} parent=5 // pred_check
      %p355 = pneg %p354
    $region50: #{predictor_forward.8} parent=5 // pred_check_branch
      %357 = sbr.rel (%p355) target = $region52
    $region51: #{predictor_forward.8} parent=5 // pred_region
      // Predicated region
      $region53: #{predictor_forward.8} parent=51 // pred_check
        %p358 = pneg %p39
      $region54: #{predictor_forward.8} parent=51 // pred_check_branch
        %360 = sbr.rel (%p358) target = $region56
      $region55: #{predictor_forward.8} parent=51 // pred_region
        %p361 = scmp.lt.s32.totalorder %s19, 1
        %s362 = scalar_select %p361, %s19, 1
        %s363 = smul.addr %s362, 8
        %s364 = scalar_lea.vmem %s0, %s363
      $region56: #{predictor_forward.8} parent=51 // pred_fallthru
        _
      // Predicated region
      $region57: #{predictor_forward.8} parent=51 // pred_check
        %p365 = pneg %p65
      $region58: #{predictor_forward.8} parent=51 // pred_check_branch
        %367 = sbr.rel (%p365) target = $region60
      $region59: #{predictor_forward.8} parent=51 // pred_region
        %p368 = scmp.lt.s32.totalorder %s19, 1
        %s369 = scalar_select %p368, %s19, 1
        %s370 = smul.addr %s369, 2
        %s371 = smul.addr %s370, 8
        %s372 = scalar_lea.vmem %s1, %s371
      $region60: #{predictor_forward.8} parent=51 // pred_fallthru
        _
    $region52: #{predictor_forward.8} parent=5 // pred_fallthru
      _
    %p373 = scmp.le.s32.totalorder 1, %s19
    %p374 = scmp.lt.s32.totalorder %s19, 3
    %p375 = pnand %p373, %p374
    %p376 = pneg %p375
    // Predicated region
    $region61: #{predictor_forward.8} parent=5 // pred_check
      _
    $region62: #{predictor_forward.8} parent=5 // pred_check_branch
      %378 = sbr.rel (%p375) target = $region64
    $region63: #{predictor_forward.8} parent=5 // pred_region
      %s379 = ssub.s32 %s19, 1
      %p380 = scmp.lt.s32.totalorder %s24, 1
      %s381 = scalar_select %p380, %s24, 1
      %s382 = smul.addr %s381, 8
      %s383 = scalar_lea.vmem %s0, %s382
      %p384 = pneg %p45
      %p385 = pneg %p42
      %p386 = scmp.lt.s32.totalorder %s24, 1
      %s387 = scalar_select %p386, %s24, 1
      %s388 = smul.addr %s387, 2
      %s389 = smul.addr %s388, 8
      %s390 = scalar_lea.vmem %s1, %s389
      %p391 = pneg %p71
      %p392 = pneg %p68
      %p393 = pneg %p92
      %p394 = pneg %p89
      %p395 = pneg %p113
      %p396 = pneg %p110
      %p397 = pneg %p134
      %p398 = pneg %p131
      %p399 = pneg %p155
      %p400 = pneg %p152
      %p401 = pneg %p176
      %p402 = pneg %p173
      %p403 = pneg %p197
      %p404 = pneg %p194
      %p405 = pneg %p218
      %p406 = pneg %p215
      %p407 = pneg %p239
      %p408 = pneg %p236
      %p409 = pneg %p260
      %p410 = pneg %p257
      %p411 = pneg %p286
      %p412 = pneg %p283
      %p413 = scmp.lt.s32.totalorder %s24, 1
      %s414 = scalar_select %p413, %s24, 1
      %s415 = smul.addr %s414, 8
      %s416 = scalar_lea.vmem %s11, %s415
      %p417 = pneg %p312
      %p418 = pneg %p309
      %p419 = scmp.lt.s32.totalorder %s24, 1
      %s420 = scalar_select %p419, %s24, 1
      %s421 = smul.addr %s420, 2
      %s422 = smul.addr %s421, 8
      %s423 = scalar_lea.vmem %s12, %s422
      %p424 = scmp.lt.s32.totalorder %s24, 1
      %s425 = scalar_select %p424, %s24, 1
      %s426 = smul.addr %s425, 8
      %s427 = scalar_lea.vmem %s0, %s426
      %p428 = scmp.lt.s32.totalorder %s24, 1
      %s429 = scalar_select %p428, %s24, 1
      %s430 = smul.addr %s429, 2
      %s431 = smul.addr %s430, 8
      %s432 = scalar_lea.vmem %s1, %s431
      %p433 = scmp.lt.s32.totalorder %s24, 1
      %s434 = scalar_select %p433, %s24, 1
      %s435 = smul.addr %s434, 8
      %s436 = scalar_lea.vmem %s11, %s435
      %p437 = scmp.lt.s32.totalorder %s24, 1
      %s438 = scalar_select %p437, %s24, 1
      %s439 = smul.addr %s438, 2
      %s440 = smul.addr %s439, 8
      %s441 = scalar_lea.vmem %s12, %s440
      %v443 = vld [vmem:[%s427] sm:$0xff]
      %v444 = vld [vmem:[%s432] sm:$0xff]
      %v445 = vld [vmem:[%s432 + $0x8] sm:$0xff]
      %v446 = vld [vmem:[%s2] sm:$0xff]
      %v447 = vld [vmem:[%s2 + $0x8] sm:$0xff]
      %v448 = vld [vmem:[%s2 + $0x10] sm:$0xff]
      %v449 = vld [vmem:[%s2 + $0x18] sm:$0xff]
      %v450 = vld [vmem:[%s2 + $0x20] sm:$0xff]
      %v451 = vld [vmem:[%s2 + $0x28] sm:$0xff]
      %v452 = vld [vmem:[%s2 + $0x30] sm:$0xff]
      %v453 = vld [vmem:[%s2 + $0x38] sm:$0xff]
      %v454 = vld [vmem:[%s2 + $0x40] sm:$0xff]
      %v455 = vld [vmem:[%s2 + $0x48] sm:$0xff]
      %v456 = vld [vmem:[%s2 + $0x50] sm:$0xff]
      %v457 = vld [vmem:[%s2 + $0x58] sm:$0xff]
      %vm458 = vcmask 392192
      %v460 = vsel %vm458, %v443, 0
      %v463 = vsel %vm458, %v444, 0
      %v466 = vsel %vm458, %v445, 0
      %468 = vmatprep.subr.mxu0 %v447
      %469 = vmatpush1.msra.mxu0 %v446
      %470 = vmatprep.subr.mxu0 %v449
      %471 = vmatpush1.msra.mxu0 %v448
      %472 = vmatprep.subr.mxu0 %v451
      %473 = vmatpush1.msra.mxu0 %v450
      %474 = vmatprep.subr.mxu0 %v453
      %475 = vmatpush1.msra.mxu0 %v452
      %476 = vmatprep.subr.mxu0 %v455
      %477 = vmatpush1.msra.mxu0 %v454
      %478 = vmatprep.subr.mxu0 %v457
      %479 = vmatpush1.msra.mxu0 %v456
      %480 = vmatprep.subr.mxu0 0.0
      %481 = vmatpush1.msra.mxu0 0.0
      %482 = vmatprep.subr.mxu0 0.0
      %483 = vmatpush1.msra.mxu0 0.0
      %484 = vmatprep.subr.mxu0 0.0
      %485 = vmatpush1.msra.mxu0 0.0
      %486 = vmatprep.subr.mxu0 0.0
      %487 = vmatpush1.msra.mxu0 0.0
      %488 = vmatprep.subr.mxu0 0.0
      %489 = vmatpush1.msra.mxu0 0.0
      %490 = vmatprep.subr.mxu0 0.0
      %491 = vmatpush1.msra.mxu0 0.0
      %492 = vmatprep.subr.mxu0 0.0
      %493 = vmatpush1.msra.mxu0 0.0
      %494 = vmatprep.subr.mxu0 0.0
      %495 = vmatpush1.msra.mxu0 0.0
      %496 = vmatprep.subr.mxu0 0.0
      %497 = vmatpush1.msra.mxu0 0.0
      %498 = vmatprep.subr.mxu0 0.0
      %499 = vmatpush1.msra.mxu0 0.0
      %500 = vmatprep.subr.mxu0 0.0
      %501 = vmatpush1.msra.mxu0 0.0
      %502 = vmatprep.subr.mxu0 0.0
      %503 = vmatpush1.msra.mxu0 0.0
      %504 = vmatprep.subr.mxu0 0.0
      %505 = vmatpush1.msra.mxu0 0.0
      %506 = vmatprep.subr.mxu0 0.0
      %507 = vmatpush1.msra.mxu0 0.0
      %508 = vmatprep.subr.mxu0 0.0
      %509 = vmatpush1.msra.mxu0 0.0
      %510 = vmatprep.subr.mxu0 0.0
      %511 = vmatpush1.msra.mxu0 0.0
      %512 = vmatprep.subr.mxu0 0.0
      %513 = vmatpush1.msra.mxu0 0.0
      %514 = vmatprep.subr.mxu0 0.0
      %515 = vmatpush1.msra.mxu0 0.0
      %516 = vmatprep.subr.mxu0 0.0
      %517 = vmatpush1.msra.mxu0 0.0
      %518 = vmatprep.subr.mxu0 0.0
      %519 = vmatpush1.msra.mxu0 0.0
      %520 = vmatprep.subr.mxu0 0.0
      %521 = vmatpush1.msra.mxu0 0.0
      %522 = vmatprep.subr.mxu0 0.0
      %523 = vmatpush1.msra.mxu0 0.0
      %524 = vmatprep.subr.mxu0 0.0
      %525 = vmatpush1.msra.mxu0 0.0
      %526 = vmatprep.subr.mxu0 0.0
      %527 = vmatpush1.msra.mxu0 0.0
      %528 = vmatprep.subr.mxu0 0.0
      %529 = vmatpush1.msra.mxu0 0.0
      %530 = vmatprep.subr.mxu0 0.0
      %531 = vmatpush1.msra.mxu0 0.0
      %532 = vmatprep.mubr.f32.mxu0 0.0
      %533 = vmatmul.mubr.f32.gmra.mrb[0].mxu0 %v460
      %v534 = vpop.f32.mrb[0].mxu0
      %v535 = vadd.f32 0.0, %v534
      %v536 = vpop.f32.mrb[0].mxu0
      %v537 = vadd.f32 0.0, %v536
      %538 = vmatprep.mubr.f32.mxu0 0.0
      %539 = vmatmul.mubr.f32.gmra.mrb[0].mxu0 %v463
      %v540 = vpop.f32.mrb[0].mxu0
      %v541 = vpop.f32.mrb[0].mxu0
      %v542 = vadd.f32 0.0, %v541
      %543 = vmatprep.mubr.f32.mxu0 0.0
      %544 = vmatmul.mubr.f32.gmra.mrb[0].mxu0 %v466
      %v545 = vpop.f32.mrb[0].mxu0
      %v546 = vpop.f32.mrb[0].mxu0
      %v547 = vadd.f32 0.0, %v546
      %548 = vdwg.mxu0
      %550 = vrot.lane.b32.xlu0 %v535, 96
      %v551 = vpop.permute.xlu0 %550
      %553 = vrot.lane.b32.xlu0 %v535, 64
      %v554 = vpop.permute.xlu0 %553
      %556 = vrot.lane.b32.xlu0 %v535, 32
      %v557 = vpop.permute.xlu0 %556
      %560 = vrot.lane.b32.xlu0 %v537, 96
      %v561 = vpop.permute.xlu0 %560
      %563 = vrot.lane.b32.xlu0 %v537, 64
      %v564 = vpop.permute.xlu0 %563
      %v566 = vld [vmem:[%s4] sm:$0xf]
      %v567 = vld [vmem:[%s4 + $0x4] sm:$0xf]
      %v568 = vld [vmem:[%s4 + $0x8] sm:$0xf]
      %v569 = vld [vmem:[%s4 + $0xc] sm:$0xf]
      %v570 = vld [vmem:[%s4 + $0x10] sm:$0xf]
      %v571 = vld [vmem:[%s4 + $0x14] sm:$0xf]
      %v572 = vld [vmem:[%s4 + $0x18] sm:$0xf]
      %v573 = vld [vmem:[%s4 + $0x1c] sm:$0xf]
      %v574 = vpack.c.bf16 %v551, %v535
      %v575 = vpack.c.bf16 %v557, %v554
      %v576 = vpack.c.bf16 %v561, %v537
      %v577 = vpack.c.bf16 %v564, %v564
      %v578 = vld [vmem:[%s5] sm:$0xff]
      %v579 = vld [vmem:[%s5 + $0x8] sm:$0xff]
      %v580 = vld [vmem:[%s5 + $0x10] sm:$0xff]
      %v581 = vld [vmem:[%s5 + $0x18] sm:$0xff]
      %v582 = vld [vmem:[%s5 + $0x20] sm:$0xff]
      %v583 = vld [vmem:[%s5 + $0x28] sm:$0xff]
      %v584 = vld [vmem:[%s5 + $0x30] sm:$0xff]
      %v585 = vld [vmem:[%s5 + $0x38] sm:$0xff]
      %587 = vset.pattern.permute.xlu0 0
      %588 = vperm.xlu0 %587, %v578
      %v589 = vpop.permute.xlu0 %588
      %592 = vset.pattern.permute.xlu0 0
      %593 = vperm.xlu0 %592, %v579
      %v594 = vpop.permute.xlu0 %593
      %597 = vset.pattern.permute.xlu0 0
      %598 = vperm.xlu0 %597, %v580
      %v599 = vpop.permute.xlu0 %598
      %602 = vset.pattern.permute.xlu0 0
      %603 = vperm.xlu0 %602, %v581
      %v604 = vpop.permute.xlu0 %603
      %607 = vset.pattern.permute.xlu0 0
      %608 = vperm.xlu0 %607, %v582
      %v609 = vpop.permute.xlu0 %608
      %612 = vset.pattern.permute.xlu0 0
      %613 = vperm.xlu0 %612, %v583
      %v614 = vpop.permute.xlu0 %613
      %617 = vset.pattern.permute.xlu0 0
      %618 = vperm.xlu0 %617, %v584
      %v619 = vpop.permute.xlu0 %618
      %622 = vset.pattern.permute.xlu0 0
      %623 = vperm.xlu0 %622, %v585
      %v624 = vpop.permute.xlu0 %623
      %v634 = vunpack.c.l.b16 %v566
      %v635 = vunpack.c.l.b16 %v567
      %v636 = vunpack.c.l.b16 %v568
      %v637 = vunpack.c.l.b16 %v569
      %v638 = vunpack.c.l.b16 %v570
      %v639 = vunpack.c.l.b16 %v571
      %v640 = vunpack.c.l.b16 %v572
      %v641 = vunpack.c.l.b16 %v573
      %v642 = vpack.c.b16 %v635, %v634
      %v643 = vpack.c.b16 %v637, %v636
      %v644 = vpack.c.b16 %v639, %v638
      %v645 = vpack.c.b16 %v641, %v640
      %vm646 = vcmask 457728
      %v648 = vsel %vm646, %v642, 0
      %v651 = vsel %vm646, %v643, 0
      %v654 = vsel %vm646, %v644, 0
      %v657 = vsel %vm646, %v645, 0
      %vm659 = vcmask 1043456
      %v661 = vsel %vm659, %v577, 0
      %663 = vmatprep.subr.bf16.mxu0 0
      %664 = vmatpush1.bf16.msra.mxu0 %v574
      %665 = vmatprep.subr.bf16.mxu0 0
      %666 = vmatpush1.bf16.msra.mxu0 %v575
      %667 = vmatprep.subr.bf16.mxu0 0
      %668 = vmatpush1.bf16.msra.mxu0 %v576
      %669 = vmatprep.subr.bf16.mxu0 0
      %670 = vmatpush1.bf16.msra.mxu0 %v661
      %671 = vmatprep.subr.bf16.mxu0 0
      %672 = vmatpush1.bf16.msra.mxu0 0
      %673 = vmatprep.subr.bf16.mxu0 0
      %674 = vmatpush1.bf16.msra.mxu0 0
      %675 = vmatprep.subr.bf16.mxu0 0
      %676 = vmatpush1.bf16.msra.mxu0 0
      %677 = vmatprep.subr.bf16.mxu0 0
      %678 = vmatpush1.bf16.msra.mxu0 0
      %679 = vmatprep.subr.bf16.mxu0 0
      %680 = vmatpush1.bf16.msra.mxu0 0
      %681 = vmatprep.subr.bf16.mxu0 0
      %682 = vmatpush1.bf16.msra.mxu0 0
      %683 = vmatprep.subr.bf16.mxu0 0
      %684 = vmatpush1.bf16.msra.mxu0 0
      %685 = vmatprep.subr.bf16.mxu0 0
      %686 = vmatpush1.bf16.msra.mxu0 0
      %687 = vmatprep.subr.bf16.mxu0 0
      %688 = vmatpush1.bf16.msra.mxu0 0
      %689 = vmatprep.subr.bf16.mxu0 0
      %690 = vmatpush1.bf16.msra.mxu0 0
      %691 = vmatprep.subr.bf16.mxu0 0
      %692 = vmatpush1.bf16.msra.mxu0 0
      %693 = vmatprep.subr.bf16.mxu0 0
      %694 = vmatpush1.bf16.msra.mxu0 0
      %695 = vmatprep.mubr.bf16.mxu0 0
      %696 = vmatmul.mubr.bf16.gmra.mrb[0].mxu0 %v648
      %v697 = vpop.f32.mrb[0].mxu0
      %v698 = vadd.f32 %v589, %v697
      %v699 = vpop.f32.mrb[0].mxu0
      %v700 = vpop.f32.mrb[0].mxu0
      %v701 = vadd.f32 %v594, %v700
      %v702 = vpop.f32.mrb[0].mxu0
      %703 = vmatprep.mubr.bf16.mxu0 0
      %704 = vmatmul.mubr.bf16.gmra.mrb[0].mxu0 %v651
      %v705 = vpop.f32.mrb[0].mxu0
      %v706 = vadd.f32 %v599, %v705
      %v707 = vpop.f32.mrb[0].mxu0
      %v708 = vpop.f32.mrb[0].mxu0
      %v709 = vadd.f32 %v604, %v708
      %v710 = vpop.f32.mrb[0].mxu0
      %711 = vmatprep.mubr.bf16.mxu0 0
      %712 = vmatmul.mubr.bf16.gmra.mrb[0].mxu0 %v654
      %v713 = vpop.f32.mrb[0].mxu0
      %v714 = vadd.f32 %v609, %v713
      %v715 = vpop.f32.mrb[0].mxu0
      %v716 = vpop.f32.mrb[0].mxu0
      %v717 = vadd.f32 %v614, %v716
      %v718 = vpop.f32.mrb[0].mxu0
      %719 = vmatprep.mubr.bf16.mxu0 0
      %720 = vmatmul.mubr.bf16.gmra.mrb[0].mxu0 %v657
      %v721 = vpop.f32.mrb[0].mxu0
      %v722 = vadd.f32 %v619, %v721
      %v723 = vpop.f32.mrb[0].mxu0
      %v724 = vpop.f32.mrb[0].mxu0
      %v725 = vadd.f32 %v624, %v724
      %v726 = vpop.f32.mrb[0].mxu0
      %727 = vdwg.mxu0
      %v728 = vtanh.pop %v698
      %v729 = vtanh.pop %v701
      %v730 = vtanh.pop %v706
      %v731 = vtanh.pop %v709
      %v732 = vxor.u32 %v714, 2147483648
      %v733 = vxor.u32 %v717, 2147483648
      %v734 = vxor.u32 %v722, 2147483648
      %v735 = vxor.u32 %v725, 2147483648
      %v736 = vmul.f32 %v732, 1.442695
      %v737 = vpow.pop %v736
      %v738 = vmul.f32 %v733, 1.442695
      %v739 = vpow.pop %v738
      %v740 = vmul.f32 %v734, 1.442695
      %v741 = vpow.pop %v740
      %v742 = vmul.f32 %v735, 1.442695
      %v743 = vpow.pop %v742
      %v744 = vadd.f32 %v737, 1.0
      %v745 = vadd.f32 %v739, 1.0
      %v746 = vadd.f32 %v741, 1.0
      %v747 = vadd.f32 %v743, 1.0
      %v748 = vrcp.pop %v744
      %v749 = vmul.f32 1.0, %v748
      %v750 = vrcp.pop %v745
      %v751 = vmul.f32 1.0, %v750
      %v752 = vrcp.pop %v746
      %v753 = vmul.f32 1.0, %v752
      %v754 = vrcp.pop %v747
      %v755 = vmul.f32 1.0, %v754
      %v756 = vmul.f32 %v728, %v749
      %v757 = vmul.f32 %v729, %v751
      %v758 = vmul.f32 %v730, %v753
      %v759 = vmul.f32 %v731, %v755
      %v760 = vld [vmem:[%s6] sm:$0xf]
      %v761 = vld [vmem:[%s6 + $0x4] sm:$0xf]
      %v762 = vpack.c.bf16 %v756, %v756
      %v763 = vld [vmem:[%s7] sm:$0xff]
      %v764 = vld [vmem:[%s7 + $0x8] sm:$0xff]
      %766 = vset.pattern.permute.xlu0 0
      %767 = vperm.xlu0 %766, %v763
      %v768 = vpop.permute.xlu0 %767
      %771 = vset.pattern.permute.xlu0 0
      %772 = vperm.xlu0 %771, %v764
      %v773 = vpop.permute.xlu0 %772
      %v777 = vunpack.c.l.b16 %v760
      %v778 = vunpack.c.l.b16 %v761
      %v779 = vpack.c.b16 %v778, %v777
      %vm780 = vcmask 64512
      %v782 = vsel %vm780, %v779, 0
      %v785 = vsel %vm659, %v762, 0
      %787 = vmatprep.subr.bf16.mxu0 0
      %788 = vmatpush1.bf16.msra.mxu0 %v785
      %789 = vmatprep.subr.bf16.mxu0 0
      %790 = vmatpush1.bf16.msra.mxu0 0
      %791 = vmatprep.subr.bf16.mxu0 0
      %792 = vmatpush1.bf16.msra.mxu0 0
      %793 = vmatprep.subr.bf16.mxu0 0
      %794 = vmatpush1.bf16.msra.mxu0 0
      %795 = vmatprep.subr.bf16.mxu0 0
      %796 = vmatpush1.bf16.msra.mxu0 0
      %797 = vmatprep.subr.bf16.mxu0 0
      %798 = vmatpush1.bf16.msra.mxu0 0
      %799 = vmatprep.subr.bf16.mxu0 0
      %800 = vmatpush1.bf16.msra.mxu0 0
      %801 = vmatprep.subr.bf16.mxu0 0
      %802 = vmatpush1.bf16.msra.mxu0 0
      %803 = vmatprep.subr.bf16.mxu0 0
      %804 = vmatpush1.bf16.msra.mxu0 0
      %805 = vmatprep.subr.bf16.mxu0 0
      %806 = vmatpush1.bf16.msra.mxu0 0
      %807 = vmatprep.subr.bf16.mxu0 0
      %808 = vmatpush1.bf16.msra.mxu0 0
      %809 = vmatprep.subr.bf16.mxu0 0
      %810 = vmatpush1.bf16.msra.mxu0 0
      %811 = vmatprep.subr.bf16.mxu0 0
      %812 = vmatpush1.bf16.msra.mxu0 0
      %813 = vmatprep.subr.bf16.mxu0 0
      %814 = vmatpush1.bf16.msra.mxu0 0
      %815 = vmatprep.subr.bf16.mxu0 0
      %816 = vmatpush1.bf16.msra.mxu0 0
      %817 = vmatprep.subr.bf16.mxu0 0
      %818 = vmatpush1.bf16.msra.mxu0 0
      %819 = vmatprep.mubr.bf16.mxu0 0
      %820 = vmatmul.mubr.bf16.gmra.mrb[0].mxu0 %v782
      %v821 = vpop.f32.mrb[0].mxu0
      %v822 = vadd.f32 %v768, %v821
      %v823 = vpop.f32.mrb[0].mxu0
      %v824 = vpop.f32.mrb[0].mxu0
      %v825 = vadd.f32 %v773, %v824
      %v826 = vpop.f32.mrb[0].mxu0
      %827 = vdwg.mxu0
      %v828 = vadd.f32 %v822, %v542
      %v829 = vadd.f32 %v825, %v547
      %vm830 = vcmask 261120
      %831 = vst.msk [vmem:[%s441] sm:$0xff] %vm830, %v828
      %832 = vst.msk [vmem:[%s441 + $0x8] sm:$0xff] %vm830, %v829
      %v833 = vld [vmem:[%s3] sm:$0xff]
      %v834 = vld [vmem:[%s3 + $0x8] sm:$0xff]
      %v835 = vld [vmem:[%s3 + $0x10] sm:$0xff]
      %v836 = vld [vmem:[%s3 + $0x18] sm:$0xff]
      %v838 = vsel %vm830, %v756, 0
      %v841 = vsel %vm830, %v757, 0
      %v844 = vsel %vm830, %v758, 0
      %v847 = vsel %vm830, %v759, 0
      %849 = vmatprep.subr.mxu0 0.0
      %850 = vmatpush1.msra.mxu0 %v833
      %851 = vmatprep.subr.mxu0 0.0
      %852 = vmatpush1.msra.mxu0 %v834
      %853 = vmatprep.subr.mxu0 0.0
      %854 = vmatpush1.msra.mxu0 %v835
      %855 = vmatprep.subr.mxu0 0.0
      %856 = vmatpush1.msra.mxu0 %v836
      %857 = vmatprep.subr.mxu0 0.0
      %858 = vmatpush1.msra.mxu0 0.0
      %859 = vmatprep.subr.mxu0 0.0
      %860 = vmatpush1.msra.mxu0 0.0
      %861 = vmatprep.subr.mxu0 0.0
      %862 = vmatpush1.msra.mxu0 0.0
      %863 = vmatprep.subr.mxu0 0.0
      %864 = vmatpush1.msra.mxu0 0.0
      %865 = vmatprep.subr.mxu0 0.0
      %866 = vmatpush1.msra.mxu0 0.0
      %867 = vmatprep.subr.mxu0 0.0
      %868 = vmatpush1.msra.mxu0 0.0
      %869 = vmatprep.subr.mxu0 0.0
      %870 = vmatpush1.msra.mxu0 0.0
      %871 = vmatprep.subr.mxu0 0.0
      %872 = vmatpush1.msra.mxu0 0.0
      %873 = vmatprep.subr.mxu0 0.0
      %874 = vmatpush1.msra.mxu0 0.0
      %875 = vmatprep.subr.mxu0 0.0
      %876 = vmatpush1.msra.mxu0 0.0
      %877 = vmatprep.subr.mxu0 0.0
      %878 = vmatpush1.msra.mxu0 0.0
      %879 = vmatprep.subr.mxu0 0.0
      %880 = vmatpush1.msra.mxu0 0.0
      %881 = vmatprep.subr.mxu0 0.0
      %882 = vmatpush1.msra.mxu0 0.0
      %883 = vmatprep.subr.mxu0 0.0
      %884 = vmatpush1.msra.mxu0 0.0
      %885 = vmatprep.subr.mxu0 0.0
      %886 = vmatpush1.msra.mxu0 0.0
      %887 = vmatprep.subr.mxu0 0.0
      %888 = vmatpush1.msra.mxu0 0.0
      %889 = vmatprep.subr.mxu0 0.0
      %890 = vmatpush1.msra.mxu0 0.0
      %891 = vmatprep.subr.mxu0 0.0
      %892 = vmatpush1.msra.mxu0 0.0
      %893 = vmatprep.subr.mxu0 0.0
      %894 = vmatpush1.msra.mxu0 0.0
      %895 = vmatprep.subr.mxu0 0.0
      %896 = vmatpush1.msra.mxu0 0.0
      %897 = vmatprep.subr.mxu0 0.0
      %898 = vmatpush1.msra.mxu0 0.0
      %899 = vmatprep.subr.mxu0 0.0
      %900 = vmatpush1.msra.mxu0 0.0
      %901 = vmatprep.subr.mxu0 0.0
      %902 = vmatpush1.msra.mxu0 0.0
      %903 = vmatprep.subr.mxu0 0.0
      %904 = vmatpush1.msra.mxu0 0.0
      %905 = vmatprep.subr.mxu0 0.0
      %906 = vmatpush1.msra.mxu0 0.0
      %907 = vmatprep.subr.mxu0 0.0
      %908 = vmatpush1.msra.mxu0 0.0
      %909 = vmatprep.subr.mxu0 0.0
      %910 = vmatpush1.msra.mxu0 0.0
      %911 = vmatprep.subr.mxu0 0.0
      %912 = vmatpush1.msra.mxu0 0.0
      %913 = vmatprep.mubr.f32.mxu0 0.0
      %914 = vmatmul.mubr.f32.gmra.mrb[0].mxu0 %v838
      %v915 = vpop.f32.mrb[0].mxu0
      %v916 = vadd.f32 0.0, %v915
      %v917 = vpop.f32.mrb[0].mxu0
      %918 = vmatprep.mubr.f32.mxu0 0.0
      %919 = vmatmul.mubr.f32.gmra.mrb[0].mxu0 %v841
      %v920 = vpop.f32.mrb[0].mxu0
      %v921 = vadd.f32 0.0, %v920
      %v922 = vpop.f32.mrb[0].mxu0
      %923 = vmatprep.mubr.f32.mxu0 0.0
      %924 = vmatmul.mubr.f32.gmra.mrb[0].mxu0 %v844
      %v925 = vpop.f32.mrb[0].mxu0
      %v926 = vadd.f32 0.0, %v925
      %v927 = vpop.f32.mrb[0].mxu0
      %928 = vmatprep.mubr.f32.mxu0 0.0
      %929 = vmatmul.mubr.f32.gmra.mrb[0].mxu0 %v847
      %v930 = vpop.f32.mrb[0].mxu0
      %v931 = vadd.f32 0.0, %v930
      %v932 = vpop.f32.mrb[0].mxu0
      %933 = vdwg.mxu0
      %938 = vrot.lane.b32.xlu0 %v916, 96
      %v939 = vpop.permute.xlu0 %938
      %940 = vrot.lane.b32.xlu0 %v921, 96
      %v941 = vpop.permute.xlu0 %940
      %942 = vrot.lane.b32.xlu0 %v926, 96
      %v943 = vpop.permute.xlu0 %942
      %944 = vrot.lane.b32.xlu0 %v931, 96
      %v945 = vpop.permute.xlu0 %944
      %v950 = vld [vmem:[%s8] sm:$0xf]
      %v951 = vpack.c.bf16 %v757, %v756
      %v952 = vpack.c.bf16 %v759, %v758
      %v953 = vpack.c.bf16 %v921, %v916
      %v954 = vpack.c.bf16 %v931, %v926
      %v955 = vpack.c.bf16 %v941, %v939
      %v956 = vpack.c.bf16 %v945, %v943
      %vm957 = vcmask 785408
      %v959 = vsel %vm957, %v950, 0
      %961 = vmatprep.subr.bf16.mxu0 0
      %962 = vmatpush1.bf16.msra.mxu0 %v951
      %963 = vmatprep.subr.bf16.mxu0 0
      %964 = vmatpush1.bf16.msra.mxu0 %v952
      %965 = vmatprep.subr.bf16.mxu0 0
      %966 = vmatpush1.bf16.msra.mxu0 %v953
      %967 = vmatprep.subr.bf16.mxu0 0
      %968 = vmatpush1.bf16.msra.mxu0 %v954
      %969 = vmatprep.subr.bf16.mxu0 0
      %970 = vmatpush1.bf16.msra.mxu0 %v955
      %971 = vmatprep.subr.bf16.mxu0 0
      %972 = vmatpush1.bf16.msra.mxu0 %v956
      %973 = vmatprep.subr.bf16.mxu0 0
      %974 = vmatpush1.bf16.msra.mxu0 0
      %975 = vmatprep.subr.bf16.mxu0 0
      %976 = vmatpush1.bf16.msra.mxu0 0
      %977 = vmatprep.subr.bf16.mxu0 0
      %978 = vmatpush1.bf16.msra.mxu0 0
      %979 = vmatprep.subr.bf16.mxu0 0
      %980 = vmatpush1.bf16.msra.mxu0 0
      %981 = vmatprep.subr.bf16.mxu0 0
      %982 = vmatpush1.bf16.msra.mxu0 0
      %983 = vmatprep.subr.bf16.mxu0 0
      %984 = vmatpush1.bf16.msra.mxu0 0
      %985 = vmatprep.subr.bf16.mxu0 0
      %986 = vmatpush1.bf16.msra.mxu0 0
      %987 = vmatprep.subr.bf16.mxu0 0
      %988 = vmatpush1.bf16.msra.mxu0 0
      %989 = vmatprep.subr.bf16.mxu0 0
      %990 = vmatpush1.bf16.msra.mxu0 0
      %991 = vmatprep.subr.bf16.mxu0 0
      %992 = vmatpush1.bf16.msra.mxu0 0
      %993 = vmatprep.mubr.bf16.mxu0 0
      %994 = vmatmul.mubr.bf16.gmra.mrb[0].mxu0 %v959
      %v995 = vpop.f32.mrb[0].mxu0
      %v996 = vadd.f32 %v537, %v995
      %v997 = vpop.f32.mrb[0].mxu0
      %v998 = vpop.f32.mrb[0].mxu0
      %v999 = vpop.f32.mrb[0].mxu0
      %1000 = vdwg.mxu0
      %v1001 = vld [vmem:[%s9] sm:$0xff]
      %1003 = vset.pattern.permute.xlu0 0
      %1004 = vperm.xlu0 %1003, %v1001
      %v1005 = vpop.permute.xlu0 %1004
      %v1007 = vmul.f32 %v996, %v1005
      %v1008 = vld [vmem:[%s10] sm:$0xff]
      %1010 = vset.pattern.permute.xlu0 0
      %1011 = vperm.xlu0 %1010, %v1008
      %v1012 = vpop.permute.xlu0 %1011
      %v1014 = vadd.f32 %v1007, %v1012
      %1015 = vst.msk [vmem:[%s436] sm:$0xff] %vm830, %v1014
      %p1016 = scmp.lt.s32.totalorder %s24, 1
      %s1017 = scalar_select %p1016, %s24, 1
      %s1018 = smul.addr %s1017, 8
      %s1019 = scalar_lea.vmem %s11, %s1018
      %p1020 = scmp.lt.s32.totalorder %s24, 1
      %s1021 = scalar_select %p1020, %s24, 1
      %s1022 = smul.addr %s1021, 2
      %s1023 = smul.addr %s1022, 8
      %s1024 = scalar_lea.vmem %s12, %s1023
      // Predicated region
      $region65: #{predictor_forward.8} parent=63 // pred_check
        %p1025 = pneg %p283
      $region66: #{predictor_forward.8} parent=63 // pred_check_branch
        %1027 = sbr.rel (%p1025) target = $region68
      $region67: #{predictor_forward.8} parent=63 // pred_region
        _
      $region68: #{predictor_forward.8} parent=63 // pred_fallthru
        _
      // Predicated region
      $region69: #{predictor_forward.8} parent=63 // pred_check
        %p1028 = pneg %p309
      $region70: #{predictor_forward.8} parent=63 // pred_check_branch
        %1030 = sbr.rel (%p1028) target = $region72
      $region71: #{predictor_forward.8} parent=63 // pred_region
        _
      $region72: #{predictor_forward.8} parent=63 // pred_fallthru
        _
    $region64: #{predictor_forward.8} parent=5 // pred_fallthru
      _
    %p1031 = scmp.le.s32.totalorder 2, %s19
    // Predicated region
    $region73: #{predictor_forward.8} parent=5 // pred_check
      %p1032 = pneg %p1031
    $region74: #{predictor_forward.8} parent=5 // pred_check_branch
      %1034 = sbr.rel (%p1032) target = $region76
    $region75: #{predictor_forward.8} parent=5 // pred_region
      %s1035 = ssub.s32 %s19, 2
      // Predicated region
      $region77: #{predictor_forward.8} parent=75 // pred_check
        %p1036 = pneg %p289
      $region78: #{predictor_forward.8} parent=75 // pred_check_branch
        %1038 = sbr.rel (%p1036) target = $region80
      $region79: #{predictor_forward.8} parent=75 // pred_region
        %p1039 = scmp.lt.s32.totalorder %s25, 1
        %s1040 = scalar_select %p1039, %s25, 1
        %s1041 = smul.addr %s1040, 8
        %s1042 = scalar_lea.vmem %s11, %s1041
      $region80: #{predictor_forward.8} parent=75 // pred_fallthru
        _
      // Predicated region
      $region81: #{predictor_forward.8} parent=75 // pred_check
        %p1043 = pneg %p315
      $region82: #{predictor_forward.8} parent=75 // pred_check_branch
        %1045 = sbr.rel (%p1043) target = $region84
      $region83: #{predictor_forward.8} parent=75 // pred_region
        %p1046 = scmp.lt.s32.totalorder %s25, 1
        %s1047 = scalar_select %p1046, %s25, 1
        %s1048 = smul.addr %s1047, 2
        %s1049 = smul.addr %s1048, 8
        %s1050 = scalar_lea.vmem %s12, %s1049
      $region84: #{predictor_forward.8} parent=75 // pred_fallthru
        _
    $region76: #{predictor_forward.8} parent=5 // pred_fallthru
      _
  $region6: #{predictor_forward.8} parent=0 // loop_footer
    %s23 = sadd.s32 1, %s19
  $region7: #{predictor_forward.8} parent=0 // loop_footer_branch
    %18 = sbr.rel target = $region3
  $region8: #{predictor_forward.8} parent=0 // loop_exit
    _

// kernel: predictor_forward.9
$region0: #{predictor_forward.9}
  #allocation0 [shape = 'u32[]', space=smem, size = 0x4, offset = 0x4, fixed_abs, tag = 'smem constant byte address 0x4 - core index']
  #allocation1 [shape = 'u32[144,128]{1,0:T(1,128)}', space=vmem, size = 0x12000, scoped, tag = 'internal scratch']
  %s0 = inlined_call_operand.vmem [shape: f32[2,8,32], index: 0, kind: input, shape index: {}]
  %s1 = inlined_call_operand.vmem [shape: f32[2,16,32], index: 1, kind: input, shape index: {}]
  %s2 = inlined_call_operand.vmem [shape: f32[32,168], index: 2, kind: input, shape index: {}]
  %s3 = inlined_call_operand.vmem [shape: f32[24,48], index: 3, kind: input, shape index: {}]
  %s4 = inlined_call_operand.vmem [shape: bf16[64,56], index: 4, kind: input, shape index: {}]
  %s5 = inlined_call_operand.vmem [shape: f32[64,1], index: 5, kind: input, shape index: {}]
  %s6 = inlined_call_operand.vmem [shape: bf16[16,8], index: 6, kind: input, shape index: {}]
  %s7 = inlined_call_operand.vmem [shape: f32[16,1], index: 7, kind: input, shape index: {}]
  %s8 = inlined_call_operand.vmem [shape: bf16[8,96], index: 8, kind: input, shape index: {}]
  %s9 = inlined_call_operand.vmem [shape: f32[8,1], index: 9, kind: input, shape index: {}]
  %s10 = inlined_call_operand.vmem [shape: f32[8,1], index: 10, kind: input, shape index: {}]
  %s11 = inlined_call_operand.vmem [shape: f32[2,8,24], index: 11, kind: output, shape index: {0}]
  %s12 = inlined_call_operand.vmem [shape: f32[2,16,24], index: 12, kind: output, shape index: {1}]
  %13 = xla_tuple %s11, %s12
  %s14 = sld [smem:[#allocation0]]
  $region85: #{predictor_forward.9} parent=0
    _
  %s16 = ssub.s32 1, %s14
  %s17 = scalar_select 0, %s16, %s14
  loop: start=0, step=1, limit=4
  $region2: #{predictor_forward.9} parent=0 // loop_pre_header
    _
  $region3: #{predictor_forward.9} parent=0 // loop_header
    %s19 = sphi 0, %s23
    %p20 = scmp.ge.s32.totalorder %s19, 4
    %s29 = sphi 0, %s31
    %s32 = sphi 0, %s29
    %s33 = sphi 0, %s32
    %s49 = sphi 0, %s33
    %s55 = sphi 0, %s57
    %s58 = sphi 0, %s55
    %s59 = sphi 0, %s58
    %s75 = sphi 0, %s59
    %s79 = sphi 0, %s79
    %s81 = sphi 0, %s79
    %s82 = sphi 0, %s81
    %s96 = sphi 0, %s82
    %s100 = sphi 0, %s100
    %s102 = sphi 0, %s100
    %s103 = sphi 0, %s102
    %s117 = sphi 0, %s103
    %s121 = sphi 0, %s121
    %s123 = sphi 0, %s121
    %s124 = sphi 0, %s123
    %s138 = sphi 0, %s124
    %s142 = sphi 0, %s142
    %s144 = sphi 0, %s142
    %s145 = sphi 0, %s144
    %s159 = sphi 0, %s145
    %s163 = sphi 0, %s163
    %s165 = sphi 0, %s163
    %s166 = sphi 0, %s165
    %s180 = sphi 0, %s166
    %s184 = sphi 0, %s184
    %s186 = sphi 0, %s184
    %s187 = sphi 0, %s186
    %s201 = sphi 0, %s187
    %s205 = sphi 0, %s205
    %s207 = sphi 0, %s205
    %s208 = sphi 0, %s207
    %s222 = sphi 0, %s208
    %s226 = sphi 0, %s226
    %s228 = sphi 0, %s226
    %s229 = sphi 0, %s228
    %s243 = sphi 0, %s229
    %s247 = sphi 0, %s247
    %s249 = sphi 0, %s247
    %s250 = sphi 0, %s249
    %s264 = sphi 0, %s250
    %s270 = sphi 0, %s272
    %s273 = sphi 0, %s270
    %s274 = sphi 0, %s273
    %s290 = sphi 0, %s274
    %s296 = sphi 0, %s298
    %s299 = sphi 0, %s296
    %s300 = sphi 0, %s299
    %s316 = sphi 0, %s300
  $region4: #{predictor_forward.9} parent=0 // loop_header_branch
    %22 = sbr.rel (%p20) target = $region8
  $region5: #{predictor_forward.9} parent=0 // loop_body
    %s24 = ssub.s32 %s19, 1
    %s25 = ssub.s32 %s19, 2
    %s26 = sadd.s32 %s19, 1
    %s27 = ssub.s32 %s19, %s26
    %p28 = scmp.eq.s32.totalorder %s27, 0
    %s30 = sadd.s32 %s29, 1
    %s31 = scalar_select %p28, %s29, %s30
    %p34 = pneg %p28
    %p35 = scmp.eq.s32.totalorder %s19, 1
    %p36 = por %p34, %p35
    %p37 = scmp.ne.s32.totalorder %s29, %s32
    %p38 = scmp.eq.s32.totalorder %s19, 0
    %p39 = por %p37, %p38
    %p40 = scmp.ne.s32.totalorder %s29, %s32
    %p41 = scmp.eq.s32.totalorder %s24, 1
    %p42 = por %p40, %p41
    %p43 = scmp.ne.s32.totalorder %s32, %s33
    %p44 = scmp.eq.s32.totalorder %s24, 0
    %p45 = por %p43, %p44
    %p46 = scmp.ne.s32.totalorder %s32, %s33
    %p47 = scmp.eq.s32.totalorder %s25, 1
    %p48 = por %p46, %p47
    %p50 = scmp.ne.s32.totalorder %s33, %s49
    %p51 = scmp.eq.s32.totalorder %s25, 0
    %p52 = por %p50, %p51
    %s53 = ssub.s32 %s19, %s26
    %p54 = scmp.eq.s32.totalorder %s53, 0
    %s56 = sadd.s32 %s55, 1
    %s57 = scalar_select %p54, %s55, %s56
    %p60 = pneg %p54
    %p61 = scmp.eq.s32.totalorder %s19, 1
    %p62 = por %p60, %p61
    %p63 = scmp.ne.s32.totalorder %s55, %s58
    %p64 = scmp.eq.s32.totalorder %s19, 0
    %p65 = por %p63, %p64
    %p66 = scmp.ne.s32.totalorder %s55, %s58
    %p67 = scmp.eq.s32.totalorder %s24, 1
    %p68 = por %p66, %p67
    %p69 = scmp.ne.s32.totalorder %s58, %s59
    %p70 = scmp.eq.s32.totalorder %s24, 0
    %p71 = por %p69, %p70
    %p72 = scmp.ne.s32.totalorder %s58, %s59
    %p73 = scmp.eq.s32.totalorder %s25, 1
    %p74 = por %p72, %p73
    %p76 = scmp.ne.s32.totalorder %s59, %s75
    %p77 = scmp.eq.s32.totalorder %s25, 0
    %p78 = por %p76, %p77
    %s80 = sadd.s32 %s79, 1
    %p83 = scmp.eq.s32.totalorder %s19, 1
    %p84 = scmp.ne.s32.totalorder %s79, %s81
    %p85 = scmp.eq.s32.totalorder %s19, 0
    %p86 = por %p84, %p85
    %p87 = scmp.ne.s32.totalorder %s79, %s81
    %p88 = scmp.eq.s32.totalorder %s24, 1
    %p89 = por %p87, %p88
    %p90 = scmp.ne.s32.totalorder %s81, %s82
    %p91 = scmp.eq.s32.totalorder %s24, 0
    %p92 = por %p90, %p91
    %p93 = scmp.ne.s32.totalorder %s81, %s82
    %p94 = scmp.eq.s32.totalorder %s25, 1
    %p95 = por %p93, %p94
    %p97 = scmp.ne.s32.totalorder %s82, %s96
    %p98 = scmp.eq.s32.totalorder %s25, 0
    %p99 = por %p97, %p98
    %s101 = sadd.s32 %s100, 1
    %p104 = scmp.eq.s32.totalorder %s19, 1
    %p105 = scmp.ne.s32.totalorder %s100, %s102
    %p106 = scmp.eq.s32.totalorder %s19, 0
    %p107 = por %p105, %p106
    %p108 = scmp.ne.s32.totalorder %s100, %s102
    %p109 = scmp.eq.s32.totalorder %s24, 1
    %p110 = por %p108, %p109
    %p111 = scmp.ne.s32.totalorder %s102, %s103
    %p112 = scmp.eq.s32.totalorder %s24, 0
    %p113 = por %p111, %p112
    %p114 = scmp.ne.s32.totalorder %s102, %s103
    %p115 = scmp.eq.s32.totalorder %s25, 1
    %p116 = por %p114, %p115
    %p118 = scmp.ne.s32.totalorder %s103, %s117
    %p119 = scmp.eq.s32.totalorder %s25, 0
    %p120 = por %p118, %p119
    %s122 = sadd.s32 %s121, 1
    %p125 = scmp.eq.s32.totalorder %s19, 1
    %p126 = scmp.ne.s32.totalorder %s121, %s123
    %p127 = scmp.eq.s32.totalorder %s19, 0
    %p128 = por %p126, %p127
    %p129 = scmp.ne.s32.totalorder %s121, %s123
    %p130 = scmp.eq.s32.totalorder %s24, 1
    %p131 = por %p129, %p130
    %p132 = scmp.ne.s32.totalorder %s123, %s124
    %p133 = scmp.eq.s32.totalorder %s24, 0
    %p134 = por %p132, %p133
    %p135 = scmp.ne.s32.totalorder %s123, %s124
    %p136 = scmp.eq.s32.totalorder %s25, 1
    %p137 = por %p135, %p136
    %p139 = scmp.ne.s32.totalorder %s124, %s138
    %p140 = scmp.eq.s32.totalorder %s25, 0
    %p141 = por %p139, %p140
    %s143 = sadd.s32 %s142, 1
    %p146 = scmp.eq.s32.totalorder %s19, 1
    %p147 = scmp.ne.s32.totalorder %s142, %s144
    %p148 = scmp.eq.s32.totalorder %s19, 0
    %p149 = por %p147, %p148
    %p150 = scmp.ne.s32.totalorder %s142, %s144
    %p151 = scmp.eq.s32.totalorder %s24, 1
    %p152 = por %p150, %p151
    %p153 = scmp.ne.s32.totalorder %s144, %s145
    %p154 = scmp.eq.s32.totalorder %s24, 0
    %p155 = por %p153, %p154
    %p156 = scmp.ne.s32.totalorder %s144, %s145
    %p157 = scmp.eq.s32.totalorder %s25, 1
    %p158 = por %p156, %p157
    %p160 = scmp.ne.s32.totalorder %s145, %s159
    %p161 = scmp.eq.s32.totalorder %s25, 0
    %p162 = por %p160, %p161
    %s164 = sadd.s32 %s163, 1
    %p167 = scmp.eq.s32.totalorder %s19, 1
    %p168 = scmp.ne.s32.totalorder %s163, %s165
    %p169 = scmp.eq.s32.totalorder %s19, 0
    %p170 = por %p168, %p169
    %p171 = scmp.ne.s32.totalorder %s163, %s165
    %p172 = scmp.eq.s32.totalorder %s24, 1
    %p173 = por %p171, %p172
    %p174 = scmp.ne.s32.totalorder %s165, %s166
    %p175 = scmp.eq.s32.totalorder %s24, 0
    %p176 = por %p174, %p175
    %p177 = scmp.ne.s32.totalorder %s165, %s166
    %p178 = scmp.eq.s32.totalorder %s25, 1
    %p179 = por %p177, %p178
    %p181 = scmp.ne.s32.totalorder %s166, %s180
    %p182 = scmp.eq.s32.totalorder %s25, 0
    %p183 = por %p181, %p182
    %s185 = sadd.s32 %s184, 1
    %p188 = scmp.eq.s32.totalorder %s19, 1
    %p189 = scmp.ne.s32.totalorder %s184, %s186
    %p190 = scmp.eq.s32.totalorder %s19, 0
    %p191 = por %p189, %p190
    %p192 = scmp.ne.s32.totalorder %s184, %s186
    %p193 = scmp.eq.s32.totalorder %s24, 1
    %p194 = por %p192, %p193
    %p195 = scmp.ne.s32.totalorder %s186, %s187
    %p196 = scmp.eq.s32.totalorder %s24, 0
    %p197 = por %p195, %p196
    %p198 = scmp.ne.s32.totalorder %s186, %s187
    %p199 = scmp.eq.s32.totalorder %s25, 1
    %p200 = por %p198, %p199
    %p202 = scmp.ne.s32.totalorder %s187, %s201
    %p203 = scmp.eq.s32.totalorder %s25, 0
    %p204 = por %p202, %p203
    %s206 = sadd.s32 %s205, 1
    %p209 = scmp.eq.s32.totalorder %s19, 1
    %p210 = scmp.ne.s32.totalorder %s205, %s207
    %p211 = scmp.eq.s32.totalorder %s19, 0
    %p212 = por %p210, %p211
    %p213 = scmp.ne.s32.totalorder %s205, %s207
    %p214 = scmp.eq.s32.totalorder %s24, 1
    %p215 = por %p213, %p214
    %p216 = scmp.ne.s32.totalorder %s207, %s208
    %p217 = scmp.eq.s32.totalorder %s24, 0
    %p218 = por %p216, %p217
    %p219 = scmp.ne.s32.totalorder %s207, %s208
    %p220 = scmp.eq.s32.totalorder %s25, 1
    %p221 = por %p219, %p220
    %p223 = scmp.ne.s32.totalorder %s208, %s222
    %p224 = scmp.eq.s32.totalorder %s25, 0
    %p225 = por %p223, %p224
    %s227 = sadd.s32 %s226, 1
    %p230 = scmp.eq.s32.totalorder %s19, 1
    %p231 = scmp.ne.s32.totalorder %s226, %s228
    %p232 = scmp.eq.s32.totalorder %s19, 0
    %p233 = por %p231, %p232
    %p234 = scmp.ne.s32.totalorder %s226, %s228
    %p235 = scmp.eq.s32.totalorder %s24, 1
    %p236 = por %p234, %p235
    %p237 = scmp.ne.s32.totalorder %s228, %s229
    %p238 = scmp.eq.s32.totalorder %s24, 0
    %p239 = por %p237, %p238
    %p240 = scmp.ne.s32.totalorder %s228, %s229
    %p241 = scmp.eq.s32.totalorder %s25, 1
    %p242 = por %p240, %p241
    %p244 = scmp.ne.s32.totalorder %s229, %s243
    %p245 = scmp.eq.s32.totalorder %s25, 0
    %p246 = por %p244, %p245
    %s248 = sadd.s32 %s247, 1
    %p251 = scmp.eq.s32.totalorder %s19, 1
    %p252 = scmp.ne.s32.totalorder %s247, %s249
    %p253 = scmp.eq.s32.totalorder %s19, 0
    %p254 = por %p252, %p253
    %p255 = scmp.ne.s32.totalorder %s247, %s249
    %p256 = scmp.eq.s32.totalorder %s24, 1
    %p257 = por %p255, %p256
    %p258 = scmp.ne.s32.totalorder %s249, %s250
    %p259 = scmp.eq.s32.totalorder %s24, 0
    %p260 = por %p258, %p259
    %p261 = scmp.ne.s32.totalorder %s249, %s250
    %p262 = scmp.eq.s32.totalorder %s25, 1
    %p263 = por %p261, %p262
    %p265 = scmp.ne.s32.totalorder %s250, %s264
    %p266 = scmp.eq.s32.totalorder %s25, 0
    %p267 = por %p265, %p266
    %s268 = ssub.s32 %s19, %s26
    %p269 = scmp.eq.s32.totalorder %s268, 0
    %s271 = sadd.s32 %s270, 1
    %s272 = scalar_select %p269, %s270, %s271
    %p275 = pneg %p269
    %p276 = scmp.eq.s32.totalorder %s19, 1
    %p277 = por %p275, %p276
    %p278 = scmp.ne.s32.totalorder %s270, %s273
    %p279 = scmp.eq.s32.totalorder %s19, 0
    %p280 = por %p278, %p279
    %p281 = scmp.ne.s32.totalorder %s270, %s273
    %p282 = scmp.eq.s32.totalorder %s24, 1
    %p283 = por %p281, %p282
    %p284 = scmp.ne.s32.totalorder %s273, %s274
    %p285 = scmp.eq.s32.totalorder %s24, 0
    %p286 = por %p284, %p285
    %p287 = scmp.ne.s32.totalorder %s273, %s274
    %p288 = scmp.eq.s32.totalorder %s25, 1
    %p289 = por %p287, %p288
    %p291 = scmp.ne.s32.totalorder %s274, %s290
    %p292 = scmp.eq.s32.totalorder %s25, 0
    %p293 = por %p291, %p292
    %s294 = ssub.s32 %s19, %s26
    %p295 = scmp.eq.s32.totalorder %s294, 0
    %s297 = sadd.s32 %s296, 1
    %s298 = scalar_select %p295, %s296, %s297
    %p301 = pneg %p295
    %p302 = scmp.eq.s32.totalorder %s19, 1
    %p303 = por %p301, %p302
    %p304 = scmp.ne.s32.totalorder %s296, %s299
    %p305 = scmp.eq.s32.totalorder %s19, 0
    %p306 = por %p304, %p305
    %p307 = scmp.ne.s32.totalorder %s296, %s299
    %p308 = scmp.eq.s32.totalorder %s24, 1
    %p309 = por %p307, %p308
    %p310 = scmp.ne.s32.totalorder %s299, %s300
    %p311 = scmp.eq.s32.totalorder %s24, 0
    %p312 = por %p310, %p311
    %p313 = scmp.ne.s32.totalorder %s299, %s300
    %p314 = scmp.eq.s32.totalorder %s25, 1
    %p315 = por %p313, %p314
    %p317 = scmp.ne.s32.totalorder %s300, %s316
    %p318 = scmp.eq.s32.totalorder %s25, 0
    %p319 = por %p317, %p318
    %p320 = scmp.le.s32.totalorder 1, %s19
    %p321 = scmp.lt.s32.totalorder %s19, 3
    %p322 = pnand %p320, %p321
    %p323 = pneg %p322
    // Predicated region
    $region9: #{predictor_forward.9} parent=5 // pred_check
      _
    $region10: #{predictor_forward.9} parent=5 // pred_check_branch
      %325 = sbr.rel (%p322) target = $region12
    $region11: #{predictor_forward.9} parent=5 // pred_region
      %s326 = ssub.s32 %s19, 1
      // Predicated region
      $region13: #{predictor_forward.9} parent=11 // pred_check
        %p327 = pneg %p92
      $region14: #{predictor_forward.9} parent=11 // pred_check_branch
        %329 = sbr.rel (%p327) target = $region16
      $region15: #{predictor_forward.9} parent=11 // pred_region
        _
      $region16: #{predictor_forward.9} parent=11 // pred_fallthru
        _
      // Predicated region
      $region17: #{predictor_forward.9} parent=11 // pred_check
        %p330 = pneg %p113
      $region18: #{predictor_forward.9} parent=11 // pred_check_branch
        %332 = sbr.rel (%p330) target = $region20
      $region19: #{predictor_forward.9} parent=11 // pred_region
        _
      $region20: #{predictor_forward.9} parent=11 // pred_fallthru
        _
      // Predicated region
      $region21: #{predictor_forward.9} parent=11 // pred_check
        %p333 = pneg %p134
      $region22: #{predictor_forward.9} parent=11 // pred_check_branch
        %335 = sbr.rel (%p333) target = $region24
      $region23: #{predictor_forward.9} parent=11 // pred_region
        _
      $region24: #{predictor_forward.9} parent=11 // pred_fallthru
        _
      // Predicated region
      $region25: #{predictor_forward.9} parent=11 // pred_check
        %p336 = pneg %p155
      $region26: #{predictor_forward.9} parent=11 // pred_check_branch
        %338 = sbr.rel (%p336) target = $region28
      $region27: #{predictor_forward.9} parent=11 // pred_region
        _
      $region28: #{predictor_forward.9} parent=11 // pred_fallthru
        _
      // Predicated region
      $region29: #{predictor_forward.9} parent=11 // pred_check
        %p339 = pneg %p176
      $region30: #{predictor_forward.9} parent=11 // pred_check_branch
        %341 = sbr.rel (%p339) target = $region32
      $region31: #{predictor_forward.9} parent=11 // pred_region
        _
      $region32: #{predictor_forward.9} parent=11 // pred_fallthru
        _
      // Predicated region
      $region33: #{predictor_forward.9} parent=11 // pred_check
        %p342 = pneg %p197
      $region34: #{predictor_forward.9} parent=11 // pred_check_branch
        %344 = sbr.rel (%p342) target = $region36
      $region35: #{predictor_forward.9} parent=11 // pred_region
        _
      $region36: #{predictor_forward.9} parent=11 // pred_fallthru
        _
      // Predicated region
      $region37: #{predictor_forward.9} parent=11 // pred_check
        %p345 = pneg %p218
      $region38: #{predictor_forward.9} parent=11 // pred_check_branch
        %347 = sbr.rel (%p345) target = $region40
      $region39: #{predictor_forward.9} parent=11 // pred_region
        _
      $region40: #{predictor_forward.9} parent=11 // pred_fallthru
        _
      // Predicated region
      $region41: #{predictor_forward.9} parent=11 // pred_check
        %p348 = pneg %p239
      $region42: #{predictor_forward.9} parent=11 // pred_check_branch
        %350 = sbr.rel (%p348) target = $region44
      $region43: #{predictor_forward.9} parent=11 // pred_region
        _
      $region44: #{predictor_forward.9} parent=11 // pred_fallthru
        _
      // Predicated region
      $region45: #{predictor_forward.9} parent=11 // pred_check
        %p351 = pneg %p260
      $region46: #{predictor_forward.9} parent=11 // pred_check_branch
        %353 = sbr.rel (%p351) target = $region48
      $region47: #{predictor_forward.9} parent=11 // pred_region
        _
      $region48: #{predictor_forward.9} parent=11 // pred_fallthru
        _
    $region12: #{predictor_forward.9} parent=5 // pred_fallthru
      _
    %p354 = scmp.lt.s32.totalorder %s19, 2
    // Predicated region
    $region49: #{predictor_forward.9} parent=5 // pred_check
      %p355 = pneg %p354
    $region50: #{predictor_forward.9} parent=5 // pred_check_branch
      %357 = sbr.rel (%p355) target = $region52
    $region51: #{predictor_forward.9} parent=5 // pred_region
      // Predicated region
      $region53: #{predictor_forward.9} parent=51 // pred_check
        %p358 = pneg %p39
      $region54: #{predictor_forward.9} parent=51 // pred_check_branch
        %360 = sbr.rel (%p358) target = $region56
      $region55: #{predictor_forward.9} parent=51 // pred_region
        %p361 = scmp.lt.s32.totalorder %s19, 1
        %s362 = scalar_select %p361, %s19, 1
        %s363 = smul.addr %s362, 8
        %s364 = scalar_lea.vmem %s0, %s363
      $region56: #{predictor_forward.9} parent=51 // pred_fallthru
        _
      // Predicated region
      $region57: #{predictor_forward.9} parent=51 // pred_check
        %p365 = pneg %p65
      $region58: #{predictor_forward.9} parent=51 // pred_check_branch
        %367 = sbr.rel (%p365) target = $region60
      $region59: #{predictor_forward.9} parent=51 // pred_region
        %p368 = scmp.lt.s32.totalorder %s19, 1
        %s369 = scalar_select %p368, %s19, 1
        %s370 = smul.addr %s369, 2
        %s371 = smul.addr %s370, 8
        %s372 = scalar_lea.vmem %s1, %s371
      $region60: #{predictor_forward.9} parent=51 // pred_fallthru
        _
    $region52: #{predictor_forward.9} parent=5 // pred_fallthru
      _
    %p373 = scmp.le.s32.totalorder 1, %s19
    %p374 = scmp.lt.s32.totalorder %s19, 3
    %p375 = pnand %p373, %p374
    %p376 = pneg %p375
    // Predicated region
    $region61: #{predictor_forward.9} parent=5 // pred_check
      _
    $region62: #{predictor_forward.9} parent=5 // pred_check_branch
      %378 = sbr.rel (%p375) target = $region64
    $region63: #{predictor_forward.9} parent=5 // pred_region
      %s379 = ssub.s32 %s19, 1
      %p380 = scmp.lt.s32.totalorder %s24, 1
      %s381 = scalar_select %p380, %s24, 1
      %s382 = smul.addr %s381, 8
      %s383 = scalar_lea.vmem %s0, %s382
      %p384 = pneg %p45
      %p385 = pneg %p42
      %p386 = scmp.lt.s32.totalorder %s24, 1
      %s387 = scalar_select %p386, %s24, 1
      %s388 = smul.addr %s387, 2
      %s389 = smul.addr %s388, 8
      %s390 = scalar_lea.vmem %s1, %s389
      %p391 = pneg %p71
      %p392 = pneg %p68
      %p393 = pneg %p92
      %p394 = pneg %p89
      %p395 = pneg %p113
      %p396 = pneg %p110
      %p397 = pneg %p134
      %p398 = pneg %p131
      %p399 = pneg %p155
      %p400 = pneg %p152
      %p401 = pneg %p176
      %p402 = pneg %p173
      %p403 = pneg %p197
      %p404 = pneg %p194
      %p405 = pneg %p218
      %p406 = pneg %p215
      %p407 = pneg %p239
      %p408 = pneg %p236
      %p409 = pneg %p260
      %p410 = pneg %p257
      %p411 = pneg %p286
      %p412 = pneg %p283
      %p413 = scmp.lt.s32.totalorder %s24, 1
      %s414 = scalar_select %p413, %s24, 1
      %s415 = smul.addr %s414, 8
      %s416 = scalar_lea.vmem %s11, %s415
      %p417 = pneg %p312
      %p418 = pneg %p309
      %p419 = scmp.lt.s32.totalorder %s24, 1
      %s420 = scalar_select %p419, %s24, 1
      %s421 = smul.addr %s420, 2
      %s422 = smul.addr %s421, 8
      %s423 = scalar_lea.vmem %s12, %s422
      %p424 = scmp.lt.s32.totalorder %s24, 1
      %s425 = scalar_select %p424, %s24, 1
      %s426 = smul.addr %s425, 8
      %s427 = scalar_lea.vmem %s0, %s426
      %p428 = scmp.lt.s32.totalorder %s24, 1
      %s429 = scalar_select %p428, %s24, 1
      %s430 = smul.addr %s429, 2
      %s431 = smul.addr %s430, 8
      %s432 = scalar_lea.vmem %s1, %s431
      %p433 = scmp.lt.s32.totalorder %s24, 1
      %s434 = scalar_select %p433, %s24, 1
      %s435 = smul.addr %s434, 8
      %s436 = scalar_lea.vmem %s11, %s435
      %p437 = scmp.lt.s32.totalorder %s24, 1
      %s438 = scalar_select %p437, %s24, 1
      %s439 = smul.addr %s438, 2
      %s440 = smul.addr %s439, 8
      %s441 = scalar_lea.vmem %s12, %s440
      %v443 = vld [vmem:[%s427] sm:$0xff]
      %v444 = vld [vmem:[%s432] sm:$0xff]
      %v445 = vld [vmem:[%s432 + $0x8] sm:$0xff]
      %v446 = vld [vmem:[%s2] sm:$0xff]
      %v447 = vld [vmem:[%s2 + $0x8] sm:$0xff]
      %v448 = vld [vmem:[%s2 + $0x10] sm:$0xff]
      %v449 = vld [vmem:[%s2 + $0x18] sm:$0xff]
      %v450 = vld [vmem:[%s2 + $0x20] sm:$0xff]
      %v451 = vld [vmem:[%s2 + $0x28] sm:$0xff]
      %v452 = vld [vmem:[%s2 + $0x30] sm:$0xff]
      %v453 = vld [vmem:[%s2 + $0x38] sm:$0xff]
      %vm454 = vcmask 261120
      %v456 = vsel %vm454, %v443, 0
      %v459 = vsel %vm454, %v444, 0
      %v462 = vsel %vm454, %v445, 0
      %464 = vmatprep.subr.mxu0 %v447
      %465 = vmatpush1.msra.mxu0 %v446
      %466 = vmatprep.subr.mxu0 %v449
      %467 = vmatpush1.msra.mxu0 %v448
      %468 = vmatprep.subr.mxu0 %v451
      %469 = vmatpush1.msra.mxu0 %v450
      %470 = vmatprep.subr.mxu0 %v453
      %471 = vmatpush1.msra.mxu0 %v452
      %472 = vmatprep.subr.mxu0 0.0
      %473 = vmatpush1.msra.mxu0 0.0
      %474 = vmatprep.subr.mxu0 0.0
      %475 = vmatpush1.msra.mxu0 0.0
      %476 = vmatprep.subr.mxu0 0.0
      %477 = vmatpush1.msra.mxu0 0.0
      %478 = vmatprep.subr.mxu0 0.0
      %479 = vmatpush1.msra.mxu0 0.0
      %480 = vmatprep.subr.mxu0 0.0
      %481 = vmatpush1.msra.mxu0 0.0
      %482 = vmatprep.subr.mxu0 0.0
      %483 = vmatpush1.msra.mxu0 0.0
      %484 = vmatprep.subr.mxu0 0.0
      %485 = vmatpush1.msra.mxu0 0.0
      %486 = vmatprep.subr.mxu0 0.0
      %487 = vmatpush1.msra.mxu0 0.0
      %488 = vmatprep.subr.mxu0 0.0
      %489 = vmatpush1.msra.mxu0 0.0
      %490 = vmatprep.subr.mxu0 0.0
      %491 = vmatpush1.msra.mxu0 0.0
      %492 = vmatprep.subr.mxu0 0.0
      %493 = vmatpush1.msra.mxu0 0.0
      %494 = vmatprep.subr.mxu0 0.0
      %495 = vmatpush1.msra.mxu0 0.0
      %496 = vmatprep.subr.mxu0 0.0
      %497 = vmatpush1.msra.mxu0 0.0
      %498 = vmatprep.subr.mxu0 0.0
      %499 = vmatpush1.msra.mxu0 0.0
      %500 = vmatprep.subr.mxu0 0.0
      %501 = vmatpush1.msra.mxu0 0.0
      %502 = vmatprep.subr.mxu0 0.0
      %503 = vmatpush1.msra.mxu0 0.0
      %504 = vmatprep.subr.mxu0 0.0
      %505 = vmatpush1.msra.mxu0 0.0
      %506 = vmatprep.subr.mxu0 0.0
      %507 = vmatpush1.msra.mxu0 0.0
      %508 = vmatprep.subr.mxu0 0.0
      %509 = vmatpush1.msra.mxu0 0.0
      %510 = vmatprep.subr.mxu0 0.0
      %511 = vmatpush1.msra.mxu0 0.0
      %512 = vmatprep.subr.mxu0 0.0
      %513 = vmatpush1.msra.mxu0 0.0
      %514 = vmatprep.subr.mxu0 0.0
      %515 = vmatpush1.msra.mxu0 0.0
      %516 = vmatprep.subr.mxu0 0.0
      %517 = vmatpush1.msra.mxu0 0.0
      %518 = vmatprep.subr.mxu0 0.0
      %519 = vmatpush1.msra.mxu0 0.0
      %520 = vmatprep.subr.mxu0 0.0
      %521 = vmatpush1.msra.mxu0 0.0
      %522 = vmatprep.subr.mxu0 0.0
      %523 = vmatpush1.msra.mxu0 0.0
      %524 = vmatprep.subr.mxu0 0.0
      %525 = vmatpush1.msra.mxu0 0.0
      %526 = vmatprep.subr.mxu0 0.0
      %527 = vmatpush1.msra.mxu0 0.0
      %528 = vmatprep.mubr.f32.mxu0 0.0
      %529 = vmatmul.mubr.f32.gmra.mrb[0].mxu0 %v456
      %v530 = vpop.f32.mrb[0].mxu0
      %v531 = vadd.f32 0.0, %v530
      %v532 = vpop.f32.mrb[0].mxu0
      %v533 = vadd.f32 0.0, %v532
      %534 = vmatprep.mubr.f32.mxu0 0.0
      %535 = vmatmul.mubr.f32.gmra.mrb[0].mxu0 %v459
      %v536 = vpop.f32.mrb[0].mxu0
      %v537 = vadd.f32 0.0, %v536
      %v538 = vpop.f32.mrb[0].mxu0
      %539 = vmatprep.mubr.f32.mxu0 0.0
      %540 = vmatmul.mubr.f32.gmra.mrb[0].mxu0 %v462
      %v541 = vpop.f32.mrb[0].mxu0
      %v542 = vadd.f32 0.0, %v541
      %v543 = vpop.f32.mrb[0].mxu0
      %544 = vdwg.mxu0
      %546 = vrot.lane.b32.xlu0 %v531, 104
      %v547 = vpop.permute.xlu0 %546
      %549 = vrot.lane.b32.xlu0 %v531, 80
      %v550 = vpop.permute.xlu0 %549
      %552 = vrot.lane.b32.xlu0 %v531, 56
      %v553 = vpop.permute.xlu0 %552
      %555 = vrot.lane.b32.xlu0 %v531, 32
      %v556 = vpop.permute.xlu0 %555
      %559 = vrot.lane.b32.xlu0 %v531, 8
      %v560 = vpop.permute.xlu0 %559
      %561 = vrot.lane.b32.xlu0 %v533, 8
      %v562 = vpop.permute.xlu0 %561
      %vm563 = vcmask 64512
      %v564 = vsel %vm563, %v560, %v562
      %566 = vrot.lane.b32.xlu0 %v533, 112
      %v567 = vpop.permute.xlu0 %566
      %v569 = vld [vmem:[%s4] sm:$0xf]
      %v570 = vld [vmem:[%s4 + $0x4] sm:$0xf]
      %v571 = vld [vmem:[%s4 + $0x8] sm:$0xf]
      %v572 = vld [vmem:[%s4 + $0xc] sm:$0xf]
      %v573 = vld [vmem:[%s4 + $0x10] sm:$0xf]
      %v574 = vld [vmem:[%s4 + $0x14] sm:$0xf]
      %v575 = vld [vmem:[%s4 + $0x18] sm:$0xf]
      %v576 = vld [vmem:[%s4 + $0x1c] sm:$0xf]
      %v577 = vpack.c.bf16 %v547, %v531
      %v578 = vpack.c.bf16 %v553, %v550
      %v579 = vpack.c.bf16 %v564, %v556
      %v580 = vpack.c.bf16 %v567, %v567
      %v581 = vld [vmem:[%s5] sm:$0xff]
      %v582 = vld [vmem:[%s5 + $0x8] sm:$0xff]
      %v583 = vld [vmem:[%s5 + $0x10] sm:$0xff]
      %v584 = vld [vmem:[%s5 + $0x18] sm:$0xff]
      %v585 = vld [vmem:[%s5 + $0x20] sm:$0xff]
      %v586 = vld [vmem:[%s5 + $0x28] sm:$0xff]
      %v587 = vld [vmem:[%s5 + $0x30] sm:$0xff]
      %v588 = vld [vmem:[%s5 + $0x38] sm:$0xff]
      %590 = vset.pattern.permute.xlu0 0
      %591 = vperm.xlu0 %590, %v581
      %v592 = vpop.permute.xlu0 %591
      %595 = vset.pattern.permute.xlu0 0
      %596 = vperm.xlu0 %595, %v582
      %v597 = vpop.permute.xlu0 %596
      %600 = vset.pattern.permute.xlu0 0
      %601 = vperm.xlu0 %600, %v583
      %v602 = vpop.permute.xlu0 %601
      %605 = vset.pattern.permute.xlu0 0
      %606 = vperm.xlu0 %605, %v584
      %v607 = vpop.permute.xlu0 %606
      %610 = vset.pattern.permute.xlu0 0
      %611 = vperm.xlu0 %610, %v585
      %v612 = vpop.permute.xlu0 %611
      %615 = vset.pattern.permute.xlu0 0
      %616 = vperm.xlu0 %615, %v586
      %v617 = vpop.permute.xlu0 %616
      %620 = vset.pattern.permute.xlu0 0
      %621 = vperm.xlu0 %620, %v587
      %v622 = vpop.permute.xlu0 %621
      %625 = vset.pattern.permute.xlu0 0
      %626 = vperm.xlu0 %625, %v588
      %v627 = vpop.permute.xlu0 %626
      %v637 = vunpack.c.l.b16 %v569
      %v638 = vunpack.c.l.b16 %v570
      %v639 = vunpack.c.l.b16 %v571
      %v640 = vunpack.c.l.b16 %v572
      %v641 = vunpack.c.l.b16 %v573
      %v642 = vunpack.c.l.b16 %v574
      %v643 = vunpack.c.l.b16 %v575
      %v644 = vunpack.c.l.b16 %v576
      %v645 = vpack.c.b16 %v638, %v637
      %v646 = vpack.c.b16 %v640, %v639
      %v647 = vpack.c.b16 %v642, %v641
      %v648 = vpack.c.b16 %v644, %v643
      %vm649 = vcmask 457728
      %v651 = vsel %vm649, %v645, 0
      %v654 = vsel %vm649, %v646, 0
      %v657 = vsel %vm649, %v647, 0
      %v660 = vsel %vm649, %v648, 0
      %vm662 = vcmask 1043456
      %v664 = vsel %vm662, %v580, 0
      %666 = vmatprep.subr.bf16.mxu0 0
      %667 = vmatpush1.bf16.msra.mxu0 %v577
      %668 = vmatprep.subr.bf16.mxu0 0
      %669 = vmatpush1.bf16.msra.mxu0 %v578
      %670 = vmatprep.subr.bf16.mxu0 0
      %671 = vmatpush1.bf16.msra.mxu0 %v579
      %672 = vmatprep.subr.bf16.mxu0 0
      %673 = vmatpush1.bf16.msra.mxu0 %v664
      %674 = vmatprep.subr.bf16.mxu0 0
      %675 = vmatpush1.bf16.msra.mxu0 0
      %676 = vmatprep.subr.bf16.mxu0 0
      %677 = vmatpush1.bf16.msra.mxu0 0
      %678 = vmatprep.subr.bf16.mxu0 0
      %679 = vmatpush1.bf16.msra.mxu0 0
      %680 = vmatprep.subr.bf16.mxu0 0
      %681 = vmatpush1.bf16.msra.mxu0 0
      %682 = vmatprep.subr.bf16.mxu0 0
      %683 = vmatpush1.bf16.msra.mxu0 0
      %684 = vmatprep.subr.bf16.mxu0 0
      %685 = vmatpush1.bf16.msra.mxu0 0
      %686 = vmatprep.subr.bf16.mxu0 0
      %687 = vmatpush1.bf16.msra.mxu0 0
      %688 = vmatprep.subr.bf16.mxu0 0
      %689 = vmatpush1.bf16.msra.mxu0 0
      %690 = vmatprep.subr.bf16.mxu0 0
      %691 = vmatpush1.bf16.msra.mxu0 0
      %692 = vmatprep.subr.bf16.mxu0 0
      %693 = vmatpush1.bf16.msra.mxu0 0
      %694 = vmatprep.subr.bf16.mxu0 0
      %695 = vmatpush1.bf16.msra.mxu0 0
      %696 = vmatprep.subr.bf16.mxu0 0
      %697 = vmatpush1.bf16.msra.mxu0 0
      %698 = vmatprep.mubr.bf16.mxu0 0
      %699 = vmatmul.mubr.bf16.gmra.mrb[0].mxu0 %v651
      %v700 = vpop.f32.mrb[0].mxu0
      %v701 = vadd.f32 %v592, %v700
      %v702 = vpop.f32.mrb[0].mxu0
      %v703 = vpop.f32.mrb[0].mxu0
      %v704 = vadd.f32 %v597, %v703
      %v705 = vpop.f32.mrb[0].mxu0
      %706 = vmatprep.mubr.bf16.mxu0 0
      %707 = vmatmul.mubr.bf16.gmra.mrb[0].mxu0 %v654
      %v708 = vpop.f32.mrb[0].mxu0
      %v709 = vadd.f32 %v602, %v708
      %v710 = vpop.f32.mrb[0].mxu0
      %v711 = vpop.f32.mrb[0].mxu0
      %v712 = vadd.f32 %v607, %v711
      %v713 = vpop.f32.mrb[0].mxu0
      %714 = vmatprep.mubr.bf16.mxu0 0
      %715 = vmatmul.mubr.bf16.gmra.mrb[0].mxu0 %v657
      %v716 = vpop.f32.mrb[0].mxu0
      %v717 = vadd.f32 %v612, %v716
      %v718 = vpop.f32.mrb[0].mxu0
      %v719 = vpop.f32.mrb[0].mxu0
      %v720 = vadd.f32 %v617, %v719
      %v721 = vpop.f32.mrb[0].mxu0
      %722 = vmatprep.mubr.bf16.mxu0 0
      %723 = vmatmul.mubr.bf16.gmra.mrb[0].mxu0 %v660
      %v724 = vpop.f32.mrb[0].mxu0
      %v725 = vadd.f32 %v622, %v724
      %v726 = vpop.f32.mrb[0].mxu0
      %v727 = vpop.f32.mrb[0].mxu0
      %v728 = vadd.f32 %v627, %v727
      %v729 = vpop.f32.mrb[0].mxu0
      %730 = vdwg.mxu0
      %v731 = vtanh.pop %v701
      %v732 = vtanh.pop %v704
      %v733 = vtanh.pop %v709
      %v734 = vtanh.pop %v712
      %v735 = vxor.u32 %v717, 2147483648
      %v736 = vxor.u32 %v720, 2147483648
      %v737 = vxor.u32 %v725, 2147483648
      %v738 = vxor.u32 %v728, 2147483648
      %v739 = vmul.f32 %v735, 1.442695
      %v740 = vpow.pop %v739
      %v741 = vmul.f32 %v736, 1.442695
      %v742 = vpow.pop %v741
      %v743 = vmul.f32 %v737, 1.442695
      %v744 = vpow.pop %v743
      %v745 = vmul.f32 %v738, 1.442695
      %v746 = vpow.pop %v745
      %v747 = vadd.f32 %v740, 1.0
      %v748 = vadd.f32 %v742, 1.0
      %v749 = vadd.f32 %v744, 1.0
      %v750 = vadd.f32 %v746, 1.0
      %v751 = vrcp.pop %v747
      %v752 = vmul.f32 1.0, %v751
      %v753 = vrcp.pop %v748
      %v754 = vmul.f32 1.0, %v753
      %v755 = vrcp.pop %v749
      %v756 = vmul.f32 1.0, %v755
      %v757 = vrcp.pop %v750
      %v758 = vmul.f32 1.0, %v757
      %v759 = vmul.f32 %v731, %v752
      %v760 = vmul.f32 %v732, %v754
      %v761 = vmul.f32 %v733, %v756
      %v762 = vmul.f32 %v734, %v758
      %v763 = vld [vmem:[%s6] sm:$0xf]
      %v764 = vld [vmem:[%s6 + $0x4] sm:$0xf]
      %v765 = vpack.c.bf16 %v759, %v759
      %v766 = vld [vmem:[%s7] sm:$0xff]
      %v767 = vld [vmem:[%s7 + $0x8] sm:$0xff]
      %769 = vset.pattern.permute.xlu0 0
      %770 = vperm.xlu0 %769, %v766
      %v771 = vpop.permute.xlu0 %770
      %774 = vset.pattern.permute.xlu0 0
      %775 = vperm.xlu0 %774, %v767
      %v776 = vpop.permute.xlu0 %775
      %v780 = vunpack.c.l.b16 %v763
      %v781 = vunpack.c.l.b16 %v764
      %v782 = vpack.c.b16 %v781, %v780
      %v784 = vsel %vm563, %v782, 0
      %v787 = vsel %vm662, %v765, 0
      %789 = vmatprep.subr.bf16.mxu0 0
      %790 = vmatpush1.bf16.msra.mxu0 %v787
      %791 = vmatprep.subr.bf16.mxu0 0
      %792 = vmatpush1.bf16.msra.mxu0 0
      %793 = vmatprep.subr.bf16.mxu0 0
      %794 = vmatpush1.bf16.msra.mxu0 0
      %795 = vmatprep.subr.bf16.mxu0 0
      %796 = vmatpush1.bf16.msra.mxu0 0
      %797 = vmatprep.subr.bf16.mxu0 0
      %798 = vmatpush1.bf16.msra.mxu0 0
      %799 = vmatprep.subr.bf16.mxu0 0
      %800 = vmatpush1.bf16.msra.mxu0 0
      %801 = vmatprep.subr.bf16.mxu0 0
      %802 = vmatpush1.bf16.msra.mxu0 0
      %803 = vmatprep.subr.bf16.mxu0 0
      %804 = vmatpush1.bf16.msra.mxu0 0
      %805 = vmatprep.subr.bf16.mxu0 0
      %806 = vmatpush1.bf16.msra.mxu0 0
      %807 = vmatprep.subr.bf16.mxu0 0
      %808 = vmatpush1.bf16.msra.mxu0 0
      %809 = vmatprep.subr.bf16.mxu0 0
      %810 = vmatpush1.bf16.msra.mxu0 0
      %811 = vmatprep.subr.bf16.mxu0 0
      %812 = vmatpush1.bf16.msra.mxu0 0
      %813 = vmatprep.subr.bf16.mxu0 0
      %814 = vmatpush1.bf16.msra.mxu0 0
      %815 = vmatprep.subr.bf16.mxu0 0
      %816 = vmatpush1.bf16.msra.mxu0 0
      %817 = vmatprep.subr.bf16.mxu0 0
      %818 = vmatpush1.bf16.msra.mxu0 0
      %819 = vmatprep.subr.bf16.mxu0 0
      %820 = vmatpush1.bf16.msra.mxu0 0
      %821 = vmatprep.mubr.bf16.mxu0 0
      %822 = vmatmul.mubr.bf16.gmra.mrb[0].mxu0 %v784
      %v823 = vpop.f32.mrb[0].mxu0
      %v824 = vadd.f32 %v771, %v823
      %v825 = vpop.f32.mrb[0].mxu0
      %v826 = vpop.f32.mrb[0].mxu0
      %v827 = vadd.f32 %v776, %v826
      %v828 = vpop.f32.mrb[0].mxu0
      %829 = vdwg.mxu0
      %832 = vrot.lane.b32.xlu0 %v537, 32
      %v833 = vpop.permute.xlu0 %832
      %834 = vrot.lane.b32.xlu0 %v542, 32
      %v835 = vpop.permute.xlu0 %834
      %v838 = vadd.f32 %v824, %v833
      %v839 = vadd.f32 %v827, %v835
      %vm840 = vcmask 195584
      %841 = vst.msk [vmem:[%s441] sm:$0xff] %vm840, %v838
      %842 = vst.msk [vmem:[%s441 + $0x8] sm:$0xff] %vm840, %v839
      %v843 = vld [vmem:[%s3] sm:$0xff]
      %v844 = vld [vmem:[%s3 + $0x8] sm:$0xff]
      %v845 = vld [vmem:[%s3 + $0x10] sm:$0xff]
      %v847 = vsel %vm840, %v759, 0
      %v850 = vsel %vm840, %v760, 0
      %v853 = vsel %vm840, %v761, 0
      %v856 = vsel %vm840, %v762, 0
      %858 = vmatprep.subr.mxu0 0.0
      %859 = vmatpush1.msra.mxu0 %v843
      %860 = vmatprep.subr.mxu0 0.0
      %861 = vmatpush1.msra.mxu0 %v844
      %862 = vmatprep.subr.mxu0 0.0
      %863 = vmatpush1.msra.mxu0 %v845
      %864 = vmatprep.subr.mxu0 0.0
      %865 = vmatpush1.msra.mxu0 0.0
      %866 = vmatprep.subr.mxu0 0.0
      %867 = vmatpush1.msra.mxu0 0.0
      %868 = vmatprep.subr.mxu0 0.0
      %869 = vmatpush1.msra.mxu0 0.0
      %870 = vmatprep.subr.mxu0 0.0
      %871 = vmatpush1.msra.mxu0 0.0
      %872 = vmatprep.subr.mxu0 0.0
      %873 = vmatpush1.msra.mxu0 0.0
      %874 = vmatprep.subr.mxu0 0.0
      %875 = vmatpush1.msra.mxu0 0.0
      %876 = vmatprep.subr.mxu0 0.0
      %877 = vmatpush1.msra.mxu0 0.0
      %878 = vmatprep.subr.mxu0 0.0
      %879 = vmatpush1.msra.mxu0 0.0
      %880 = vmatprep.subr.mxu0 0.0
      %881 = vmatpush1.msra.mxu0 0.0
      %882 = vmatprep.subr.mxu0 0.0
      %883 = vmatpush1.msra.mxu0 0.0
      %884 = vmatprep.subr.mxu0 0.0
      %885 = vmatpush1.msra.mxu0 0.0
      %886 = vmatprep.subr.mxu0 0.0
      %887 = vmatpush1.msra.mxu0 0.0
      %888 = vmatprep.subr.mxu0 0.0
      %889 = vmatpush1.msra.mxu0 0.0
      %890 = vmatprep.subr.mxu0 0.0
      %891 = vmatpush1.msra.mxu0 0.0
      %892 = vmatprep.subr.mxu0 0.0
      %893 = vmatpush1.msra.mxu0 0.0
      %894 = vmatprep.subr.mxu0 0.0
      %895 = vmatpush1.msra.mxu0 0.0
      %896 = vmatprep.subr.mxu0 0.0
      %897 = vmatpush1.msra.mxu0 0.0
      %898 = vmatprep.subr.mxu0 0.0
      %899 = vmatpush1.msra.mxu0 0.0
      %900 = vmatprep.subr.mxu0 0.0
      %901 = vmatpush1.msra.mxu0 0.0
      %902 = vmatprep.subr.mxu0 0.0
      %903 = vmatpush1.msra.mxu0 0.0
      %904 = vmatprep.subr.mxu0 0.0
      %905 = vmatpush1.msra.mxu0 0.0
      %906 = vmatprep.subr.mxu0 0.0
      %907 = vmatpush1.msra.mxu0 0.0
      %908 = vmatprep.subr.mxu0 0.0
      %909 = vmatpush1.msra.mxu0 0.0
      %910 = vmatprep.subr.mxu0 0.0
      %911 = vmatpush1.msra.mxu0 0.0
      %912 = vmatprep.subr.mxu0 0.0
      %913 = vmatpush1.msra.mxu0 0.0
      %914 = vmatprep.subr.mxu0 0.0
      %915 = vmatpush1.msra.mxu0 0.0
      %916 = vmatprep.subr.mxu0 0.0
      %917 = vmatpush1.msra.mxu0 0.0
      %918 = vmatprep.subr.mxu0 0.0
      %919 = vmatpush1.msra.mxu0 0.0
      %920 = vmatprep.subr.mxu0 0.0
      %921 = vmatpush1.msra.mxu0 0.0
      %922 = vmatprep.mubr.f32.mxu0 0.0
      %923 = vmatmul.mubr.f32.gmra.mrb[0].mxu0 %v847
      %v924 = vpop.f32.mrb[0].mxu0
      %v925 = vadd.f32 0.0, %v924
      %v926 = vpop.f32.mrb[0].mxu0
      %927 = vmatprep.mubr.f32.mxu0 0.0
      %928 = vmatmul.mubr.f32.gmra.mrb[0].mxu0 %v850
      %v929 = vpop.f32.mrb[0].mxu0
      %v930 = vadd.f32 0.0, %v929
      %v931 = vpop.f32.mrb[0].mxu0
      %932 = vmatprep.mubr.f32.mxu0 0.0
      %933 = vmatmul.mubr.f32.gmra.mrb[0].mxu0 %v853
      %v934 = vpop.f32.mrb[0].mxu0
      %v935 = vadd.f32 0.0, %v934
      %v936 = vpop.f32.mrb[0].mxu0
      %937 = vmatprep.mubr.f32.mxu0 0.0
      %938 = vmatmul.mubr.f32.gmra.mrb[0].mxu0 %v856
      %v939 = vpop.f32.mrb[0].mxu0
      %v940 = vadd.f32 0.0, %v939
      %v941 = vpop.f32.mrb[0].mxu0
      %942 = vdwg.mxu0
      %947 = vrot.lane.b32.xlu0 %v925, 104
      %v948 = vpop.permute.xlu0 %947
      %949 = vrot.lane.b32.xlu0 %v930, 104
      %v950 = vpop.permute.xlu0 %949
      %951 = vrot.lane.b32.xlu0 %v935, 104
      %v952 = vpop.permute.xlu0 %951
      %953 = vrot.lane.b32.xlu0 %v940, 104
      %v954 = vpop.permute.xlu0 %953
      %v959 = vld [vmem:[%s8] sm:$0xf]
      %v960 = vpack.c.bf16 %v760, %v759
      %v961 = vpack.c.bf16 %v762, %v761
      %v962 = vpack.c.bf16 %v930, %v925
      %v963 = vpack.c.bf16 %v940, %v935
      %v964 = vpack.c.bf16 %v950, %v948
      %v965 = vpack.c.bf16 %v954, %v952
      %vm966 = vcmask 785408
      %v968 = vsel %vm966, %v959, 0
      %970 = vmatprep.subr.bf16.mxu0 0
      %971 = vmatpush1.bf16.msra.mxu0 %v960
      %972 = vmatprep.subr.bf16.mxu0 0
      %973 = vmatpush1.bf16.msra.mxu0 %v961
      %974 = vmatprep.subr.bf16.mxu0 0
      %975 = vmatpush1.bf16.msra.mxu0 %v962
      %976 = vmatprep.subr.bf16.mxu0 0
      %977 = vmatpush1.bf16.msra.mxu0 %v963
      %978 = vmatprep.subr.bf16.mxu0 0
      %979 = vmatpush1.bf16.msra.mxu0 %v964
      %980 = vmatprep.subr.bf16.mxu0 0
      %981 = vmatpush1.bf16.msra.mxu0 %v965
      %982 = vmatprep.subr.bf16.mxu0 0
      %983 = vmatpush1.bf16.msra.mxu0 0
      %984 = vmatprep.subr.bf16.mxu0 0
      %985 = vmatpush1.bf16.msra.mxu0 0
      %986 = vmatprep.subr.bf16.mxu0 0
      %987 = vmatpush1.bf16.msra.mxu0 0
      %988 = vmatprep.subr.bf16.mxu0 0
      %989 = vmatpush1.bf16.msra.mxu0 0
      %990 = vmatprep.subr.bf16.mxu0 0
      %991 = vmatpush1.bf16.msra.mxu0 0
      %992 = vmatprep.subr.bf16.mxu0 0
      %993 = vmatpush1.bf16.msra.mxu0 0
      %994 = vmatprep.subr.bf16.mxu0 0
      %995 = vmatpush1.bf16.msra.mxu0 0
      %996 = vmatprep.subr.bf16.mxu0 0
      %997 = vmatpush1.bf16.msra.mxu0 0
      %998 = vmatprep.subr.bf16.mxu0 0
      %999 = vmatpush1.bf16.msra.mxu0 0
      %1000 = vmatprep.subr.bf16.mxu0 0
      %1001 = vmatpush1.bf16.msra.mxu0 0
      %1002 = vmatprep.mubr.bf16.mxu0 0
      %1003 = vmatmul.mubr.bf16.gmra.mrb[0].mxu0 %v968
      %v1004 = vpop.f32.mrb[0].mxu0
      %v1005 = vadd.f32 %v556, %v1004
      %v1006 = vpop.f32.mrb[0].mxu0
      %v1007 = vpop.f32.mrb[0].mxu0
      %v1008 = vpop.f32.mrb[0].mxu0
      %1009 = vdwg.mxu0
      %v1010 = vld [vmem:[%s9] sm:$0xff]
      %1012 = vset.pattern.permute.xlu0 0
      %1013 = vperm.xlu0 %1012, %v1010
      %v1014 = vpop.permute.xlu0 %1013
      %v1016 = vmul.f32 %v1005, %v1014
      %v1017 = vld [vmem:[%s10] sm:$0xff]
      %1019 = vset.pattern.permute.xlu0 0
      %1020 = vperm.xlu0 %1019, %v1017
      %v1021 = vpop.permute.xlu0 %1020
      %v1023 = vadd.f32 %v1016, %v1021
      %1024 = vst.msk [vmem:[%s436] sm:$0xff] %vm840, %v1023
      %p1025 = scmp.lt.s32.totalorder %s24, 1
      %s1026 = scalar_select %p1025, %s24, 1
      %s1027 = smul.addr %s1026, 8
      %s1028 = scalar_lea.vmem %s11, %s1027
      %p1029 = scmp.lt.s32.totalorder %s24, 1
      %s1030 = scalar_select %p1029, %s24, 1
      %s1031 = smul.addr %s1030, 2
      %s1032 = smul.addr %s1031, 8
      %s1033 = scalar_lea.vmem %s12, %s1032
      // Predicated region
      $region65: #{predictor_forward.9} parent=63 // pred_check
        %p1034 = pneg %p283
      $region66: #{predictor_forward.9} parent=63 // pred_check_branch
        %1036 = sbr.rel (%p1034) target = $region68
      $region67: #{predictor_forward.9} parent=63 // pred_region
        _
      $region68: #{predictor_forward.9} parent=63 // pred_fallthru
        _
      // Predicated region
      $region69: #{predictor_forward.9} parent=63 // pred_check
        %p1037 = pneg %p309
      $region70: #{predictor_forward.9} parent=63 // pred_check_branch
        %1039 = sbr.rel (%p1037) target = $region72
      $region71: #{predictor_forward.9} parent=63 // pred_region
        _
      $region72: #{predictor_forward.9} parent=63 // pred_fallthru
        _
    $region64: #{predictor_forward.9} parent=5 // pred_fallthru
      _
    %p1040 = scmp.le.s32.totalorder 2, %s19
    // Predicated region
    $region73: #{predictor_forward.9} parent=5 // pred_check
      %p1041 = pneg %p1040
    $region74: #{predictor_forward.9} parent=5 // pred_check_branch
      %1043 = sbr.rel (%p1041) target = $region76
    $region75: #{predictor_forward.9} parent=5 // pred_region
      %s1044 = ssub.s32 %s19, 2
      // Predicated region
      $region77: #{predictor_forward.9} parent=75 // pred_check
        %p1045 = pneg %p289
      $region78: #{predictor_forward.9} parent=75 // pred_check_branch
        %1047 = sbr.rel (%p1045) target = $region80
      $region79: #{predictor_forward.9} parent=75 // pred_region
        %p1048 = scmp.lt.s32.totalorder %s25, 1
        %s1049 = scalar_select %p1048, %s25, 1
        %s1050 = smul.addr %s1049, 8
        %s1051 = scalar_lea.vmem %s11, %s1050
      $region80: #{predictor_forward.9} parent=75 // pred_fallthru
        _
      // Predicated region
      $region81: #{predictor_forward.9} parent=75 // pred_check
        %p1052 = pneg %p315
      $region82: #{predictor_forward.9} parent=75 // pred_check_branch
        %1054 = sbr.rel (%p1052) target = $region84
      $region83: #{predictor_forward.9} parent=75 // pred_region
        %p1055 = scmp.lt.s32.totalorder %s25, 1
        %s1056 = scalar_select %p1055, %s25, 1
        %s1057 = smul.addr %s1056, 2
        %s1058 = smul.addr %s1057, 8
        %s1059 = scalar_lea.vmem %s12, %s1058
      $region84: #{predictor_forward.9} parent=75 // pred_fallthru
        _
    $region76: #{predictor_forward.9} parent=5 // pred_fallthru
      _
  $region6: #{predictor_forward.9} parent=0 // loop_footer
    %s23 = sadd.s32 1, %s19
  $region7: #{predictor_forward.9} parent=0 // loop_footer_branch
    %18 = sbr.rel target = $region3
  $region8: #{predictor_forward.9} parent=0 // loop_exit
    _

// kernel: predictor_forward.11
$region0: #{predictor_forward.11}
  #allocation0 [shape = 'u32[]', space=smem, size = 0x4, offset = 0x4, fixed_abs, tag = 'smem constant byte address 0x4 - core index']
  #allocation1 [shape = 'u32[144,128]{1,0:T(1,128)}', space=vmem, size = 0x12000, scoped, tag = 'internal scratch']
  %s0 = inlined_call_operand.vmem [shape: f32[2,16,8], index: 0, kind: input, shape index: {}]
  %s1 = inlined_call_operand.vmem [shape: bf16[16,16], index: 1, kind: input, shape index: {}]
  %s2 = inlined_call_operand.vmem [shape: f32[16,1], index: 2, kind: input, shape index: {}]
  %s3 = inlined_call_operand.vmem [shape: bf16[6,16], index: 3, kind: input, shape index: {}]
  %s4 = inlined_call_operand.vmem [shape: f32[6,1], index: 4, kind: input, shape index: {}]
  %s5 = inlined_call_operand.vmem [shape: f32[2,6,8], index: 5, kind: output, shape index: {}]
  %s6 = sld [smem:[#allocation0]]
  $region53: #{predictor_forward.11} parent=0
    _
  %s8 = ssub.s32 1, %s6
  %s9 = scalar_select 0, %s8, %s6
  loop: start=0, step=1, limit=4
  $region2: #{predictor_forward.11} parent=0 // loop_pre_header
    _
  $region3: #{predictor_forward.11} parent=0 // loop_header
    %s11 = sphi 0, %s15
    %p12 = scmp.ge.s32.totalorder %s11, 4
    %s21 = sphi 0, %s23
    %s24 = sphi 0, %s21
    %s25 = sphi 0, %s24
    %s41 = sphi 0, %s25
    %s45 = sphi 0, %s45
    %s47 = sphi 0, %s45
    %s48 = sphi 0, %s47
    %s62 = sphi 0, %s48
    %s66 = sphi 0, %s66
    %s68 = sphi 0, %s66
    %s69 = sphi 0, %s68
    %s83 = sphi 0, %s69
    %s87 = sphi 0, %s87
    %s89 = sphi 0, %s87
    %s90 = sphi 0, %s89
    %s104 = sphi 0, %s90
    %s108 = sphi 0, %s108
    %s110 = sphi 0, %s108
    %s111 = sphi 0, %s110
    %s125 = sphi 0, %s111
    %s131 = sphi 0, %s133
    %s134 = sphi 0, %s131
    %s135 = sphi 0, %s134
    %s151 = sphi 0, %s135
  $region4: #{predictor_forward.11} parent=0 // loop_header_branch
    %14 = sbr.rel (%p12) target = $region8
  $region5: #{predictor_forward.11} parent=0 // loop_body
    %s16 = ssub.s32 %s11, 1
    %s17 = ssub.s32 %s11, 2
    %s18 = sadd.s32 %s11, 1
    %s19 = ssub.s32 %s11, %s18
    %p20 = scmp.eq.s32.totalorder %s19, 0
    %s22 = sadd.s32 %s21, 1
    %s23 = scalar_select %p20, %s21, %s22
    %p26 = pneg %p20
    %p27 = scmp.eq.s32.totalorder %s11, 1
    %p28 = por %p26, %p27
    %p29 = scmp.ne.s32.totalorder %s21, %s24
    %p30 = scmp.eq.s32.totalorder %s11, 0
    %p31 = por %p29, %p30
    %p32 = scmp.ne.s32.totalorder %s21, %s24
    %p33 = scmp.eq.s32.totalorder %s16, 1
    %p34 = por %p32, %p33
    %p35 = scmp.ne.s32.totalorder %s24, %s25
    %p36 = scmp.eq.s32.totalorder %s16, 0
    %p37 = por %p35, %p36
    %p38 = scmp.ne.s32.totalorder %s24, %s25
    %p39 = scmp.eq.s32.totalorder %s17, 1
    %p40 = por %p38, %p39
    %p42 = scmp.ne.s32.totalorder %s25, %s41
    %p43 = scmp.eq.s32.totalorder %s17, 0
    %p44 = por %p42, %p43
    %s46 = sadd.s32 %s45, 1
    %p49 = scmp.eq.s32.totalorder %s11, 1
    %p50 = scmp.ne.s32.totalorder %s45, %s47
    %p51 = scmp.eq.s32.totalorder %s11, 0
    %p52 = por %p50, %p51
    %p53 = scmp.ne.s32.totalorder %s45, %s47
    %p54 = scmp.eq.s32.totalorder %s16, 1
    %p55 = por %p53, %p54
    %p56 = scmp.ne.s32.totalorder %s47, %s48
    %p57 = scmp.eq.s32.totalorder %s16, 0
    %p58 = por %p56, %p57
    %p59 = scmp.ne.s32.totalorder %s47, %s48
    %p60 = scmp.eq.s32.totalorder %s17, 1
    %p61 = por %p59, %p60
    %p63 = scmp.ne.s32.totalorder %s48, %s62
    %p64 = scmp.eq.s32.totalorder %s17, 0
    %p65 = por %p63, %p64
    %s67 = sadd.s32 %s66, 1
    %p70 = scmp.eq.s32.totalorder %s11, 1
    %p71 = scmp.ne.s32.totalorder %s66, %s68
    %p72 = scmp.eq.s32.totalorder %s11, 0
    %p73 = por %p71, %p72
    %p74 = scmp.ne.s32.totalorder %s66, %s68
    %p75 = scmp.eq.s32.totalorder %s16, 1
    %p76 = por %p74, %p75
    %p77 = scmp.ne.s32.totalorder %s68, %s69
    %p78 = scmp.eq.s32.totalorder %s16, 0
    %p79 = por %p77, %p78
    %p80 = scmp.ne.s32.totalorder %s68, %s69
    %p81 = scmp.eq.s32.totalorder %s17, 1
    %p82 = por %p80, %p81
    %p84 = scmp.ne.s32.totalorder %s69, %s83
    %p85 = scmp.eq.s32.totalorder %s17, 0
    %p86 = por %p84, %p85
    %s88 = sadd.s32 %s87, 1
    %p91 = scmp.eq.s32.totalorder %s11, 1
    %p92 = scmp.ne.s32.totalorder %s87, %s89
    %p93 = scmp.eq.s32.totalorder %s11, 0
    %p94 = por %p92, %p93
    %p95 = scmp.ne.s32.totalorder %s87, %s89
    %p96 = scmp.eq.s32.totalorder %s16, 1
    %p97 = por %p95, %p96
    %p98 = scmp.ne.s32.totalorder %s89, %s90
    %p99 = scmp.eq.s32.totalorder %s16, 0
    %p100 = por %p98, %p99
    %p101 = scmp.ne.s32.totalorder %s89, %s90
    %p102 = scmp.eq.s32.totalorder %s17, 1
    %p103 = por %p101, %p102
    %p105 = scmp.ne.s32.totalorder %s90, %s104
    %p106 = scmp.eq.s32.totalorder %s17, 0
    %p107 = por %p105, %p106
    %s109 = sadd.s32 %s108, 1
    %p112 = scmp.eq.s32.totalorder %s11, 1
    %p113 = scmp.ne.s32.totalorder %s108, %s110
    %p114 = scmp.eq.s32.totalorder %s11, 0
    %p115 = por %p113, %p114
    %p116 = scmp.ne.s32.totalorder %s108, %s110
    %p117 = scmp.eq.s32.totalorder %s16, 1
    %p118 = por %p116, %p117
    %p119 = scmp.ne.s32.totalorder %s110, %s111
    %p120 = scmp.eq.s32.totalorder %s16, 0
    %p121 = por %p119, %p120
    %p122 = scmp.ne.s32.totalorder %s110, %s111
    %p123 = scmp.eq.s32.totalorder %s17, 1
    %p124 = por %p122, %p123
    %p126 = scmp.ne.s32.totalorder %s111, %s125
    %p127 = scmp.eq.s32.totalorder %s17, 0
    %p128 = por %p126, %p127
    %s129 = ssub.s32 %s11, %s18
    %p130 = scmp.eq.s32.totalorder %s129, 0
    %s132 = sadd.s32 %s131, 1
    %s133 = scalar_select %p130, %s131, %s132
    %p136 = pneg %p130
    %p137 = scmp.eq.s32.totalorder %s11, 1
    %p138 = por %p136, %p137
    %p139 = scmp.ne.s32.totalorder %s131, %s134
    %p140 = scmp.eq.s32.totalorder %s11, 0
    %p141 = por %p139, %p140
    %p142 = scmp.ne.s32.totalorder %s131, %s134
    %p143 = scmp.eq.s32.totalorder %s16, 1
    %p144 = por %p142, %p143
    %p145 = scmp.ne.s32.totalorder %s134, %s135
    %p146 = scmp.eq.s32.totalorder %s16, 0
    %p147 = por %p145, %p146
    %p148 = scmp.ne.s32.totalorder %s134, %s135
    %p149 = scmp.eq.s32.totalorder %s17, 1
    %p150 = por %p148, %p149
    %p152 = scmp.ne.s32.totalorder %s135, %s151
    %p153 = scmp.eq.s32.totalorder %s17, 0
    %p154 = por %p152, %p153
    %p155 = scmp.le.s32.totalorder 1, %s11
    %p156 = scmp.lt.s32.totalorder %s11, 3
    %p157 = pnand %p155, %p156
    %p158 = pneg %p157
    // Predicated region
    $region9: #{predictor_forward.11} parent=5 // pred_check
      _
    $region10: #{predictor_forward.11} parent=5 // pred_check_branch
      %160 = sbr.rel (%p157) target = $region12
    $region11: #{predictor_forward.11} parent=5 // pred_region
      %s161 = ssub.s32 %s11, 1
      // Predicated region
      $region13: #{predictor_forward.11} parent=11 // pred_check
        %p162 = pneg %p58
      $region14: #{predictor_forward.11} parent=11 // pred_check_branch
        %164 = sbr.rel (%p162) target = $region16
      $region15: #{predictor_forward.11} parent=11 // pred_region
        _
      $region16: #{predictor_forward.11} parent=11 // pred_fallthru
        _
      // Predicated region
      $region17: #{predictor_forward.11} parent=11 // pred_check
        %p165 = pneg %p79
      $region18: #{predictor_forward.11} parent=11 // pred_check_branch
        %167 = sbr.rel (%p165) target = $region20
      $region19: #{predictor_forward.11} parent=11 // pred_region
        _
      $region20: #{predictor_forward.11} parent=11 // pred_fallthru
        _
      // Predicated region
      $region21: #{predictor_forward.11} parent=11 // pred_check
        %p168 = pneg %p100
      $region22: #{predictor_forward.11} parent=11 // pred_check_branch
        %170 = sbr.rel (%p168) target = $region24
      $region23: #{predictor_forward.11} parent=11 // pred_region
        _
      $region24: #{predictor_forward.11} parent=11 // pred_fallthru
        _
      // Predicated region
      $region25: #{predictor_forward.11} parent=11 // pred_check
        %p171 = pneg %p121
      $region26: #{predictor_forward.11} parent=11 // pred_check_branch
        %173 = sbr.rel (%p171) target = $region28
      $region27: #{predictor_forward.11} parent=11 // pred_region
        _
      $region28: #{predictor_forward.11} parent=11 // pred_fallthru
        _
    $region12: #{predictor_forward.11} parent=5 // pred_fallthru
      _
    %p174 = scmp.lt.s32.totalorder %s11, 2
    // Predicated region
    $region29: #{predictor_forward.11} parent=5 // pred_check
      %p175 = pneg %p174
    $region30: #{predictor_forward.11} parent=5 // pred_check_branch
      %177 = sbr.rel (%p175) target = $region32
    $region31: #{predictor_forward.11} parent=5 // pred_region
      // Predicated region
      $region33: #{predictor_forward.11} parent=31 // pred_check
        %p178 = pneg %p31
      $region34: #{predictor_forward.11} parent=31 // pred_check_branch
        %180 = sbr.rel (%p178) target = $region36
      $region35: #{predictor_forward.11} parent=31 // pred_region
        %p181 = scmp.lt.s32.totalorder %s11, 1
        %s182 = scalar_select %p181, %s11, 1
        %s183 = smul.addr %s182, 2
        %s184 = smul.addr %s183, 8
        %s185 = scalar_lea.vmem %s0, %s184
      $region36: #{predictor_forward.11} parent=31 // pred_fallthru
        _
    $region32: #{predictor_forward.11} parent=5 // pred_fallthru
      _
    %p186 = scmp.le.s32.totalorder 1, %s11
    %p187 = scmp.lt.s32.totalorder %s11, 3
    %p188 = pnand %p186, %p187
    %p189 = pneg %p188
    // Predicated region
    $region37: #{predictor_forward.11} parent=5 // pred_check
      _
    $region38: #{predictor_forward.11} parent=5 // pred_check_branch
      %191 = sbr.rel (%p188) target = $region40
    $region39: #{predictor_forward.11} parent=5 // pred_region
      %s192 = ssub.s32 %s11, 1
      %p193 = scmp.lt.s32.totalorder %s16, 1
      %s194 = scalar_select %p193, %s16, 1
      %s195 = smul.addr %s194, 2
      %s196 = smul.addr %s195, 8
      %s197 = scalar_lea.vmem %s0, %s196
      %p198 = pneg %p37
      %p199 = pneg %p34
      %p200 = pneg %p58
      %p201 = pneg %p55
      %p202 = pneg %p79
      %p203 = pneg %p76
      %p204 = pneg %p100
      %p205 = pneg %p97
      %p206 = pneg %p121
      %p207 = pneg %p118
      %p208 = pneg %p147
      %p209 = pneg %p144
      %p210 = scmp.lt.s32.totalorder %s16, 1
      %s211 = scalar_select %p210, %s16, 1
      %s212 = smul.addr %s211, 8
      %s213 = scalar_lea.vmem %s5, %s212
      %p214 = scmp.lt.s32.totalorder %s16, 1
      %s215 = scalar_select %p214, %s16, 1
      %s216 = smul.addr %s215, 2
      %s217 = smul.addr %s216, 8
      %s218 = scalar_lea.vmem %s0, %s217
      %p219 = scmp.lt.s32.totalorder %s16, 1
      %s220 = scalar_select %p219, %s16, 1
      %s221 = smul.addr %s220, 8
      %s222 = scalar_lea.vmem %s5, %s221
      %v224 = vld [vmem:[%s218] sm:$0xff]
      %v225 = vld [vmem:[%s218 + $0x8] sm:$0xff]
      %v226 = vmax.f32 %v224, 0.0
      %v227 = vmax.f32 %v225, 0.0
      %v228 = vld [vmem:[%s1] sm:$0xf]
      %v229 = vld [vmem:[%s1 + $0x4] sm:$0xf]
      %v230 = vpack.c.bf16 %v227, %v226
      %v231 = vld [vmem:[%s2] sm:$0xff]
      %v232 = vld [vmem:[%s2 + $0x8] sm:$0xff]
      %234 = vset.pattern.permute.xlu0 0
      %235 = vperm.xlu0 %234, %v231
      %v236 = vpop.permute.xlu0 %235
      %239 = vset.pattern.permute.xlu0 0
      %240 = vperm.xlu0 %239, %v232
      %v241 = vpop.permute.xlu0 %240
      %v245 = vunpack.c.l.b16 %v228
      %v246 = vunpack.c.l.b16 %v229
      %v247 = vpack.c.b16 %v246, %v245
      %vm248 = vcmask 130048
      %v250 = vsel %vm248, %v247, 0
      %252 = vmatprep.subr.bf16.mxu0 0
      %253 = vmatpush1.bf16.msra.mxu0 %v230
      %254 = vmatprep.subr.bf16.mxu0 0
      %255 = vmatpush1.bf16.msra.mxu0 0
      %256 = vmatprep.subr.bf16.mxu0 0
      %257 = vmatpush1.bf16.msra.mxu0 0
      %258 = vmatprep.subr.bf16.mxu0 0
      %259 = vmatpush1.bf16.msra.mxu0 0
      %260 = vmatprep.subr.bf16.mxu0 0
      %261 = vmatpush1.bf16.msra.mxu0 0
      %262 = vmatprep.subr.bf16.mxu0 0
      %263 = vmatpush1.bf16.msra.mxu0 0
      %264 = vmatprep.subr.bf16.mxu0 0
      %265 = vmatpush1.bf16.msra.mxu0 0
      %266 = vmatprep.subr.bf16.mxu0 0
      %267 = vmatpush1.bf16.msra.mxu0 0
      %268 = vmatprep.subr.bf16.mxu0 0
      %269 = vmatpush1.bf16.msra.mxu0 0
      %270 = vmatprep.subr.bf16.mxu0 0
      %271 = vmatpush1.bf16.msra.mxu0 0
      %272 = vmatprep.subr.bf16.mxu0 0
      %273 = vmatpush1.bf16.msra.mxu0 0
      %274 = vmatprep.subr.bf16.mxu0 0
      %275 = vmatpush1.bf16.msra.mxu0 0
      %276 = vmatprep.subr.bf16.mxu0 0
      %277 = vmatpush1.bf16.msra.mxu0 0
      %278 = vmatprep.subr.bf16.mxu0 0
      %279 = vmatpush1.bf16.msra.mxu0 0
      %280 = vmatprep.subr.bf16.mxu0 0
      %281 = vmatpush1.bf16.msra.mxu0 0
      %282 = vmatprep.subr.bf16.mxu0 0
      %283 = vmatpush1.bf16.msra.mxu0 0
      %284 = vmatprep.mubr.bf16.mxu0 0
      %285 = vmatmul.mubr.bf16.gmra.mrb[0].mxu0 %v250
      %v286 = vpop.f32.mrb[0].mxu0
      %v287 = vadd.f32 %v236, %v286
      %v288 = vpop.f32.mrb[0].mxu0
      %v289 = vpop.f32.mrb[0].mxu0
      %v290 = vadd.f32 %v241, %v289
      %v291 = vpop.f32.mrb[0].mxu0
      %292 = vdwg.mxu0
      %v293 = vmax.f32 %v287, 0.0
      %v294 = vmax.f32 %v290, 0.0
      %v295 = vld [vmem:[%s3] sm:$0x7]
      %v296 = vpack.c.bf16 %v294, %v293
      %v297 = vld [vmem:[%s4] sm:$0x3f]
      %299 = vset.pattern.permute.xlu0 0
      %300 = vperm.xlu0 %299, %v297
      %v301 = vpop.permute.xlu0 %300
      %v304 = vsel %vm248, %v295, 0
      %306 = vmatprep.subr.bf16.mxu0 0
      %307 = vmatpush1.bf16.msra.mxu0 %v296
      %308 = vmatprep.subr.bf16.mxu0 0
      %309 = vmatpush1.bf16.msra.mxu0 0
      %310 = vmatprep.subr.bf16.mxu0 0
      %311 = vmatpush1.bf16.msra.mxu0 0
      %312 = vmatprep.subr.bf16.mxu0 0
      %313 = vmatpush1.bf16.msra.mxu0 0
      %314 = vmatprep.subr.bf16.mxu0 0
      %315 = vmatpush1.bf16.msra.mxu0 0
      %316 = vmatprep.subr.bf16.mxu0 0
      %317 = vmatpush1.bf16.msra.mxu0 0
      %318 = vmatprep.subr.bf16.mxu0 0
      %319 = vmatpush1.bf16.msra.mxu0 0
      %320 = vmatprep.subr.bf16.mxu0 0
      %321 = vmatpush1.bf16.msra.mxu0 0
      %322 = vmatprep.subr.bf16.mxu0 0
      %323 = vmatpush1.bf16.msra.mxu0 0
      %324 = vmatprep.subr.bf16.mxu0 0
      %325 = vmatpush1.bf16.msra.mxu0 0
      %326 = vmatprep.subr.bf16.mxu0 0
      %327 = vmatpush1.bf16.msra.mxu0 0
      %328 = vmatprep.subr.bf16.mxu0 0
      %329 = vmatpush1.bf16.msra.mxu0 0
      %330 = vmatprep.subr.bf16.mxu0 0
      %331 = vmatpush1.bf16.msra.mxu0 0
      %332 = vmatprep.subr.bf16.mxu0 0
      %333 = vmatpush1.bf16.msra.mxu0 0
      %334 = vmatprep.subr.bf16.mxu0 0
      %335 = vmatpush1.bf16.msra.mxu0 0
      %336 = vmatprep.subr.bf16.mxu0 0
      %337 = vmatpush1.bf16.msra.mxu0 0
      %338 = vmatprep.mubr.bf16.mxu0 0
      %339 = vmatmul.mubr.bf16.gmra.mrb[0].mxu0 %v304
      %v340 = vpop.f32.mrb[0].mxu0
      %v341 = vadd.f32 %v301, %v340
      %v342 = vpop.f32.mrb[0].mxu0
      %v343 = vpop.f32.mrb[0].mxu0
      %v344 = vpop.f32.mrb[0].mxu0
      %345 = vdwg.mxu0
      %vm346 = vcmask 62464
      %347 = vst.msk [vmem:[%s222] sm:$0x3f] %vm346, %v341
      %p348 = scmp.lt.s32.totalorder %s16, 1
      %s349 = scalar_select %p348, %s16, 1
      %s350 = smul.addr %s349, 8
      %s351 = scalar_lea.vmem %s5, %s350
      // Predicated region
      $region41: #{predictor_forward.11} parent=39 // pred_check
        %p352 = pneg %p144
      $region42: #{predictor_forward.11} parent=39 // pred_check_branch
        %354 = sbr.rel (%p352) target = $region44
      $region43: #{predictor_forward.11} parent=39 // pred_region
        _
      $region44: #{predictor_forward.11} parent=39 // pred_fallthru
        _
    $region40: #{predictor_forward.11} parent=5 // pred_fallthru
      _
    %p355 = scmp.le.s32.totalorder 2, %s11
    // Predicated region
    $region45: #{predictor_forward.11} parent=5 // pred_check
      %p356 = pneg %p355
    $region46: #{predictor_forward.11} parent=5 // pred_check_branch
      %358 = sbr.rel (%p356) target = $region48
    $region47: #{predictor_forward.11} parent=5 // pred_region
      %s359 = ssub.s32 %s11, 2
      // Predicated region
      $region49: #{predictor_forward.11} parent=47 // pred_check
        %p360 = pneg %p150
      $region50: #{predictor_forward.11} parent=47 // pred_check_branch
        %362 = sbr.rel (%p360) target = $region52
      $region51: #{predictor_forward.11} parent=47 // pred_region
        %p363 = scmp.lt.s32.totalorder %s17, 1
        %s364 = scalar_select %p363, %s17, 1
        %s365 = smul.addr %s364, 8
        %s366 = scalar_lea.vmem %s5, %s365
      $region52: #{predictor_forward.11} parent=47 // pred_fallthru
        _
    $region48: #{predictor_forward.11} parent=5 // pred_fallthru
      _
  $region6: #{predictor_forward.11} parent=0 // loop_footer
    %s15 = sadd.s32 1, %s11
  $region7: #{predictor_forward.11} parent=0 // loop_footer_branch
    %10 = sbr.rel target = $region3
  $region8: #{predictor_forward.11} parent=0 // loop_exit
    _

// kernel: predictor_forward.10
$region0: #{predictor_forward.10}
  #allocation0 [shape = 'u32[]', space=smem, size = 0x4, offset = 0x4, fixed_abs, tag = 'smem constant byte address 0x4 - core index']
  #allocation1 [shape = 'u32[144,128]{1,0:T(1,128)}', space=vmem, size = 0x12000, scoped, tag = 'internal scratch']
  %s0 = inlined_call_operand.vmem [shape: f32[2,8,24], index: 0, kind: input, shape index: {}]
  %s1 = inlined_call_operand.vmem [shape: f32[2,16,24], index: 1, kind: input, shape index: {}]
  %s2 = inlined_call_operand.vmem [shape: f32[24,56], index: 2, kind: input, shape index: {}]
  %s3 = inlined_call_operand.vmem [shape: f32[8,16], index: 3, kind: input, shape index: {}]
  %s4 = inlined_call_operand.vmem [shape: bf16[64,56], index: 4, kind: input, shape index: {}]
  %s5 = inlined_call_operand.vmem [shape: f32[64,1], index: 5, kind: input, shape index: {}]
  %s6 = inlined_call_operand.vmem [shape: bf16[16,8], index: 6, kind: input, shape index: {}]
  %s7 = inlined_call_operand.vmem [shape: f32[16,1], index: 7, kind: input, shape index: {}]
  %s8 = inlined_call_operand.vmem [shape: bf16[8,96], index: 8, kind: input, shape index: {}]
  %s9 = inlined_call_operand.vmem [shape: f32[8,1], index: 9, kind: input, shape index: {}]
  %s10 = inlined_call_operand.vmem [shape: f32[8,1], index: 10, kind: input, shape index: {}]
  %s11 = inlined_call_operand.hbm [shape: f32[2,8,8], index: 11, kind: output, shape index: {0}]
  %s12 = inlined_call_operand.vmem [shape: f32[2,16,8], index: 12, kind: output, shape index: {1}]
  %13 = xla_tuple %s11, %s12
  %s14 = sld [smem:[#allocation0]]
  $region85: #{predictor_forward.10} parent=0
    _
  %s16 = ssub.s32 1, %s14
  %s17 = scalar_select 0, %s16, %s14
  $region1: #{predictor_forward.10} parent=0
    #allocation2 [shape = 'u8[8192]{0}', space=vmem, size = 0x2000, scoped, tag = 'output window, operand 0']
    #allocation3 [shape = 's32[2]{0}', space=sflag, size = 0x8, scoped, tag = 'scoped memory for predictor_forward.10']
    %18 = vsyncpa [#allocation3], 0
    %s19 = scalar_lea.sflag [#allocation3], 1
    %20 = vsyncpa %s19, 0
    loop: start=0, step=1, limit=4
    $region2: #{predictor_forward.10} parent=1 // loop_pre_header
      _
    $region3: #{predictor_forward.10} parent=1 // loop_header
      %s22 = sphi 0, %s26
      %p23 = scmp.ge.s32.totalorder %s22, 4
      %s32 = sphi 0, %s34
      %s35 = sphi 0, %s32
      %s36 = sphi 0, %s35
      %s52 = sphi 0, %s36
      %s58 = sphi 0, %s60
      %s61 = sphi 0, %s58
      %s62 = sphi 0, %s61
      %s78 = sphi 0, %s62
      %s82 = sphi 0, %s82
      %s84 = sphi 0, %s82
      %s85 = sphi 0, %s84
      %s99 = sphi 0, %s85
      %s103 = sphi 0, %s103
      %s105 = sphi 0, %s103
      %s106 = sphi 0, %s105
      %s120 = sphi 0, %s106
      %s124 = sphi 0, %s124
      %s126 = sphi 0, %s124
      %s127 = sphi 0, %s126
      %s141 = sphi 0, %s127
      %s145 = sphi 0, %s145
      %s147 = sphi 0, %s145
      %s148 = sphi 0, %s147
      %s162 = sphi 0, %s148
      %s166 = sphi 0, %s166
      %s168 = sphi 0, %s166
      %s169 = sphi 0, %s168
      %s183 = sphi 0, %s169
      %s187 = sphi 0, %s187
      %s189 = sphi 0, %s187
      %s190 = sphi 0, %s189
      %s204 = sphi 0, %s190
      %s208 = sphi 0, %s208
      %s210 = sphi 0, %s208
      %s211 = sphi 0, %s210
      %s225 = sphi 0, %s211
      %s229 = sphi 0, %s229
      %s231 = sphi 0, %s229
      %s232 = sphi 0, %s231
      %s246 = sphi 0, %s232
      %s250 = sphi 0, %s250
      %s252 = sphi 0, %s250
      %s253 = sphi 0, %s252
      %s267 = sphi 0, %s253
      %s273 = sphi 0, %s275
      %s276 = sphi 0, %s273
      %s277 = sphi 0, %s276
      %s293 = sphi 0, %s277
      %s299 = sphi 0, %s301
      %s302 = sphi 0, %s299
      %s303 = sphi 0, %s302
      %s319 = sphi 0, %s303
    $region4: #{predictor_forward.10} parent=1 // loop_header_branch
      %25 = sbr.rel (%p23) target = $region8
    $region5: #{predictor_forward.10} parent=1 // loop_body
      %s27 = ssub.s32 %s22, 1
      %s28 = ssub.s32 %s22, 2
      %s29 = sadd.s32 %s22, 1
      %s30 = ssub.s32 %s22, %s29
      %p31 = scmp.eq.s32.totalorder %s30, 0
      %s33 = sadd.s32 %s32, 1
      %s34 = scalar_select %p31, %s32, %s33
      %p37 = pneg %p31
      %p38 = scmp.eq.s32.totalorder %s22, 1
      %p39 = por %p37, %p38
      %p40 = scmp.ne.s32.totalorder %s32, %s35
      %p41 = scmp.eq.s32.totalorder %s22, 0
      %p42 = por %p40, %p41
      %p43 = scmp.ne.s32.totalorder %s32, %s35
      %p44 = scmp.eq.s32.totalorder %s27, 1
      %p45 = por %p43, %p44
      %p46 = scmp.ne.s32.totalorder %s35, %s36
      %p47 = scmp.eq.s32.totalorder %s27, 0
      %p48 = por %p46, %p47
      %p49 = scmp.ne.s32.totalorder %s35, %s36
      %p50 = scmp.eq.s32.totalorder %s28, 1
      %p51 = por %p49, %p50
      %p53 = scmp.ne.s32.totalorder %s36, %s52
      %p54 = scmp.eq.s32.totalorder %s28, 0
      %p55 = por %p53, %p54
      %s56 = ssub.s32 %s22, %s29
      %p57 = scmp.eq.s32.totalorder %s56, 0
      %s59 = sadd.s32 %s58, 1
      %s60 = scalar_select %p57, %s58, %s59
      %p63 = pneg %p57
      %p64 = scmp.eq.s32.totalorder %s22, 1
      %p65 = por %p63, %p64
      %p66 = scmp.ne.s32.totalorder %s58, %s61
      %p67 = scmp.eq.s32.totalorder %s22, 0
      %p68 = por %p66, %p67
      %p69 = scmp.ne.s32.totalorder %s58, %s61
      %p70 = scmp.eq.s32.totalorder %s27, 1
      %p71 = por %p69, %p70
      %p72 = scmp.ne.s32.totalorder %s61, %s62
      %p73 = scmp.eq.s32.totalorder %s27, 0
      %p74 = por %p72, %p73
      %p75 = scmp.ne.s32.totalorder %s61, %s62
      %p76 = scmp.eq.s32.totalorder %s28, 1
      %p77 = por %p75, %p76
      %p79 = scmp.ne.s32.totalorder %s62, %s78
      %p80 = scmp.eq.s32.totalorder %s28, 0
      %p81 = por %p79, %p80
      %s83 = sadd.s32 %s82, 1
      %p86 = scmp.eq.s32.totalorder %s22, 1
      %p87 = scmp.ne.s32.totalorder %s82, %s84
      %p88 = scmp.eq.s32.totalorder %s22, 0
      %p89 = por %p87, %p88
      %p90 = scmp.ne.s32.totalorder %s82, %s84
      %p91 = scmp.eq.s32.totalorder %s27, 1
      %p92 = por %p90, %p91
      %p93 = scmp.ne.s32.totalorder %s84, %s85
      %p94 = scmp.eq.s32.totalorder %s27, 0
      %p95 = por %p93, %p94
      %p96 = scmp.ne.s32.totalorder %s84, %s85
      %p97 = scmp.eq.s32.totalorder %s28, 1
      %p98 = por %p96, %p97
      %p100 = scmp.ne.s32.totalorder %s85, %s99
      %p101 = scmp.eq.s32.totalorder %s28, 0
      %p102 = por %p100, %p101
      %s104 = sadd.s32 %s103, 1
      %p107 = scmp.eq.s32.totalorder %s22, 1
      %p108 = scmp.ne.s32.totalorder %s103, %s105
      %p109 = scmp.eq.s32.totalorder %s22, 0
      %p110 = por %p108, %p109
      %p111 = scmp.ne.s32.totalorder %s103, %s105
      %p112 = scmp.eq.s32.totalorder %s27, 1
      %p113 = por %p111, %p112
      %p114 = scmp.ne.s32.totalorder %s105, %s106
      %p115 = scmp.eq.s32.totalorder %s27, 0
      %p116 = por %p114, %p115
      %p117 = scmp.ne.s32.totalorder %s105, %s106
      %p118 = scmp.eq.s32.totalorder %s28, 1
      %p119 = por %p117, %p118
      %p121 = scmp.ne.s32.totalorder %s106, %s120
      %p122 = scmp.eq.s32.totalorder %s28, 0
      %p123 = por %p121, %p122
      %s125 = sadd.s32 %s124, 1
      %p128 = scmp.eq.s32.totalorder %s22, 1
      %p129 = scmp.ne.s32.totalorder %s124, %s126
      %p130 = scmp.eq.s32.totalorder %s22, 0
      %p131 = por %p129, %p130
      %p132 = scmp.ne.s32.totalorder %s124, %s126
      %p133 = scmp.eq.s32.totalorder %s27, 1
      %p134 = por %p132, %p133
      %p135 = scmp.ne.s32.totalorder %s126, %s127
      %p136 = scmp.eq.s32.totalorder %s27, 0
      %p137 = por %p135, %p136
      %p138 = scmp.ne.s32.totalorder %s126, %s127
      %p139 = scmp.eq.s32.totalorder %s28, 1
      %p140 = por %p138, %p139
      %p142 = scmp.ne.s32.totalorder %s127, %s141
      %p143 = scmp.eq.s32.totalorder %s28, 0
      %p144 = por %p142, %p143
      %s146 = sadd.s32 %s145, 1
      %p149 = scmp.eq.s32.totalorder %s22, 1
      %p150 = scmp.ne.s32.totalorder %s145, %s147
      %p151 = scmp.eq.s32.totalorder %s22, 0
      %p152 = por %p150, %p151
      %p153 = scmp.ne.s32.totalorder %s145, %s147
      %p154 = scmp.eq.s32.totalorder %s27, 1
      %p155 = por %p153, %p154
      %p156 = scmp.ne.s32.totalorder %s147, %s148
      %p157 = scmp.eq.s32.totalorder %s27, 0
      %p158 = por %p156, %p157
      %p159 = scmp.ne.s32.totalorder %s147, %s148
      %p160 = scmp.eq.s32.totalorder %s28, 1
      %p161 = por %p159, %p160
      %p163 = scmp.ne.s32.totalorder %s148, %s162
      %p164 = scmp.eq.s32.totalorder %s28, 0
      %p165 = por %p163, %p164
      %s167 = sadd.s32 %s166, 1
      %p170 = scmp.eq.s32.totalorder %s22, 1
      %p171 = scmp.ne.s32.totalorder %s166, %s168
      %p172 = scmp.eq.s32.totalorder %s22, 0
      %p173 = por %p171, %p172
      %p174 = scmp.ne.s32.totalorder %s166, %s168
      %p175 = scmp.eq.s32.totalorder %s27, 1
      %p176 = por %p174, %p175
      %p177 = scmp.ne.s32.totalorder %s168, %s169
      %p178 = scmp.eq.s32.totalorder %s27, 0
      %p179 = por %p177, %p178
      %p180 = scmp.ne.s32.totalorder %s168, %s169
      %p181 = scmp.eq.s32.totalorder %s28, 1
      %p182 = por %p180, %p181
      %p184 = scmp.ne.s32.totalorder %s169, %s183
      %p185 = scmp.eq.s32.totalorder %s28, 0
      %p186 = por %p184, %p185
      %s188 = sadd.s32 %s187, 1
      %p191 = scmp.eq.s32.totalorder %s22, 1
      %p192 = scmp.ne.s32.totalorder %s187, %s189
      %p193 = scmp.eq.s32.totalorder %s22, 0
      %p194 = por %p192, %p193
      %p195 = scmp.ne.s32.totalorder %s187, %s189
      %p196 = scmp.eq.s32.totalorder %s27, 1
      %p197 = por %p195, %p196
      %p198 = scmp.ne.s32.totalorder %s189, %s190
      %p199 = scmp.eq.s32.totalorder %s27, 0
      %p200 = por %p198, %p199
      %p201 = scmp.ne.s32.totalorder %s189, %s190
      %p202 = scmp.eq.s32.totalorder %s28, 1
      %p203 = por %p201, %p202
      %p205 = scmp.ne.s32.totalorder %s190, %s204
      %p206 = scmp.eq.s32.totalorder %s28, 0
      %p207 = por %p205, %p206
      %s209 = sadd.s32 %s208, 1
      %p212 = scmp.eq.s32.totalorder %s22, 1
      %p213 = scmp.ne.s32.totalorder %s208, %s210
      %p214 = scmp.eq.s32.totalorder %s22, 0
      %p215 = por %p213, %p214
      %p216 = scmp.ne.s32.totalorder %s208, %s210
      %p217 = scmp.eq.s32.totalorder %s27, 1
      %p218 = por %p216, %p217
      %p219 = scmp.ne.s32.totalorder %s210, %s211
      %p220 = scmp.eq.s32.totalorder %s27, 0
      %p221 = por %p219, %p220
      %p222 = scmp.ne.s32.totalorder %s210, %s211
      %p223 = scmp.eq.s32.totalorder %s28, 1
      %p224 = por %p222, %p223
      %p226 = scmp.ne.s32.totalorder %s211, %s225
      %p227 = scmp.eq.s32.totalorder %s28, 0
      %p228 = por %p226, %p227
      %s230 = sadd.s32 %s229, 1
      %p233 = scmp.eq.s32.totalorder %s22, 1
      %p234 = scmp.ne.s32.totalorder %s229, %s231
      %p235 = scmp.eq.s32.totalorder %s22, 0
      %p236 = por %p234, %p235
      %p237 = scmp.ne.s32.totalorder %s229, %s231
      %p238 = scmp.eq.s32.totalorder %s27, 1
      %p239 = por %p237, %p238
      %p240 = scmp.ne.s32.totalorder %s231, %s232
      %p241 = scmp.eq.s32.totalorder %s27, 0
      %p242 = por %p240, %p241
      %p243 = scmp.ne.s32.totalorder %s231, %s232
      %p244 = scmp.eq.s32.totalorder %s28, 1
      %p245 = por %p243, %p244
      %p247 = scmp.ne.s32.totalorder %s232, %s246
      %p248 = scmp.eq.s32.totalorder %s28, 0
      %p249 = por %p247, %p248
      %s251 = sadd.s32 %s250, 1
      %p254 = scmp.eq.s32.totalorder %s22, 1
      %p255 = scmp.ne.s32.totalorder %s250, %s252
      %p256 = scmp.eq.s32.totalorder %s22, 0
      %p257 = por %p255, %p256
      %p258 = scmp.ne.s32.totalorder %s250, %s252
      %p259 = scmp.eq.s32.totalorder %s27, 1
      %p260 = por %p258, %p259
      %p261 = scmp.ne.s32.totalorder %s252, %s253
      %p262 = scmp.eq.s32.totalorder %s27, 0
      %p263 = por %p261, %p262
      %p264 = scmp.ne.s32.totalorder %s252, %s253
      %p265 = scmp.eq.s32.totalorder %s28, 1
      %p266 = por %p264, %p265
      %p268 = scmp.ne.s32.totalorder %s253, %s267
      %p269 = scmp.eq.s32.totalorder %s28, 0
      %p270 = por %p268, %p269
      %s271 = ssub.s32 %s22, %s29
      %p272 = scmp.eq.s32.totalorder %s271, 0
      %s274 = sadd.s32 %s273, 1
      %s275 = scalar_select %p272, %s273, %s274
      %p278 = pneg %p272
      %p279 = scmp.eq.s32.totalorder %s22, 1
      %p280 = por %p278, %p279
      %p281 = scmp.ne.s32.totalorder %s273, %s276
      %p282 = scmp.eq.s32.totalorder %s22, 0
      %p283 = por %p281, %p282
      %p284 = scmp.ne.s32.totalorder %s273, %s276
      %p285 = scmp.eq.s32.totalorder %s27, 1
      %p286 = por %p284, %p285
      %p287 = scmp.ne.s32.totalorder %s276, %s277
      %p288 = scmp.eq.s32.totalorder %s27, 0
      %p289 = por %p287, %p288
      %p290 = scmp.ne.s32.totalorder %s276, %s277
      %p291 = scmp.eq.s32.totalorder %s28, 1
      %p292 = por %p290, %p291
      %p294 = scmp.ne.s32.totalorder %s277, %s293
      %p295 = scmp.eq.s32.totalorder %s28, 0
      %p296 = por %p294, %p295
      %s297 = ssub.s32 %s22, %s29
      %p298 = scmp.eq.s32.totalorder %s297, 0
      %s300 = sadd.s32 %s299, 1
      %s301 = scalar_select %p298, %s299, %s300
      %p304 = pneg %p298
      %p305 = scmp.eq.s32.totalorder %s22, 1
      %p306 = por %p304, %p305
      %p307 = scmp.ne.s32.totalorder %s299, %s302
      %p308 = scmp.eq.s32.totalorder %s22, 0
      %p309 = por %p307, %p308
      %p310 = scmp.ne.s32.totalorder %s299, %s302
      %p311 = scmp.eq.s32.totalorder %s27, 1
      %p312 = por %p310, %p311
      %p313 = scmp.ne.s32.totalorder %s302, %s303
      %p314 = scmp.eq.s32.totalorder %s27, 0
      %p315 = por %p313, %p314
      %p316 = scmp.ne.s32.totalorder %s302, %s303
      %p317 = scmp.eq.s32.totalorder %s28, 1
      %p318 = por %p316, %p317
      %p320 = scmp.ne.s32.totalorder %s303, %s319
      %p321 = scmp.eq.s32.totalorder %s28, 0
      %p322 = por %p320, %p321
      %p323 = scmp.le.s32.totalorder 1, %s22
      %p324 = scmp.lt.s32.totalorder %s22, 3
      %p325 = pnand %p323, %p324
      %p326 = pneg %p325
      // Predicated region
      $region9: #{predictor_forward.10} parent=5 // pred_check
        _
      $region10: #{predictor_forward.10} parent=5 // pred_check_branch
        %328 = sbr.rel (%p325) target = $region12
      $region11: #{predictor_forward.10} parent=5 // pred_region
        %s329 = ssub.s32 %s22, 1
        // Predicated region
        $region13: #{predictor_forward.10} parent=11 // pred_check
          %p330 = pneg %p95
        $region14: #{predictor_forward.10} parent=11 // pred_check_branch
          %332 = sbr.rel (%p330) target = $region16
        $region15: #{predictor_forward.10} parent=11 // pred_region
          _
        $region16: #{predictor_forward.10} parent=11 // pred_fallthru
          _
        // Predicated region
        $region17: #{predictor_forward.10} parent=11 // pred_check
          %p333 = pneg %p116
        $region18: #{predictor_forward.10} parent=11 // pred_check_branch
          %335 = sbr.rel (%p333) target = $region20
        $region19: #{predictor_forward.10} parent=11 // pred_region
          _
        $region20: #{predictor_forward.10} parent=11 // pred_fallthru
          _
        // Predicated region
        $region21: #{predictor_forward.10} parent=11 // pred_check
          %p336 = pneg %p137
        $region22: #{predictor_forward.10} parent=11 // pred_check_branch
          %338 = sbr.rel (%p336) target = $region24
        $region23: #{predictor_forward.10} parent=11 // pred_region
          _
        $region24: #{predictor_forward.10} parent=11 // pred_fallthru
          _
        // Predicated region
        $region25: #{predictor_forward.10} parent=11 // pred_check
          %p339 = pneg %p158
        $region26: #{predictor_forward.10} parent=11 // pred_check_branch
          %341 = sbr.rel (%p339) target = $region28
        $region27: #{predictor_forward.10} parent=11 // pred_region
          _
        $region28: #{predictor_forward.10} parent=11 // pred_fallthru
          _
        // Predicated region
        $region29: #{predictor_forward.10} parent=11 // pred_check
          %p342 = pneg %p179
        $region30: #{predictor_forward.10} parent=11 // pred_check_branch
          %344 = sbr.rel (%p342) target = $region32
        $region31: #{predictor_forward.10} parent=11 // pred_region
          _
        $region32: #{predictor_forward.10} parent=11 // pred_fallthru
          _
        // Predicated region
        $region33: #{predictor_forward.10} parent=11 // pred_check
          %p345 = pneg %p200
        $region34: #{predictor_forward.10} parent=11 // pred_check_branch
          %347 = sbr.rel (%p345) target = $region36
        $region35: #{predictor_forward.10} parent=11 // pred_region
          _
        $region36: #{predictor_forward.10} parent=11 // pred_fallthru
          _
        // Predicated region
        $region37: #{predictor_forward.10} parent=11 // pred_check
          %p348 = pneg %p221
        $region38: #{predictor_forward.10} parent=11 // pred_check_branch
          %350 = sbr.rel (%p348) target = $region40
        $region39: #{predictor_forward.10} parent=11 // pred_region
          _
        $region40: #{predictor_forward.10} parent=11 // pred_fallthru
          _
        // Predicated region
        $region41: #{predictor_forward.10} parent=11 // pred_check
          %p351 = pneg %p242
        $region42: #{predictor_forward.10} parent=11 // pred_check_branch
          %353 = sbr.rel (%p351) target = $region44
        $region43: #{predictor_forward.10} parent=11 // pred_region
          _
        $region44: #{predictor_forward.10} parent=11 // pred_fallthru
          _
        // Predicated region
        $region45: #{predictor_forward.10} parent=11 // pred_check
          %p354 = pneg %p263
        $region46: #{predictor_forward.10} parent=11 // pred_check_branch
          %356 = sbr.rel (%p354) target = $region48
        $region47: #{predictor_forward.10} parent=11 // pred_region
          _
        $region48: #{predictor_forward.10} parent=11 // pred_fallthru
          _
      $region12: #{predictor_forward.10} parent=5 // pred_fallthru
        _
      %p357 = scmp.lt.s32.totalorder %s22, 2
      // Predicated region
      $region49: #{predictor_forward.10} parent=5 // pred_check
        %p358 = pneg %p357
      $region50: #{predictor_forward.10} parent=5 // pred_check_branch
        %360 = sbr.rel (%p358) target = $region52
      $region51: #{predictor_forward.10} parent=5 // pred_region
        // Predicated region
        $region53: #{predictor_forward.10} parent=51 // pred_check
          %p361 = pneg %p42
        $region54: #{predictor_forward.10} parent=51 // pred_check_branch
          %363 = sbr.rel (%p361) target = $region56
        $region55: #{predictor_forward.10} parent=51 // pred_region
          %p364 = scmp.lt.s32.totalorder %s22, 1
          %s365 = scalar_select %p364, %s22, 1
          %s366 = smul.addr %s365, 8
          %s367 = scalar_lea.vmem %s0, %s366
        $region56: #{predictor_forward.10} parent=51 // pred_fallthru
          _
        // Predicated region
        $region57: #{predictor_forward.10} parent=51 // pred_check
          %p368 = pneg %p68
        $region58: #{predictor_forward.10} parent=51 // pred_check_branch
          %370 = sbr.rel (%p368) target = $region60
        $region59: #{predictor_forward.10} parent=51 // pred_region
          %p371 = scmp.lt.s32.totalorder %s22, 1
          %s372 = scalar_select %p371, %s22, 1
          %s373 = smul.addr %s372, 2
          %s374 = smul.addr %s373, 8
          %s375 = scalar_lea.vmem %s1, %s374
        $region60: #{predictor_forward.10} parent=51 // pred_fallthru
          _
      $region52: #{predictor_forward.10} parent=5 // pred_fallthru
        _
      %p376 = scmp.le.s32.totalorder 1, %s22
      %p377 = scmp.lt.s32.totalorder %s22, 3
      %p378 = pnand %p376, %p377
      %p379 = pneg %p378
      // Predicated region
      $region61: #{predictor_forward.10} parent=5 // pred_check
        _
      $region62: #{predictor_forward.10} parent=5 // pred_check_branch
        %381 = sbr.rel (%p378) target = $region64
      $region63: #{predictor_forward.10} parent=5 // pred_region
        %s382 = ssub.s32 %s22, 1
        %p383 = scmp.lt.s32.totalorder %s27, 1
        %s384 = scalar_select %p383, %s27, 1
        %s385 = smul.addr %s384, 8
        %s386 = scalar_lea.vmem %s0, %s385
        %p387 = pneg %p48
        %p388 = pneg %p45
        %p389 = scmp.lt.s32.totalorder %s27, 1
        %s390 = scalar_select %p389, %s27, 1
        %s391 = smul.addr %s390, 2
        %s392 = smul.addr %s391, 8
        %s393 = scalar_lea.vmem %s1, %s392
        %p394 = pneg %p74
        %p395 = pneg %p71
        %p396 = pneg %p95
        %p397 = pneg %p92
        %p398 = pneg %p116
        %p399 = pneg %p113
        %p400 = pneg %p137
        %p401 = pneg %p134
        %p402 = pneg %p158
        %p403 = pneg %p155
        %p404 = pneg %p179
        %p405 = pneg %p176
        %p406 = pneg %p200
        %p407 = pneg %p197
        %p408 = pneg %p221
        %p409 = pneg %p218
        %p410 = pneg %p242
        %p411 = pneg %p239
        %p412 = pneg %p263
        %p413 = pneg %p260
        %p414 = pneg %p289
        %p415 = pneg %p286
        %s416 = sand.u32 %s276, 1
        %s417 = scalar_lea.sflag [#allocation3], %s416
        %s418 = sand.u32 %s276, 1
        %s419 = smul.addr %s418, 8
        %s420 = scalar_lea.vmem [#allocation2], %s419
        %p421 = pneg %p315
        %p422 = pneg %p312
        %p423 = scmp.lt.s32.totalorder %s27, 1
        %s424 = scalar_select %p423, %s27, 1
        %s425 = smul.addr %s424, 2
        %s426 = smul.addr %s425, 8
        %s427 = scalar_lea.vmem %s12, %s426
        %p428 = scmp.lt.s32.totalorder %s27, 1
        %s429 = scalar_select %p428, %s27, 1
        %s430 = smul.addr %s429, 8
        %s431 = scalar_lea.vmem %s0, %s430
        %p432 = scmp.lt.s32.totalorder %s27, 1
        %s433 = scalar_select %p432, %s27, 1
        %s434 = smul.addr %s433, 2
        %s435 = smul.addr %s434, 8
        %s436 = scalar_lea.vmem %s1, %s435
        %p437 = scmp.lt.s32.totalorder %s27, 1
        %s438 = scalar_select %p437, %s27, 1
        %s439 = smul.addr %s438, 2
        %s440 = smul.addr %s439, 8
        %s441 = scalar_lea.vmem %s12, %s440
        %v443 = vld [vmem:[%s431] sm:$0xff]
        %v444 = vld [vmem:[%s436] sm:$0xff]
        %v445 = vld [vmem:[%s436 + $0x8] sm:$0xff]
        %v446 = vld [vmem:[%s2] sm:$0xff]
        %v447 = vld [vmem:[%s2 + $0x8] sm:$0xff]
        %v448 = vld [vmem:[%s2 + $0x10] sm:$0xff]
        %vm449 = vcmask 195584
        %v451 = vsel %vm449, %v443, 0
        %v454 = vsel %vm449, %v444, 0
        %v457 = vsel %vm449, %v445, 0
        %459 = vmatprep.subr.mxu0 0.0
        %460 = vmatpush1.msra.mxu0 %v446
        %461 = vmatprep.subr.mxu0 0.0
        %462 = vmatpush1.msra.mxu0 %v447
        %463 = vmatprep.subr.mxu0 0.0
        %464 = vmatpush1.msra.mxu0 %v448
        %465 = vmatprep.subr.mxu0 0.0
        %466 = vmatpush1.msra.mxu0 0.0
        %467 = vmatprep.subr.mxu0 0.0
        %468 = vmatpush1.msra.mxu0 0.0
        %469 = vmatprep.subr.mxu0 0.0
        %470 = vmatpush1.msra.mxu0 0.0
        %471 = vmatprep.subr.mxu0 0.0
        %472 = vmatpush1.msra.mxu0 0.0
        %473 = vmatprep.subr.mxu0 0.0
        %474 = vmatpush1.msra.mxu0 0.0
        %475 = vmatprep.subr.mxu0 0.0
        %476 = vmatpush1.msra.mxu0 0.0
        %477 = vmatprep.subr.mxu0 0.0
        %478 = vmatpush1.msra.mxu0 0.0
        %479 = vmatprep.subr.mxu0 0.0
        %480 = vmatpush1.msra.mxu0 0.0
        %481 = vmatprep.subr.mxu0 0.0
        %482 = vmatpush1.msra.mxu0 0.0
        %483 = vmatprep.subr.mxu0 0.0
        %484 = vmatpush1.msra.mxu0 0.0
        %485 = vmatprep.subr.mxu0 0.0
        %486 = vmatpush1.msra.mxu0 0.0
        %487 = vmatprep.subr.mxu0 0.0
        %488 = vmatpush1.msra.mxu0 0.0
        %489 = vmatprep.subr.mxu0 0.0
        %490 = vmatpush1.msra.mxu0 0.0
        %491 = vmatprep.subr.mxu0 0.0
        %492 = vmatpush1.msra.mxu0 0.0
        %493 = vmatprep.subr.mxu0 0.0
        %494 = vmatpush1.msra.mxu0 0.0
        %495 = vmatprep.subr.mxu0 0.0
        %496 = vmatpush1.msra.mxu0 0.0
        %497 = vmatprep.subr.mxu0 0.0
        %498 = vmatpush1.msra.mxu0 0.0
        %499 = vmatprep.subr.mxu0 0.0
        %500 = vmatpush1.msra.mxu0 0.0
        %501 = vmatprep.subr.mxu0 0.0
        %502 = vmatpush1.msra.mxu0 0.0
        %503 = vmatprep.subr.mxu0 0.0
        %504 = vmatpush1.msra.mxu0 0.0
        %505 = vmatprep.subr.mxu0 0.0
        %506 = vmatpush1.msra.mxu0 0.0
        %507 = vmatprep.subr.mxu0 0.0
        %508 = vmatpush1.msra.mxu0 0.0
        %509 = vmatprep.subr.mxu0 0.0
        %510 = vmatpush1.msra.mxu0 0.0
        %511 = vmatprep.subr.mxu0 0.0
        %512 = vmatpush1.msra.mxu0 0.0
        %513 = vmatprep.subr.mxu0 0.0
        %514 = vmatpush1.msra.mxu0 0.0
        %515 = vmatprep.subr.mxu0 0.0
        %516 = vmatpush1.msra.mxu0 0.0
        %517 = vmatprep.subr.mxu0 0.0
        %518 = vmatpush1.msra.mxu0 0.0
        %519 = vmatprep.subr.mxu0 0.0
        %520 = vmatpush1.msra.mxu0 0.0
        %521 = vmatprep.subr.mxu0 0.0
        %522 = vmatpush1.msra.mxu0 0.0
        %523 = vmatprep.mubr.f32.mxu0 0.0
        %524 = vmatmul.mubr.f32.gmra.mrb[0].mxu0 %v451
        %v525 = vpop.f32.mrb[0].mxu0
        %v526 = vadd.f32 0.0, %v525
        %v527 = vpop.f32.mrb[0].mxu0
        %528 = vmatprep.mubr.f32.mxu0 0.0
        %529 = vmatmul.mubr.f32.gmra.mrb[0].mxu0 %v454
        %v530 = vpop.f32.mrb[0].mxu0
        %v531 = vadd.f32 0.0, %v530
        %v532 = vpop.f32.mrb[0].mxu0
        %533 = vmatprep.mubr.f32.mxu0 0.0
        %534 = vmatmul.mubr.f32.gmra.mrb[0].mxu0 %v457
        %v535 = vpop.f32.mrb[0].mxu0
        %v536 = vadd.f32 0.0, %v535
        %v537 = vpop.f32.mrb[0].mxu0
        %538 = vdwg.mxu0
        %540 = vrot.lane.b32.xlu0 %v526, 120
        %v541 = vpop.permute.xlu0 %540
        %543 = vrot.lane.b32.xlu0 %v526, 112
        %v544 = vpop.permute.xlu0 %543
        %546 = vrot.lane.b32.xlu0 %v526, 104
        %v547 = vpop.permute.xlu0 %546
        %549 = vrot.lane.b32.xlu0 %v526, 96
        %v550 = vpop.permute.xlu0 %549
        %552 = vrot.lane.b32.xlu0 %v526, 88
        %v553 = vpop.permute.xlu0 %552
        %555 = vrot.lane.b32.xlu0 %v526, 80
        %v556 = vpop.permute.xlu0 %555
        %v558 = vld [vmem:[%s4] sm:$0xf]
        %v559 = vld [vmem:[%s4 + $0x4] sm:$0xf]
        %v560 = vld [vmem:[%s4 + $0x8] sm:$0xf]
        %v561 = vld [vmem:[%s4 + $0xc] sm:$0xf]
        %v562 = vld [vmem:[%s4 + $0x10] sm:$0xf]
        %v563 = vld [vmem:[%s4 + $0x14] sm:$0xf]
        %v564 = vld [vmem:[%s4 + $0x18] sm:$0xf]
        %v565 = vld [vmem:[%s4 + $0x1c] sm:$0xf]
        %v566 = vpack.c.bf16 %v541, %v526
        %v567 = vpack.c.bf16 %v547, %v544
        %v568 = vpack.c.bf16 %v553, %v550
        %v569 = vpack.c.bf16 %v556, %v556
        %v570 = vld [vmem:[%s5] sm:$0xff]
        %v571 = vld [vmem:[%s5 + $0x8] sm:$0xff]
        %v572 = vld [vmem:[%s5 + $0x10] sm:$0xff]
        %v573 = vld [vmem:[%s5 + $0x18] sm:$0xff]
        %v574 = vld [vmem:[%s5 + $0x20] sm:$0xff]
        %v575 = vld [vmem:[%s5 + $0x28] sm:$0xff]
        %v576 = vld [vmem:[%s5 + $0x30] sm:$0xff]
        %v577 = vld [vmem:[%s5 + $0x38] sm:$0xff]
        %579 = vset.pattern.permute.xlu0 0
        %580 = vperm.xlu0 %579, %v570
        %v581 = vpop.permute.xlu0 %580
        %584 = vset.pattern.permute.xlu0 0
        %585 = vperm.xlu0 %584, %v571
        %v586 = vpop.permute.xlu0 %585
        %589 = vset.pattern.permute.xlu0 0
        %590 = vperm.xlu0 %589, %v572
        %v591 = vpop.permute.xlu0 %590
        %594 = vset.pattern.permute.xlu0 0
        %595 = vperm.xlu0 %594, %v573
        %v596 = vpop.permute.xlu0 %595
        %599 = vset.pattern.permute.xlu0 0
        %600 = vperm.xlu0 %599, %v574
        %v601 = vpop.permute.xlu0 %600
        %604 = vset.pattern.permute.xlu0 0
        %605 = vperm.xlu0 %604, %v575
        %v606 = vpop.permute.xlu0 %605
        %609 = vset.pattern.permute.xlu0 0
        %610 = vperm.xlu0 %609, %v576
        %v611 = vpop.permute.xlu0 %610
        %614 = vset.pattern.permute.xlu0 0
        %615 = vperm.xlu0 %614, %v577
        %v616 = vpop.permute.xlu0 %615
        %v626 = vunpack.c.l.b16 %v558
        %v627 = vunpack.c.l.b16 %v559
        %v628 = vunpack.c.l.b16 %v560
        %v629 = vunpack.c.l.b16 %v561
        %v630 = vunpack.c.l.b16 %v562
        %v631 = vunpack.c.l.b16 %v563
        %v632 = vunpack.c.l.b16 %v564
        %v633 = vunpack.c.l.b16 %v565
        %v634 = vpack.c.b16 %v627, %v626
        %v635 = vpack.c.b16 %v629, %v628
        %v636 = vpack.c.b16 %v631, %v630
        %v637 = vpack.c.b16 %v633, %v632
        %vm638 = vcmask 457728
        %v640 = vsel %vm638, %v634, 0
        %v643 = vsel %vm638, %v635, 0
        %v646 = vsel %vm638, %v636, 0
        %v649 = vsel %vm638, %v637, 0
        %vm651 = vcmask 1043456
        %v653 = vsel %vm651, %v569, 0
        %655 = vmatprep.subr.bf16.mxu0 0
        %656 = vmatpush1.bf16.msra.mxu0 %v566
        %657 = vmatprep.subr.bf16.mxu0 0
        %658 = vmatpush1.bf16.msra.mxu0 %v567
        %659 = vmatprep.subr.bf16.mxu0 0
        %660 = vmatpush1.bf16.msra.mxu0 %v568
        %661 = vmatprep.subr.bf16.mxu0 0
        %662 = vmatpush1.bf16.msra.mxu0 %v653
        %663 = vmatprep.subr.bf16.mxu0 0
        %664 = vmatpush1.bf16.msra.mxu0 0
        %665 = vmatprep.subr.bf16.mxu0 0
        %666 = vmatpush1.bf16.msra.mxu0 0
        %667 = vmatprep.subr.bf16.mxu0 0
        %668 = vmatpush1.bf16.msra.mxu0 0
        %669 = vmatprep.subr.bf16.mxu0 0
        %670 = vmatpush1.bf16.msra.mxu0 0
        %671 = vmatprep.subr.bf16.mxu0 0
        %672 = vmatpush1.bf16.msra.mxu0 0
        %673 = vmatprep.subr.bf16.mxu0 0
        %674 = vmatpush1.bf16.msra.mxu0 0
        %675 = vmatprep.subr.bf16.mxu0 0
        %676 = vmatpush1.bf16.msra.mxu0 0
        %677 = vmatprep.subr.bf16.mxu0 0
        %678 = vmatpush1.bf16.msra.mxu0 0
        %679 = vmatprep.subr.bf16.mxu0 0
        %680 = vmatpush1.bf16.msra.mxu0 0
        %681 = vmatprep.subr.bf16.mxu0 0
        %682 = vmatpush1.bf16.msra.mxu0 0
        %683 = vmatprep.subr.bf16.mxu0 0
        %684 = vmatpush1.bf16.msra.mxu0 0
        %685 = vmatprep.subr.bf16.mxu0 0
        %686 = vmatpush1.bf16.msra.mxu0 0
        %687 = vmatprep.mubr.bf16.mxu0 0
        %688 = vmatmul.mubr.bf16.gmra.mrb[0].mxu0 %v640
        %v689 = vpop.f32.mrb[0].mxu0
        %v690 = vadd.f32 %v581, %v689
        %v691 = vpop.f32.mrb[0].mxu0
        %v692 = vpop.f32.mrb[0].mxu0
        %v693 = vadd.f32 %v586, %v692
        %v694 = vpop.f32.mrb[0].mxu0
        %695 = vmatprep.mubr.bf16.mxu0 0
        %696 = vmatmul.mubr.bf16.gmra.mrb[0].mxu0 %v643
        %v697 = vpop.f32.mrb[0].mxu0
        %v698 = vadd.f32 %v591, %v697
        %v699 = vpop.f32.mrb[0].mxu0
        %v700 = vpop.f32.mrb[0].mxu0
        %v701 = vadd.f32 %v596, %v700
        %v702 = vpop.f32.mrb[0].mxu0
        %703 = vmatprep.mubr.bf16.mxu0 0
        %704 = vmatmul.mubr.bf16.gmra.mrb[0].mxu0 %v646
        %v705 = vpop.f32.mrb[0].mxu0
        %v706 = vadd.f32 %v601, %v705
        %v707 = vpop.f32.mrb[0].mxu0
        %v708 = vpop.f32.mrb[0].mxu0
        %v709 = vadd.f32 %v606, %v708
        %v710 = vpop.f32.mrb[0].mxu0
        %711 = vmatprep.mubr.bf16.mxu0 0
        %712 = vmatmul.mubr.bf16.gmra.mrb[0].mxu0 %v649
        %v713 = vpop.f32.mrb[0].mxu0
        %v714 = vadd.f32 %v611, %v713
        %v715 = vpop.f32.mrb[0].mxu0
        %v716 = vpop.f32.mrb[0].mxu0
        %v717 = vadd.f32 %v616, %v716
        %v718 = vpop.f32.mrb[0].mxu0
        %719 = vdwg.mxu0
        %v720 = vtanh.pop %v690
        %v721 = vtanh.pop %v693
        %v722 = vtanh.pop %v698
        %v723 = vtanh.pop %v701
        %v724 = vxor.u32 %v706, 2147483648
        %v725 = vxor.u32 %v709, 2147483648
        %v726 = vxor.u32 %v714, 2147483648
        %v727 = vxor.u32 %v717, 2147483648
        %v728 = vmul.f32 %v724, 1.442695
        %v729 = vpow.pop %v728
        %v730 = vmul.f32 %v725, 1.442695
        %v731 = vpow.pop %v730
        %v732 = vmul.f32 %v726, 1.442695
        %v733 = vpow.pop %v732
        %v734 = vmul.f32 %v727, 1.442695
        %v735 = vpow.pop %v734
        %v736 = vadd.f32 %v729, 1.0
        %v737 = vadd.f32 %v731, 1.0
        %v738 = vadd.f32 %v733, 1.0
        %v739 = vadd.f32 %v735, 1.0
        %v740 = vrcp.pop %v736
        %v741 = vmul.f32 1.0, %v740
        %v742 = vrcp.pop %v737
        %v743 = vmul.f32 1.0, %v742
        %v744 = vrcp.pop %v738
        %v745 = vmul.f32 1.0, %v744
        %v746 = vrcp.pop %v739
        %v747 = vmul.f32 1.0, %v746
        %v748 = vmul.f32 %v720, %v741
        %v749 = vmul.f32 %v721, %v743
        %v750 = vmul.f32 %v722, %v745
        %v751 = vmul.f32 %v723, %v747
        %v752 = vld [vmem:[%s6] sm:$0xf]
        %v753 = vld [vmem:[%s6 + $0x4] sm:$0xf]
        %v754 = vpack.c.bf16 %v748, %v748
        %v755 = vld [vmem:[%s7] sm:$0xff]
        %v756 = vld [vmem:[%s7 + $0x8] sm:$0xff]
        %758 = vset.pattern.permute.xlu0 0
        %759 = vperm.xlu0 %758, %v755
        %v760 = vpop.permute.xlu0 %759
        %763 = vset.pattern.permute.xlu0 0
        %764 = vperm.xlu0 %763, %v756
        %v765 = vpop.permute.xlu0 %764
        %v769 = vunpack.c.l.b16 %v752
        %v770 = vunpack.c.l.b16 %v753
        %v771 = vpack.c.b16 %v770, %v769
        %vm772 = vcmask 64512
        %v774 = vsel %vm772, %v771, 0
        %v777 = vsel %vm651, %v754, 0
        %779 = vmatprep.subr.bf16.mxu0 0
        %780 = vmatpush1.bf16.msra.mxu0 %v777
        %781 = vmatprep.subr.bf16.mxu0 0
        %782 = vmatpush1.bf16.msra.mxu0 0
        %783 = vmatprep.subr.bf16.mxu0 0
        %784 = vmatpush1.bf16.msra.mxu0 0
        %785 = vmatprep.subr.bf16.mxu0 0
        %786 = vmatpush1.bf16.msra.mxu0 0
        %787 = vmatprep.subr.bf16.mxu0 0
        %788 = vmatpush1.bf16.msra.mxu0 0
        %789 = vmatprep.subr.bf16.mxu0 0
        %790 = vmatpush1.bf16.msra.mxu0 0
        %791 = vmatprep.subr.bf16.mxu0 0
        %792 = vmatpush1.bf16.msra.mxu0 0
        %793 = vmatprep.subr.bf16.mxu0 0
        %794 = vmatpush1.bf16.msra.mxu0 0
        %795 = vmatprep.subr.bf16.mxu0 0
        %796 = vmatpush1.bf16.msra.mxu0 0
        %797 = vmatprep.subr.bf16.mxu0 0
        %798 = vmatpush1.bf16.msra.mxu0 0
        %799 = vmatprep.subr.bf16.mxu0 0
        %800 = vmatpush1.bf16.msra.mxu0 0
        %801 = vmatprep.subr.bf16.mxu0 0
        %802 = vmatpush1.bf16.msra.mxu0 0
        %803 = vmatprep.subr.bf16.mxu0 0
        %804 = vmatpush1.bf16.msra.mxu0 0
        %805 = vmatprep.subr.bf16.mxu0 0
        %806 = vmatpush1.bf16.msra.mxu0 0
        %807 = vmatprep.subr.bf16.mxu0 0
        %808 = vmatpush1.bf16.msra.mxu0 0
        %809 = vmatprep.subr.bf16.mxu0 0
        %810 = vmatpush1.bf16.msra.mxu0 0
        %811 = vmatprep.mubr.bf16.mxu0 0
        %812 = vmatmul.mubr.bf16.gmra.mrb[0].mxu0 %v774
        %v813 = vpop.f32.mrb[0].mxu0
        %v814 = vadd.f32 %v760, %v813
        %v815 = vpop.f32.mrb[0].mxu0
        %v816 = vpop.f32.mrb[0].mxu0
        %v817 = vadd.f32 %v765, %v816
        %v818 = vpop.f32.mrb[0].mxu0
        %819 = vdwg.mxu0
        %822 = vrot.lane.b32.xlu0 %v531, 96
        %v823 = vpop.permute.xlu0 %822
        %824 = vrot.lane.b32.xlu0 %v536, 96
        %v825 = vpop.permute.xlu0 %824
        %v828 = vadd.f32 %v814, %v823
        %v829 = vadd.f32 %v817, %v825
        %830 = vst.msk [vmem:[%s441] sm:$0xff] %vm772, %v828
        %831 = vst.msk [vmem:[%s441 + $0x8] sm:$0xff] %vm772, %v829
        %v832 = vld [vmem:[%s3] sm:$0xff]
        %v834 = vsel %vm772, %v748, 0
        %v837 = vsel %vm772, %v749, 0
        %v840 = vsel %vm772, %v750, 0
        %v843 = vsel %vm772, %v751, 0
        %845 = vmatprep.subr.mxu0 0.0
        %846 = vmatpush1.msra.mxu0 %v832
        %847 = vmatprep.subr.mxu0 0.0
        %848 = vmatpush1.msra.mxu0 0.0
        %849 = vmatprep.subr.mxu0 0.0
        %850 = vmatpush1.msra.mxu0 0.0
        %851 = vmatprep.subr.mxu0 0.0
        %852 = vmatpush1.msra.mxu0 0.0
        %853 = vmatprep.subr.mxu0 0.0
        %854 = vmatpush1.msra.mxu0 0.0
        %855 = vmatprep.subr.mxu0 0.0
        %856 = vmatpush1.msra.mxu0 0.0
        %857 = vmatprep.subr.mxu0 0.0
        %858 = vmatpush1.msra.mxu0 0.0
        %859 = vmatprep.subr.mxu0 0.0
        %860 = vmatpush1.msra.mxu0 0.0
        %861 = vmatprep.subr.mxu0 0.0
        %862 = vmatpush1.msra.mxu0 0.0
        %863 = vmatprep.subr.mxu0 0.0
        %864 = vmatpush1.msra.mxu0 0.0
        %865 = vmatprep.subr.mxu0 0.0
        %866 = vmatpush1.msra.mxu0 0.0
        %867 = vmatprep.subr.mxu0 0.0
        %868 = vmatpush1.msra.mxu0 0.0
        %869 = vmatprep.subr.mxu0 0.0
        %870 = vmatpush1.msra.mxu0 0.0
        %871 = vmatprep.subr.mxu0 0.0
        %872 = vmatpush1.msra.mxu0 0.0
        %873 = vmatprep.subr.mxu0 0.0
        %874 = vmatpush1.msra.mxu0 0.0
        %875 = vmatprep.subr.mxu0 0.0
        %876 = vmatpush1.msra.mxu0 0.0
        %877 = vmatprep.subr.mxu0 0.0
        %878 = vmatpush1.msra.mxu0 0.0
        %879 = vmatprep.subr.mxu0 0.0
        %880 = vmatpush1.msra.mxu0 0.0
        %881 = vmatprep.subr.mxu0 0.0
        %882 = vmatpush1.msra.mxu0 0.0
        %883 = vmatprep.subr.mxu0 0.0
        %884 = vmatpush1.msra.mxu0 0.0
        %885 = vmatprep.subr.mxu0 0.0
        %886 = vmatpush1.msra.mxu0 0.0
        %887 = vmatprep.subr.mxu0 0.0
        %888 = vmatpush1.msra.mxu0 0.0
        %889 = vmatprep.subr.mxu0 0.0
        %890 = vmatpush1.msra.mxu0 0.0
        %891 = vmatprep.subr.mxu0 0.0
        %892 = vmatpush1.msra.mxu0 0.0
        %893 = vmatprep.subr.mxu0 0.0
        %894 = vmatpush1.msra.mxu0 0.0
        %895 = vmatprep.subr.mxu0 0.0
        %896 = vmatpush1.msra.mxu0 0.0
        %897 = vmatprep.subr.mxu0 0.0
        %898 = vmatpush1.msra.mxu0 0.0
        %899 = vmatprep.subr.mxu0 0.0
        %900 = vmatpush1.msra.mxu0 0.0
        %901 = vmatprep.subr.mxu0 0.0
        %902 = vmatpush1.msra.mxu0 0.0
        %903 = vmatprep.subr.mxu0 0.0
        %904 = vmatpush1.msra.mxu0 0.0
        %905 = vmatprep.subr.mxu0 0.0
        %906 = vmatpush1.msra.mxu0 0.0
        %907 = vmatprep.subr.mxu0 0.0
        %908 = vmatpush1.msra.mxu0 0.0
        %909 = vmatprep.mubr.f32.mxu0 0.0
        %910 = vmatmul.mubr.f32.gmra.mrb[0].mxu0 %v834
        %v911 = vpop.f32.mrb[0].mxu0
        %v912 = vadd.f32 0.0, %v911
        %v913 = vpop.f32.mrb[0].mxu0
        %914 = vmatprep.mubr.f32.mxu0 0.0
        %915 = vmatmul.mubr.f32.gmra.mrb[0].mxu0 %v837
        %v916 = vpop.f32.mrb[0].mxu0
        %v917 = vadd.f32 0.0, %v916
        %v918 = vpop.f32.mrb[0].mxu0
        %919 = vmatprep.mubr.f32.mxu0 0.0
        %920 = vmatmul.mubr.f32.gmra.mrb[0].mxu0 %v840
        %v921 = vpop.f32.mrb[0].mxu0
        %v922 = vadd.f32 0.0, %v921
        %v923 = vpop.f32.mrb[0].mxu0
        %924 = vmatprep.mubr.f32.mxu0 0.0
        %925 = vmatmul.mubr.f32.gmra.mrb[0].mxu0 %v843
        %v926 = vpop.f32.mrb[0].mxu0
        %v927 = vadd.f32 0.0, %v926
        %v928 = vpop.f32.mrb[0].mxu0
        %929 = vdwg.mxu0
        %934 = vrot.lane.b32.xlu0 %v912, 120
        %v935 = vpop.permute.xlu0 %934
        %936 = vrot.lane.b32.xlu0 %v917, 120
        %v937 = vpop.permute.xlu0 %936
        %938 = vrot.lane.b32.xlu0 %v922, 120
        %v939 = vpop.permute.xlu0 %938
        %940 = vrot.lane.b32.xlu0 %v927, 120
        %v941 = vpop.permute.xlu0 %940
        %v946 = vld [vmem:[%s8] sm:$0xf]
        %v947 = vpack.c.bf16 %v749, %v748
        %v948 = vpack.c.bf16 %v751, %v750
        %v949 = vpack.c.bf16 %v917, %v912
        %v950 = vpack.c.bf16 %v927, %v922
        %v951 = vpack.c.bf16 %v937, %v935
        %v952 = vpack.c.bf16 %v941, %v939
        %vm953 = vcmask 785408
        %v955 = vsel %vm953, %v946, 0
        %957 = vmatprep.subr.bf16.mxu0 0
        %958 = vmatpush1.bf16.msra.mxu0 %v947
        %959 = vmatprep.subr.bf16.mxu0 0
        %960 = vmatpush1.bf16.msra.mxu0 %v948
        %961 = vmatprep.subr.bf16.mxu0 0
        %962 = vmatpush1.bf16.msra.mxu0 %v949
        %963 = vmatprep.subr.bf16.mxu0 0
        %964 = vmatpush1.bf16.msra.mxu0 %v950
        %965 = vmatprep.subr.bf16.mxu0 0
        %966 = vmatpush1.bf16.msra.mxu0 %v951
        %967 = vmatprep.subr.bf16.mxu0 0
        %968 = vmatpush1.bf16.msra.mxu0 %v952
        %969 = vmatprep.subr.bf16.mxu0 0
        %970 = vmatpush1.bf16.msra.mxu0 0
        %971 = vmatprep.subr.bf16.mxu0 0
        %972 = vmatpush1.bf16.msra.mxu0 0
        %973 = vmatprep.subr.bf16.mxu0 0
        %974 = vmatpush1.bf16.msra.mxu0 0
        %975 = vmatprep.subr.bf16.mxu0 0
        %976 = vmatpush1.bf16.msra.mxu0 0
        %977 = vmatprep.subr.bf16.mxu0 0
        %978 = vmatpush1.bf16.msra.mxu0 0
        %979 = vmatprep.subr.bf16.mxu0 0
        %980 = vmatpush1.bf16.msra.mxu0 0
        %981 = vmatprep.subr.bf16.mxu0 0
        %982 = vmatpush1.bf16.msra.mxu0 0
        %983 = vmatprep.subr.bf16.mxu0 0
        %984 = vmatpush1.bf16.msra.mxu0 0
        %985 = vmatprep.subr.bf16.mxu0 0
        %986 = vmatpush1.bf16.msra.mxu0 0
        %987 = vmatprep.subr.bf16.mxu0 0
        %988 = vmatpush1.bf16.msra.mxu0 0
        %989 = vmatprep.mubr.bf16.mxu0 0
        %990 = vmatmul.mubr.bf16.gmra.mrb[0].mxu0 %v955
        %v991 = vpop.f32.mrb[0].mxu0
        %v992 = vadd.f32 %v550, %v991
        %v993 = vpop.f32.mrb[0].mxu0
        %v994 = vpop.f32.mrb[0].mxu0
        %v995 = vpop.f32.mrb[0].mxu0
        %996 = vdwg.mxu0
        %v997 = vld [vmem:[%s9] sm:$0xff]
        %999 = vset.pattern.permute.xlu0 0
        %1000 = vperm.xlu0 %999, %v997
        %v1001 = vpop.permute.xlu0 %1000
        %v1003 = vmul.f32 %v992, %v1001
        %v1004 = vld [vmem:[%s10] sm:$0xff]
        %1006 = vset.pattern.permute.xlu0 0
        %1007 = vperm.xlu0 %1006, %v1004
        %v1008 = vpop.permute.xlu0 %1007
        %v1010 = vadd.f32 %v1003, %v1008
        %1011 = vst.msk [vmem:[%s420] sm:$0xff] %vm772, %v1010
        %s1012 = sand.u32 %s276, 1
        %s1013 = scalar_lea.sflag [#allocation3], %s1012
        %s1014 = sand.u32 %s276, 1
        %s1015 = smul.addr %s1014, 8
        %s1016 = scalar_lea.vmem [#allocation2], %s1015
        %p1017 = scmp.lt.s32.totalorder %s27, 1
        %s1018 = scalar_select %p1017, %s27, 1
        %s1019 = smul.addr %s1018, 2
        %s1020 = smul.addr %s1019, 8
        %s1021 = scalar_lea.vmem %s12, %s1020
        // Predicated region
        $region65: #{predictor_forward.10} parent=63 // pred_check
          %p1022 = pneg %p286
        $region66: #{predictor_forward.10} parent=63 // pred_check_branch
          %1024 = sbr.rel (%p1022) target = $region68
        $region67: #{predictor_forward.10} parent=63 // pred_region
          %s1026 = ssub.s32 128, 128
          %1027 = vsyncadd %s1013, %s1026
          %s1028 = smul.addr %s27, 128
          %s1029 = scalar_lea.hbm %s11, %s1028
          %s1031 = sshll.u32 %s1016, 4
          %s1032 = int_to_ptr.vmem [resolvable:$true] %s1031
          %1034 = dma.vmem_to_hbm [thread:$0]  %s1032, 128, %s1029, %s1013
        $region68: #{predictor_forward.10} parent=63 // pred_fallthru
          _
        // Predicated region
        $region69: #{predictor_forward.10} parent=63 // pred_check
          %p1035 = pneg %p312
        $region70: #{predictor_forward.10} parent=63 // pred_check_branch
          %1037 = sbr.rel (%p1035) target = $region72
        $region71: #{predictor_forward.10} parent=63 // pred_region
          _
        $region72: #{predictor_forward.10} parent=63 // pred_fallthru
          _
      $region64: #{predictor_forward.10} parent=5 // pred_fallthru
        _
      %p1038 = scmp.le.s32.totalorder 2, %s22
      // Predicated region
      $region73: #{predictor_forward.10} parent=5 // pred_check
        %p1039 = pneg %p1038
      $region74: #{predictor_forward.10} parent=5 // pred_check_branch
        %1041 = sbr.rel (%p1039) target = $region76
      $region75: #{predictor_forward.10} parent=5 // pred_region
        %s1042 = ssub.s32 %s22, 2
        // Predicated region
        $region77: #{predictor_forward.10} parent=75 // pred_check
          %p1043 = pneg %p292
        $region78: #{predictor_forward.10} parent=75 // pred_check_branch
          %1045 = sbr.rel (%p1043) target = $region80
        $region79: #{predictor_forward.10} parent=75 // pred_region
          %s1046 = sand.u32 %s277, 1
          %s1047 = scalar_lea.sflag [#allocation3], %s1046
          %s1048 = sand.u32 %s277, 1
          %s1049 = smul.addr %s1048, 8
          %s1050 = scalar_lea.vmem [#allocation2], %s1049
          %1051 = dma.done %s1047, 128
        $region80: #{predictor_forward.10} parent=75 // pred_fallthru
          _
        // Predicated region
        $region81: #{predictor_forward.10} parent=75 // pred_check
          %p1052 = pneg %p318
        $region82: #{predictor_forward.10} parent=75 // pred_check_branch
          %1054 = sbr.rel (%p1052) target = $region84
        $region83: #{predictor_forward.10} parent=75 // pred_region
          %p1055 = scmp.lt.s32.totalorder %s28, 1
          %s1056 = scalar_select %p1055, %s28, 1
          %s1057 = smul.addr %s1056, 2
          %s1058 = smul.addr %s1057, 8
          %s1059 = scalar_lea.vmem %s12, %s1058
        $region84: #{predictor_forward.10} parent=75 // pred_fallthru
          _
      $region76: #{predictor_forward.10} parent=5 // pred_fallthru
        _
    $region6: #{predictor_forward.10} parent=1 // loop_footer
      %s26 = sadd.s32 1, %s22
    $region7: #{predictor_forward.10} parent=1 // loop_footer_branch
      %21 = sbr.rel target = $region3
    $region8: #{predictor_forward.10} parent=1 // loop_exit
      _
    %1060 = vsyncpa [#allocation3], 1
    %s1061 = scalar_lea.sflag [#allocation3], 1
    %1062 = vsyncpa %s1061, 1

</llo_original>
